<compile_context>
chip_gen: v5e
topology: v5e:2x2
jax: 0.10.0
libtpu: 0.0.40
codegen_flags: <defaults>
</compile_context>

<pallas_src>
import jax
import jax.numpy as jnp
from jax.experimental import pallas as pl
from jax.experimental.pallas import tpu as pltpu

EPS = 1e-5
LANE = 128


def _round_up(x, m):
    return (x + m - 1) // m * m


def _pick_tile_rows(h, w, cp, budget_bytes=6 * 1024 * 1024):
    """Largest divisor of H whose per-grid-step live VMEM fits the budget."""
    best = 1
    for th in range(1, h + 1):
        if h % th:
            continue
        live = ((th + 2) * (w + 2) * cp * 2      # bf16 halo-padded scratch
                + th * w * 3 * cp * 2            # bf16 per-ky grouped patch
                + 2 * th * w * cp * 4            # f32 conv accumulator + z
                + 2 * 2 * th * w * cp * 2)       # double-buffered bf16 in/out tiles
        if live <= budget_bytes:
            best = th
    return best


# ----------------------------- in-kernel helpers ----------------------------
def _conv3x3_dy_grouped(pad_ref, w_ref, th, wimg, cp):
    """3x3 'SAME' conv of a halo-padded bf16 tile as 3 MXU matmuls
    (one per ky row, K = 3*Cin from the three kx taps), f32 accumulation."""
    cin = pad_ref.shape[-1]
    acc = jnp.zeros((th * wimg, cp), jnp.float32)
    for dy in range(3):                                    # static unroll
        band = pad_ref[dy:dy + th]                         # (th, wimg+2, cin)
        patch = jnp.concatenate(
            [band[:, dx:dx + wimg, :] for dx in range(3)],
            axis=-1).reshape(th * wimg, 3 * cin)
        acc = acc + jnp.dot(patch, w_ref[dy],
                            preferred_element_type=jnp.float32)
    return acc


def _store_partial_stats(st_ref, z, cp):
    """Per-tile BatchNorm partial sums: row0 = sum(z), row1 = sum(z*z)."""
    s1 = jnp.sum(z, axis=0, keepdims=True)
    s2 = jnp.sum(z * z, axis=0, keepdims=True)
    st_ref[0, 0] = jnp.concatenate(
        [s1, s2, jnp.zeros((6, cp), jnp.float32)], axis=0)


def _fill_padded_tile(pad_ref, body, top, bot, th, wimg):
    """Write a 'SAME'-padded tile into the VMEM scratch; zero only the 1-px
    left/right halo columns (interior and top/bottom rows are fully written)."""
    zcol = jnp.zeros((th + 2, 1, pad_ref.shape[-1]), pad_ref.dtype)
    pad_ref[:, 0:1, :] = zcol
    pad_ref[:, wimg + 1:wimg + 2, :] = zcol
    pad_ref[0, 1:wimg + 1, :] = top
    pad_ref[1:th + 1, 1:wimg + 1, :] = body
    pad_ref[th + 1, 1:wimg + 1, :] = bot


# --------------------------------- kernels ----------------------------------
def _conv1_kernel(body_ref, top_ref, bot_ref, w_ref, z_ref, st_ref, pad_ref):
    th, wimg = body_ref.shape[1], body_ref.shape[2]
    cp = z_ref.shape[-1]
    r, last = pl.program_id(1), pl.num_programs(1) - 1
    top = top_ref[0, 0]
    top = jnp.where(r == 0, jnp.zeros_like(top), top)        # image top edge
    bot = bot_ref[0, 0]
    bot = jnp.where(r == last, jnp.zeros_like(bot), bot)     # image bottom edge
    _fill_padded_tile(pad_ref, body_ref[0], top, bot, th, wimg)
    z = _conv3x3_dy_grouped(pad_ref, w_ref, th, wimg, cp)
    _store_partial_stats(st_ref, z, cp)
    z_ref[0] = z.reshape(th, wimg, cp).astype(z_ref.dtype)


def _bn_relu_conv2_kernel(body_ref, top_ref, bot_ref, sc_ref, sh_ref, w_ref,
                          z_ref, st_ref, pad_ref):
    th, wimg = body_ref.shape[1], body_ref.shape[2]
    cp = z_ref.shape[-1]
    r, last = pl.program_id(1), pl.num_programs(1) - 1
    sc, sh = sc_ref[...], sh_ref[...]                         # (1, Cp) f32

    def bn_relu(v):          # BN1 + ReLU applied on the fly to conv2's input
        return jnp.maximum(v.astype(jnp.float32) * sc + sh,
                           0.0).astype(pad_ref.dtype)

    top = bn_relu(top_ref[0, 0])
    top = jnp.where(r == 0, jnp.zeros_like(top), top)
    bot = bn_relu(bot_ref[0, 0])
    bot = jnp.where(r == last, jnp.zeros_like(bot), bot)
    _fill_padded_tile(pad_ref, bn_relu(body_ref[0]), top, bot, th, wimg)
    z = _conv3x3_dy_grouped(pad_ref, w_ref, th, wimg, cp)
    _store_partial_stats(st_ref, z, cp)
    z_ref[0] = z.reshape(th, wimg, cp).astype(z_ref.dtype)


def _bn_relu_kernel(z_ref, sc_ref, sh_ref, o_ref):
    o_ref[0] = jnp.maximum(
        z_ref[0].astype(jnp.float32) * sc_ref[...] + sh_ref[...], 0.0)


# --------------------------------- wrappers ----------------------------------
def _bn_affine(stats, g, be, m):
    """Fold per-tile partial sums into training-mode BN scale/shift."""
    s1 = jnp.sum(stats[:, :, 0, :], axis=(0, 1))
    s2 = jnp.sum(stats[:, :, 1, :], axis=(0, 1))
    mean = s1 / m
    # TODO(synk): single-pass E[z^2]-E[z]^2 can cancel for huge M; use a
    #             centered second pass for production feature-map sizes.
    var = jnp.maximum(s2 / m - mean * mean, 0.0)
    scale = g * jax.lax.rsqrt(var + EPS)
    shift = be - mean * scale
    return scale.reshape(1, -1), shift.reshape(1, -1)


def prepare_params(p):
    """One-time packing: per-ky-row flattened (3, 3*Cin, Cp) bf16 weights with
    Cout zero-padded to a lane multiple, and Cp-padded f32 gamma/beta.
    Conv biases are intentionally dropped (they cancel in training-mode BN)."""
    cin, cout = p["w1"].shape[2], p["w1"].shape[3]
    cp = _round_up(cout, LANE)

    def flat_w(w):                       # (3,3,ci,cout) -> (3, 3*ci, cp) bf16
        ci = w.shape[2]
        wp = jnp.zeros((3, 3, ci, cp), jnp.float32).at[..., :cout].set(w)
        return wp.reshape(3, 3 * ci, cp).astype(jnp.bfloat16)

    w2full = (jnp.zeros((3, 3, cp, cout), jnp.float32)
              .at[:, :, :cout, :].set(p["w2"]))

    def padvec(v):
        return jnp.zeros((cp,), jnp.float32).at[:cout].set(v)

    return {"w1": flat_w(p["w1"]), "w2": flat_w(w2full),
            "g1": padvec(p["g1"]), "be1": padvec(p["be1"]),
            "g2": padvec(p["g2"]), "be2": padvec(p["be2"])}


def inconv_forward(x_nchw, prep, *, out_ch, tile_rows=None):
    """Forward of InConv/DoubleConv; NCHW in / NCHW out (PyTorch convention)."""
    n, cin, h, w = x_nchw.shape
    cp = prep["w1"].shape[-1]
    assert prep["w1"].shape[1] == 3 * cin
    th = tile_rows if tile_rows is not None else _pick_tile_rows(h, w, cp)
    assert h % th == 0, (h, th)
    ht = h // th
    m = n * h * w
    grid = (n, ht)

    x = jnp.transpose(x_nchw, (0, 2, 3, 1)).astype(jnp.bfloat16)   # NHWC bf16

    body_map = lambda b, r: (b, r, 0, 0)
    top_map = lambda b, r: (b, jnp.maximum(r * th - 1, 0), 0, 0)    # 1-row halo
    bot_map = lambda b, r: (b, jnp.minimum(r * th + th, h - 1), 0, 0)
    vec_map = lambda b, r: (0, 0)
    w_map = lambda b, r: (0, 0, 0)

    feat_spec = lambda c: pl.BlockSpec((1, th, w, c), body_map)
    halo_spec = lambda c, im: pl.BlockSpec((1, 1, w, c), im)
    stats_spec = pl.BlockSpec((1, 1, 8, cp), body_map)
    stats_shape = jax.ShapeDtypeStruct((n, ht, 8, cp), jnp.float32)
    feat_bf16 = jax.ShapeDtypeStruct((n, h, w, cp), jnp.bfloat16)

    # Tile picker keeps per-step live data to a few MiB, so this limit is safe
    # even under v7x's 64 MiB physical VMEM.
    cparams = pltpu.CompilerParams(
        dimension_semantics=("parallel", "parallel"),
        vmem_limit_bytes=48 * 1024 * 1024)

    # ---- pass 1: conv1 (tap-grouped MXU matmuls) + partial BN1 stats -------
    z1, st1 = pl.pallas_call(
        _conv1_kernel,
        grid=grid,
        in_specs=(feat_spec(cin),
                  halo_spec(cin, top_map),
                  halo_spec(cin, bot_map),
                  pl.BlockSpec((3, 3 * cin, cp), w_map)),
        out_specs=(feat_spec(cp), stats_spec),
        out_shape=(feat_bf16, stats_shape),
        scratch_shapes=[pltpu.VMEM((th + 2, w + 2, cin), jnp.bfloat16)],
        compiler_params=cparams,
    )(x, x, x, prep["w1"])

    sc1, sh1 = _bn_affine(st1, prep["g1"], prep["be1"], m)

    # ---- pass 2: BN1+ReLU (fused on tile+halo) -> conv2 + partial BN2 stats -
    z2, st2 = pl.pallas_call(
        _bn_relu_conv2_kernel,
        grid=grid,
        in_specs=(feat_spec(cp),
                  halo_spec(cp, top_map),
                  halo_spec(cp, bot_map),
                  pl.BlockSpec((1, cp), vec_map),
                  pl.BlockSpec((1, cp), vec_map),
                  pl.BlockSpec((3, 3 * cp, cp), w_map)),
        out_specs=(feat_spec(cp), stats_spec),
        out_shape=(feat_bf16, stats_shape),
        scratch_shapes=[pltpu.VMEM((th + 2, w + 2, cp), jnp.bfloat16)],
        compiler_params=cparams,
    )(z1, z1, z1, sc1, sh1, prep["w2"])

    sc2, sh2 = _bn_affine(st2, prep["g2"], prep["be2"], m)

    # ---- pass 3: BN2 + ReLU, lane-dense f32 writeback -----------------------
    y = pl.pallas_call(
        _bn_relu_kernel,
        grid=grid,
        in_specs=(feat_spec(cp),
                  pl.BlockSpec((1, cp), vec_map),
                  pl.BlockSpec((1, cp), vec_map)),
        out_specs=feat_spec(cp),
        out_shape=jax.ShapeDtypeStruct((n, h, w, cp), jnp.float32),
        compiler_params=cparams,
    )(z2, sc2, sh2)

    # Slice real channels and go back to NCHW (fused by XLA into one pass).
    return jnp.transpose(y[..., :out_ch], (0, 3, 1, 2))


# ------------------------- pure-JAX reference (check) -----------------------
def _ref_conv_bn_relu(x, w, b, g, be):
    z = jax.lax.conv_general_dilated(
        x, w, (1, 1), "SAME",
        dimension_numbers=("NHWC", "HWIO", "NHWC"),
        precision=jax.lax.Precision.HIGHEST) + b
    mean = z.mean(axis=(0, 1, 2), keepdims=True)
    var = ((z - mean) ** 2).mean(axis=(0, 1, 2), keepdims=True)
    return jnp.maximum((z - mean) * jax.lax.rsqrt(var + EPS) * g + be, 0.0)


def _ref_inconv(x_nchw, p):
    x = jnp.transpose(x_nchw, (0, 2, 3, 1)).astype(jnp.float32)
    x = _ref_conv_bn_relu(x, p["w1"], p["b1"], p["g1"], p["be1"])
    x = _ref_conv_bn_relu(x, p["w2"], p["b2"], p["g2"], p["be2"])
    return jnp.transpose(x, (0, 3, 1, 2))


def init_params(key, in_ch, out_ch):
    ks = jax.random.split(key, 6)
    return {
        "w1": 0.1 * jax.random.normal(ks[0], (3, 3, in_ch, out_ch), jnp.float32),
        "b1": 0.1 * jax.random.normal(ks[1], (out_ch,), jnp.float32),
        "g1": 1.0 + 0.1 * jax.random.normal(ks[2], (out_ch,), jnp.float32),
        "be1": jnp.zeros((out_ch,), jnp.float32),
        "w2": 0.1 * jax.random.normal(ks[3], (3, 3, out_ch, out_ch), jnp.float32),
        "b2": 0.1 * jax.random.normal(ks[4], (out_ch,), jnp.float32),
        "g2": 1.0 + 0.1 * jax.random.normal(ks[5], (out_ch,), jnp.float32),
        "be2": jnp.zeros((out_ch,), jnp.float32),
    }


if __name__ == "__main__":
    key = jax.random.PRNGKey(0)
    kx, kp = jax.random.split(key)
    N, IN_CH, OUT_CH, H, W = 2, 4, 8, 16, 16

    x = jax.random.normal(kx, (N, IN_CH, H, W), jnp.float32)   # NCHW like PyTorch
    params = init_params(kp, IN_CH, OUT_CH)
    prep = prepare_params(params)                              # one-time weight packing

    fwd = jax.jit(inconv_forward, static_argnames=("out_ch", "tile_rows"))
    ref = jax.block_until_ready(_ref_inconv(x, params))

    # Exercise both the multi-row-tile halo path and the auto single-tile path.
    for tr in (8, None):
        out = jax.block_until_ready(fwd(x, prep, out_ch=OUT_CH, tile_rows=tr))
        assert out.shape == (N, OUT_CH, H, W), out.shape
        max_err = float(jnp.max(jnp.abs(out - ref)))
        # bf16 MXU operands + bf16 staged intermediates -> loose tolerance.
        assert jnp.allclose(out, ref, rtol=5e-2, atol=5e-2), (tr, max_err)

    print("KERNEL_OK")
</pallas_src>

<mosaic_0001>
module attributes {stable_mosaic.version = 11 : i64} {
  func.func @_conv1_kernel(%arg0: i32, %arg1: i32, %arg2: memref<1x8x16x4xbf16, #tpu.memory_space<vmem>>, %arg3: memref<1x1x16x4xbf16, #tpu.memory_space<vmem>>, %arg4: memref<1x1x16x4xbf16, #tpu.memory_space<vmem>>, %arg5: memref<3x12x128xbf16, #tpu.memory_space<vmem>>, %arg6: memref<1x8x16x128xbf16, #tpu.memory_space<vmem>>, %arg7: memref<1x1x8x128xf32, #tpu.memory_space<vmem>>, %arg8: memref<10x18x4xbf16, #tpu.memory_space<vmem>>) attributes {dimension_semantics = [#tpu.dimension_semantics<parallel>, #tpu.dimension_semantics<parallel>], iteration_bounds = array<i64: 2, 2>, scalar_prefetch = 0 : i64, scratch_operands = 1 : i64, tpu.core_type = #tpu.core_type<tc>, window_params = [{transform_indices = @transform_0, window_bounds = array<i64: 1, 8, 16, 4>}, {transform_indices = @transform_1, window_bounds = array<i64: 1, 1, 16, 4>}, {transform_indices = @transform_2, window_bounds = array<i64: 1, 1, 16, 4>}, {pipeline_mode = #tpu.pipeline_mode<synchronous>, transform_indices = @transform_3, window_bounds = array<i64: 3, 12, 128>}, {transform_indices = @transform_4, window_bounds = array<i64: 1, 8, 16, 128>}, {transform_indices = @transform_5, window_bounds = array<i64: 1, 1, 8, 128>}]} {
    %c0 = arith.constant 0 : index
    %c0_0 = arith.constant 0 : index
    %c0_1 = arith.constant 0 : index
    %c0_2 = arith.constant 0 : index
    %0 = vector.load %arg3[%c0, %c0_0, %c0_1, %c0_2] : memref<1x1x16x4xbf16, #tpu.memory_space<vmem>>, vector<1x1x16x4xbf16>
    %1 = vector.shape_cast %0 : vector<1x1x16x4xbf16> to vector<16x4xbf16>
    %c0_i32 = arith.constant 0 : i32
    %2 = arith.cmpi eq, %arg1, %c0_i32 : i32
    %cst = arith.constant 0.000000e+00 : bf16
    %3 = vector.broadcast %cst : bf16 to vector<16x4xbf16>
    %4 = arith.select %2, %3, %1 : vector<16x4xbf16>
    %c0_3 = arith.constant 0 : index
    %c0_4 = arith.constant 0 : index
    %c0_5 = arith.constant 0 : index
    %c0_6 = arith.constant 0 : index
    %5 = vector.load %arg4[%c0_3, %c0_4, %c0_5, %c0_6] : memref<1x1x16x4xbf16, #tpu.memory_space<vmem>>, vector<1x1x16x4xbf16>
    %6 = vector.shape_cast %5 : vector<1x1x16x4xbf16> to vector<16x4xbf16>
    %c1_i32 = arith.constant 1 : i32
    %7 = arith.cmpi eq, %arg1, %c1_i32 : i32
    %cst_7 = arith.constant 0.000000e+00 : bf16
    %8 = vector.broadcast %cst_7 : bf16 to vector<16x4xbf16>
    %9 = arith.select %7, %8, %6 : vector<16x4xbf16>
    %c0_8 = arith.constant 0 : index
    %c0_9 = arith.constant 0 : index
    %c0_10 = arith.constant 0 : index
    %c0_11 = arith.constant 0 : index
    %10 = vector.load %arg2[%c0_8, %c0_9, %c0_10, %c0_11] : memref<1x8x16x4xbf16, #tpu.memory_space<vmem>>, vector<1x8x16x4xbf16>
    %11 = vector.shape_cast %10 : vector<1x8x16x4xbf16> to vector<8x16x4xbf16>
    %cst_12 = arith.constant 0.000000e+00 : bf16
    %12 = vector.broadcast %cst_12 : bf16 to vector<10x1x4xbf16>
    %c0_13 = arith.constant 0 : index
    %c0_14 = arith.constant 0 : index
    %c0_15 = arith.constant 0 : index
    %13 = vector.load %arg8[%c0_13, %c0_14, %c0_15] : memref<10x18x4xbf16, #tpu.memory_space<vmem>>, vector<10x1x4xbf16>
    tpu.vector_store %arg8[%c0_13, %c0_14, %c0_15], %12 {strides = array<i32>} : memref<10x18x4xbf16, #tpu.memory_space<vmem>>, vector<10x1x4xbf16>,
    %c0_16 = arith.constant 0 : index
    %c17 = arith.constant 17 : index
    %c0_17 = arith.constant 0 : index
    %14 = vector.load %arg8[%c0_16, %c17, %c0_17] : memref<10x18x4xbf16, #tpu.memory_space<vmem>>, vector<10x1x4xbf16>
    tpu.vector_store %arg8[%c0_16, %c17, %c0_17], %12 {strides = array<i32>} : memref<10x18x4xbf16, #tpu.memory_space<vmem>>, vector<10x1x4xbf16>,
    %c0_18 = arith.constant 0 : index
    %c1 = arith.constant 1 : index
    %c0_19 = arith.constant 0 : index
    %15 = vector.load %arg8[%c0_18, %c1, %c0_19] : memref<10x18x4xbf16, #tpu.memory_space<vmem>>, vector<1x16x4xbf16>
    %16 = vector.shape_cast %15 : vector<1x16x4xbf16> to vector<16x4xbf16>
    %17 = vector.shape_cast %4 : vector<16x4xbf16> to vector<1x16x4xbf16>
    tpu.vector_store %arg8[%c0_18, %c1, %c0_19], %17 {strides = array<i32>} : memref<10x18x4xbf16, #tpu.memory_space<vmem>>, vector<1x16x4xbf16>,
    %c1_20 = arith.constant 1 : index
    %c1_21 = arith.constant 1 : index
    %c0_22 = arith.constant 0 : index
    %18 = vector.load %arg8[%c1_20, %c1_21, %c0_22] : memref<10x18x4xbf16, #tpu.memory_space<vmem>>, vector<8x16x4xbf16>
    tpu.vector_store %arg8[%c1_20, %c1_21, %c0_22], %11 {strides = array<i32>} : memref<10x18x4xbf16, #tpu.memory_space<vmem>>, vector<8x16x4xbf16>,
    %c9 = arith.constant 9 : index
    %c1_23 = arith.constant 1 : index
    %c0_24 = arith.constant 0 : index
    %19 = vector.load %arg8[%c9, %c1_23, %c0_24] : memref<10x18x4xbf16, #tpu.memory_space<vmem>>, vector<1x16x4xbf16>
    %20 = vector.shape_cast %19 : vector<1x16x4xbf16> to vector<16x4xbf16>
    %21 = vector.shape_cast %9 : vector<16x4xbf16> to vector<1x16x4xbf16>
    tpu.vector_store %arg8[%c9, %c1_23, %c0_24], %21 {strides = array<i32>} : memref<10x18x4xbf16, #tpu.memory_space<vmem>>, vector<1x16x4xbf16>,
    %cst_25 = arith.constant 0.000000e+00 : f32
    %22 = vector.broadcast %cst_25 : f32 to vector<128x128xf32>
    %c0_26 = arith.constant 0 : index
    %c0_27 = arith.constant 0 : index
    %c0_28 = arith.constant 0 : index
    %23 = vector.load %arg8[%c0_26, %c0_27, %c0_28] : memref<10x18x4xbf16, #tpu.memory_space<vmem>>, vector<8x18x4xbf16>
    %24 = vector.extract_strided_slice %23 {offsets = [0, 0, 0], sizes = [8, 16, 4], strides = [1, 1, 1]} : vector<8x18x4xbf16> to vector<8x16x4xbf16>
    %25 = vector.extract_strided_slice %23 {offsets = [0, 1, 0], sizes = [8, 16, 4], strides = [1, 1, 1]} : vector<8x18x4xbf16> to vector<8x16x4xbf16>
    %26 = vector.extract_strided_slice %23 {offsets = [0, 2, 0], sizes = [8, 16, 4], strides = [1, 1, 1]} : vector<8x18x4xbf16> to vector<8x16x4xbf16>
    %27 = tpu.concatenate %24, %25, %26 in 2 : vector<8x16x4xbf16>, vector<8x16x4xbf16>, vector<8x16x4xbf16> -> vector<8x16x12xbf16>
    %28 = vector.shape_cast %27 : vector<8x16x12xbf16> to vector<128x12xbf16>
    %c0_29 = arith.constant 0 : index
    %c0_30 = arith.constant 0 : index
    %c0_31 = arith.constant 0 : index
    %29 = vector.load %arg5[%c0_29, %c0_30, %c0_31] : memref<3x12x128xbf16, #tpu.memory_space<vmem>>, vector<1x12x128xbf16>
    %30 = vector.shape_cast %29 : vector<1x12x128xbf16> to vector<12x128xbf16>
    %cst_32 = arith.constant dense<0.000000e+00> : vector<128x128xf32>
    %31 = tpu.matmul %28, %30, %cst_32 {dimension_numbers = #tpu.dot_dimension_numbers<[1], [0], [0], [1], [0, 0, 1, 1], [], []>} : vector<128x12xbf16>, vector<12x128xbf16>, vector<128x128xf32> -> vector<128x128xf32>
    %32 = arith.addf %22, %31 : vector<128x128xf32>
    %c1_33 = arith.constant 1 : index
    %c0_34 = arith.constant 0 : index
    %c0_35 = arith.constant 0 : index
    %33 = vector.load %arg8[%c1_33, %c0_34, %c0_35] : memref<10x18x4xbf16, #tpu.memory_space<vmem>>, vector<8x18x4xbf16>
    %34 = vector.extract_strided_slice %33 {offsets = [0, 0, 0], sizes = [8, 16, 4], strides = [1, 1, 1]} : vector<8x18x4xbf16> to vector<8x16x4xbf16>
    %35 = vector.extract_strided_slice %33 {offsets = [0, 1, 0], sizes = [8, 16, 4], strides = [1, 1, 1]} : vector<8x18x4xbf16> to vector<8x16x4xbf16>
    %36 = vector.extract_strided_slice %33 {offsets = [0, 2, 0], sizes = [8, 16, 4], strides = [1, 1, 1]} : vector<8x18x4xbf16> to vector<8x16x4xbf16>
    %37 = tpu.concatenate %34, %35, %36 in 2 : vector<8x16x4xbf16>, vector<8x16x4xbf16>, vector<8x16x4xbf16> -> vector<8x16x12xbf16>
    %38 = vector.shape_cast %37 : vector<8x16x12xbf16> to vector<128x12xbf16>
    %c1_36 = arith.constant 1 : index
    %c0_37 = arith.constant 0 : index
    %c0_38 = arith.constant 0 : index
    %39 = vector.load %arg5[%c1_36, %c0_37, %c0_38] : memref<3x12x128xbf16, #tpu.memory_space<vmem>>, vector<1x12x128xbf16>
    %40 = vector.shape_cast %39 : vector<1x12x128xbf16> to vector<12x128xbf16>
    %cst_39 = arith.constant dense<0.000000e+00> : vector<128x128xf32>
    %41 = tpu.matmul %38, %40, %cst_39 {dimension_numbers = #tpu.dot_dimension_numbers<[1], [0], [0], [1], [0, 0, 1, 1], [], []>} : vector<128x12xbf16>, vector<12x128xbf16>, vector<128x128xf32> -> vector<128x128xf32>
    %42 = arith.addf %32, %41 : vector<128x128xf32>
    %c2 = arith.constant 2 : index
    %c0_40 = arith.constant 0 : index
    %c0_41 = arith.constant 0 : index
    %43 = vector.load %arg8[%c2, %c0_40, %c0_41] : memref<10x18x4xbf16, #tpu.memory_space<vmem>>, vector<8x18x4xbf16>
    %44 = vector.extract_strided_slice %43 {offsets = [0, 0, 0], sizes = [8, 16, 4], strides = [1, 1, 1]} : vector<8x18x4xbf16> to vector<8x16x4xbf16>
    %45 = vector.extract_strided_slice %43 {offsets = [0, 1, 0], sizes = [8, 16, 4], strides = [1, 1, 1]} : vector<8x18x4xbf16> to vector<8x16x4xbf16>
    %46 = vector.extract_strided_slice %43 {offsets = [0, 2, 0], sizes = [8, 16, 4], strides = [1, 1, 1]} : vector<8x18x4xbf16> to vector<8x16x4xbf16>
    %47 = tpu.concatenate %44, %45, %46 in 2 : vector<8x16x4xbf16>, vector<8x16x4xbf16>, vector<8x16x4xbf16> -> vector<8x16x12xbf16>
    %48 = vector.shape_cast %47 : vector<8x16x12xbf16> to vector<128x12xbf16>
    %c2_42 = arith.constant 2 : index
    %c0_43 = arith.constant 0 : index
    %c0_44 = arith.constant 0 : index
    %49 = vector.load %arg5[%c2_42, %c0_43, %c0_44] : memref<3x12x128xbf16, #tpu.memory_space<vmem>>, vector<1x12x128xbf16>
    %50 = vector.shape_cast %49 : vector<1x12x128xbf16> to vector<12x128xbf16>
    %cst_45 = arith.constant dense<0.000000e+00> : vector<128x128xf32>
    %51 = tpu.matmul %48, %50, %cst_45 {dimension_numbers = #tpu.dot_dimension_numbers<[1], [0], [0], [1], [0, 0, 1, 1], [], []>} : vector<128x12xbf16>, vector<12x128xbf16>, vector<128x128xf32> -> vector<128x128xf32>
    %52 = arith.addf %42, %51 : vector<128x128xf32>
    %cst_46 = arith.constant dense<0.000000e+00> : vector<128xf32>
    %53 = vector.multi_reduction <add>, %52, %cst_46 [0] : vector<128x128xf32> to vector<128xf32>
    %54 = vector.shape_cast %53 : vector<128xf32> to vector<1x128xf32>
    %55 = arith.mulf %52, %52 : vector<128x128xf32>
    %cst_47 = arith.constant dense<0.000000e+00> : vector<128xf32>
    %56 = vector.multi_reduction <add>, %55, %cst_47 [0] : vector<128x128xf32> to vector<128xf32>
    %57 = vector.shape_cast %56 : vector<128xf32> to vector<1x128xf32>
    %cst_48 = arith.constant 0.000000e+00 : f32
    %58 = vector.broadcast %cst_48 : f32 to vector<6x128xf32>
    %59 = tpu.concatenate %54, %57, %58 in 0 : vector<1x128xf32>, vector<1x128xf32>, vector<6x128xf32> -> vector<8x128xf32>
    %c0_49 = arith.constant 0 : index
    %c0_50 = arith.constant 0 : index
    %c0_51 = arith.constant 0 : index
    %c0_52 = arith.constant 0 : index
    %60 = vector.load %arg7[%c0_49, %c0_50, %c0_51, %c0_52] : memref<1x1x8x128xf32, #tpu.memory_space<vmem>>, vector<1x1x8x128xf32>
    %61 = vector.shape_cast %60 : vector<1x1x8x128xf32> to vector<8x128xf32>
    %62 = vector.shape_cast %59 : vector<8x128xf32> to vector<1x1x8x128xf32>
    tpu.vector_store %arg7[%c0_49, %c0_50, %c0_51, %c0_52], %62 {strides = array<i32>} : memref<1x1x8x128xf32, #tpu.memory_space<vmem>>, vector<1x1x8x128xf32>,
    %63 = vector.shape_cast %52 : vector<128x128xf32> to vector<8x16x128xf32>
    %64 = arith.truncf %63 : vector<8x16x128xf32> to vector<8x16x128xbf16>
    %c0_53 = arith.constant 0 : index
    %c0_54 = arith.constant 0 : index
    %c0_55 = arith.constant 0 : index
    %c0_56 = arith.constant 0 : index
    %65 = vector.load %arg6[%c0_53, %c0_54, %c0_55, %c0_56] : memref<1x8x16x128xbf16, #tpu.memory_space<vmem>>, vector<1x8x16x128xbf16>
    %66 = vector.shape_cast %65 : vector<1x8x16x128xbf16> to vector<8x16x128xbf16>
    %67 = vector.shape_cast %64 : vector<8x16x128xbf16> to vector<1x8x16x128xbf16>
    tpu.vector_store %arg6[%c0_53, %c0_54, %c0_55, %c0_56], %67 {strides = array<i32>} : memref<1x8x16x128xbf16, #tpu.memory_space<vmem>>, vector<1x8x16x128xbf16>,
    return
  }
  func.func @transform_0(%arg0: i32, %arg1: i32) -> (i32, i32, i32, i32) {
    %c0_i32 = arith.constant 0 : i32
    %c0_i32_0 = arith.constant 0 : i32
    %c0_i32_1 = arith.constant 0 : i32
    return %arg0, %arg1, %c0_i32, %c0_i32_0 : i32, i32, i32, i32
  }
  func.func @transform_1(%arg0: i32, %arg1: i32) -> (i32, i32, i32, i32) {
    %c8_i32 = arith.constant 8 : i32
    %0 = arith.muli %arg1, %c8_i32 : i32
    %c1_i32 = arith.constant 1 : i32
    %1 = arith.subi %0, %c1_i32 : i32
    %c0_i32 = arith.constant 0 : i32
    %2 = arith.maxsi %1, %c0_i32 : i32
    %c0_i32_0 = arith.constant 0 : i32
    %c0_i32_1 = arith.constant 0 : i32
    %c0_i32_2 = arith.constant 0 : i32
    return %arg0, %2, %c0_i32_0, %c0_i32_1 : i32, i32, i32, i32
  }
  func.func @transform_2(%arg0: i32, %arg1: i32) -> (i32, i32, i32, i32) {
    %c8_i32 = arith.constant 8 : i32
    %0 = arith.muli %arg1, %c8_i32 : i32
    %c8_i32_0 = arith.constant 8 : i32
    %1 = arith.addi %0, %c8_i32_0 : i32
    %c15_i32 = arith.constant 15 : i32
    %2 = arith.minsi %1, %c15_i32 : i32
    %c0_i32 = arith.constant 0 : i32
    %c0_i32_1 = arith.constant 0 : i32
    %c0_i32_2 = arith.constant 0 : i32
    return %arg0, %2, %c0_i32, %c0_i32_1 : i32, i32, i32, i32
  }
  func.func @transform_3(%arg0: i32, %arg1: i32) -> (i32, i32, i32) {
    %c0_i32 = arith.constant 0 : i32
    %c0_i32_0 = arith.constant 0 : i32
    %c0_i32_1 = arith.constant 0 : i32
    %c0_i32_2 = arith.constant 0 : i32
    return %c0_i32, %c0_i32_0, %c0_i32_1 : i32, i32, i32
  }
  func.func @transform_4(%arg0: i32, %arg1: i32) -> (i32, i32, i32, i32) {
    %c0_i32 = arith.constant 0 : i32
    %c0_i32_0 = arith.constant 0 : i32
    %c0_i32_1 = arith.constant 0 : i32
    return %arg0, %arg1, %c0_i32, %c0_i32_0 : i32, i32, i32, i32
  }
  func.func @transform_5(%arg0: i32, %arg1: i32) -> (i32, i32, i32, i32) {
    %c0_i32 = arith.constant 0 : i32
    %c0_i32_0 = arith.constant 0 : i32
    %c0_i32_1 = arith.constant 0 : i32
    return %arg0, %arg1, %c0_i32, %c0_i32_0 : i32, i32, i32, i32
  }
}

module attributes {stable_mosaic.version = 11 : i64} {
  func.func @_bn_relu_conv2_kernel(%arg0: i32, %arg1: i32, %arg2: memref<1x8x16x128xbf16, #tpu.memory_space<vmem>>, %arg3: memref<1x1x16x128xbf16, #tpu.memory_space<vmem>>, %arg4: memref<1x1x16x128xbf16, #tpu.memory_space<vmem>>, %arg5: memref<1x128xf32, #tpu.memory_space<vmem>>, %arg6: memref<1x128xf32, #tpu.memory_space<vmem>>, %arg7: memref<3x384x128xbf16, #tpu.memory_space<vmem>>, %arg8: memref<1x8x16x128xbf16, #tpu.memory_space<vmem>>, %arg9: memref<1x1x8x128xf32, #tpu.memory_space<vmem>>, %arg10: memref<10x18x128xbf16, #tpu.memory_space<vmem>>) attributes {dimension_semantics = [#tpu.dimension_semantics<parallel>, #tpu.dimension_semantics<parallel>], iteration_bounds = array<i64: 2, 2>, scalar_prefetch = 0 : i64, scratch_operands = 1 : i64, tpu.core_type = #tpu.core_type<tc>, window_params = [{transform_indices = @transform_0, window_bounds = array<i64: 1, 8, 16, 128>}, {transform_indices = @transform_1, window_bounds = array<i64: 1, 1, 16, 128>}, {transform_indices = @transform_2, window_bounds = array<i64: 1, 1, 16, 128>}, {pipeline_mode = #tpu.pipeline_mode<synchronous>, transform_indices = @transform_3, window_bounds = array<i64: 1, 128>}, {pipeline_mode = #tpu.pipeline_mode<synchronous>, transform_indices = @transform_4, window_bounds = array<i64: 1, 128>}, {pipeline_mode = #tpu.pipeline_mode<synchronous>, transform_indices = @transform_5, window_bounds = array<i64: 3, 384, 128>}, {transform_indices = @transform_6, window_bounds = array<i64: 1, 8, 16, 128>}, {transform_indices = @transform_7, window_bounds = array<i64: 1, 1, 8, 128>}]} {
    %c0 = arith.constant 0 : index
    %c0_0 = arith.constant 0 : index
    %0 = vector.load %arg5[%c0, %c0_0] : memref<1x128xf32, #tpu.memory_space<vmem>>, vector<1x128xf32>
    %c0_1 = arith.constant 0 : index
    %c0_2 = arith.constant 0 : index
    %1 = vector.load %arg6[%c0_1, %c0_2] : memref<1x128xf32, #tpu.memory_space<vmem>>, vector<1x128xf32>
    %c0_3 = arith.constant 0 : index
    %c0_4 = arith.constant 0 : index
    %c0_5 = arith.constant 0 : index
    %c0_6 = arith.constant 0 : index
    %2 = vector.load %arg3[%c0_3, %c0_4, %c0_5, %c0_6] : memref<1x1x16x128xbf16, #tpu.memory_space<vmem>>, vector<1x1x16x128xbf16>
    %3 = vector.shape_cast %2 : vector<1x1x16x128xbf16> to vector<16x128xbf16>
    %4 = arith.extf %3 : vector<16x128xbf16> to vector<16x128xf32>
    %5 = vector.broadcast %0 : vector<1x128xf32> to vector<16x128xf32>
    %6 = arith.mulf %4, %5 : vector<16x128xf32>
    %7 = vector.broadcast %1 : vector<1x128xf32> to vector<16x128xf32>
    %8 = arith.addf %6, %7 : vector<16x128xf32>
    %cst = arith.constant 0.000000e+00 : f32
    %9 = vector.broadcast %cst : f32 to vector<16x128xf32>
    %10 = arith.maximumf %8, %9 : vector<16x128xf32>
    %11 = arith.truncf %10 : vector<16x128xf32> to vector<16x128xbf16>
    %c0_i32 = arith.constant 0 : i32
    %12 = arith.cmpi eq, %arg1, %c0_i32 : i32
    %cst_7 = arith.constant 0.000000e+00 : bf16
    %13 = vector.broadcast %cst_7 : bf16 to vector<16x128xbf16>
    %14 = arith.select %12, %13, %11 : vector<16x128xbf16>
    %c0_8 = arith.constant 0 : index
    %c0_9 = arith.constant 0 : index
    %c0_10 = arith.constant 0 : index
    %c0_11 = arith.constant 0 : index
    %15 = vector.load %arg4[%c0_8, %c0_9, %c0_10, %c0_11] : memref<1x1x16x128xbf16, #tpu.memory_space<vmem>>, vector<1x1x16x128xbf16>
    %16 = vector.shape_cast %15 : vector<1x1x16x128xbf16> to vector<16x128xbf16>
    %17 = arith.extf %16 : vector<16x128xbf16> to vector<16x128xf32>
    %18 = vector.broadcast %0 : vector<1x128xf32> to vector<16x128xf32>
    %19 = arith.mulf %17, %18 : vector<16x128xf32>
    %20 = vector.broadcast %1 : vector<1x128xf32> to vector<16x128xf32>
    %21 = arith.addf %19, %20 : vector<16x128xf32>
    %cst_12 = arith.constant 0.000000e+00 : f32
    %22 = vector.broadcast %cst_12 : f32 to vector<16x128xf32>
    %23 = arith.maximumf %21, %22 : vector<16x128xf32>
    %24 = arith.truncf %23 : vector<16x128xf32> to vector<16x128xbf16>
    %c1_i32 = arith.constant 1 : i32
    %25 = arith.cmpi eq, %arg1, %c1_i32 : i32
    %cst_13 = arith.constant 0.000000e+00 : bf16
    %26 = vector.broadcast %cst_13 : bf16 to vector<16x128xbf16>
    %27 = arith.select %25, %26, %24 : vector<16x128xbf16>
    %c0_14 = arith.constant 0 : index
    %c0_15 = arith.constant 0 : index
    %c0_16 = arith.constant 0 : index
    %c0_17 = arith.constant 0 : index
    %28 = vector.load %arg2[%c0_14, %c0_15, %c0_16, %c0_17] : memref<1x8x16x128xbf16, #tpu.memory_space<vmem>>, vector<1x8x16x128xbf16>
    %29 = vector.shape_cast %28 : vector<1x8x16x128xbf16> to vector<8x16x128xbf16>
    %30 = arith.extf %29 : vector<8x16x128xbf16> to vector<8x16x128xf32>
    %31 = vector.shape_cast %0 : vector<1x128xf32> to vector<1x1x128xf32>
    %32 = vector.broadcast %31 : vector<1x1x128xf32> to vector<8x16x128xf32>
    %33 = arith.mulf %30, %32 : vector<8x16x128xf32>
    %34 = vector.shape_cast %1 : vector<1x128xf32> to vector<1x1x128xf32>
    %35 = vector.broadcast %34 : vector<1x1x128xf32> to vector<8x16x128xf32>
    %36 = arith.addf %33, %35 : vector<8x16x128xf32>
    %cst_18 = arith.constant 0.000000e+00 : f32
    %37 = vector.broadcast %cst_18 : f32 to vector<8x16x128xf32>
    %38 = arith.maximumf %36, %37 : vector<8x16x128xf32>
    %39 = arith.truncf %38 : vector<8x16x128xf32> to vector<8x16x128xbf16>
    %cst_19 = arith.constant 0.000000e+00 : bf16
    %40 = vector.broadcast %cst_19 : bf16 to vector<10x1x128xbf16>
    %c0_20 = arith.constant 0 : index
    %c0_21 = arith.constant 0 : index
    %c0_22 = arith.constant 0 : index
    %41 = vector.load %arg10[%c0_20, %c0_21, %c0_22] : memref<10x18x128xbf16, #tpu.memory_space<vmem>>, vector<10x1x128xbf16>
    tpu.vector_store %arg10[%c0_20, %c0_21, %c0_22], %40 {strides = array<i32>} : memref<10x18x128xbf16, #tpu.memory_space<vmem>>, vector<10x1x128xbf16>,
    %c0_23 = arith.constant 0 : index
    %c17 = arith.constant 17 : index
    %c0_24 = arith.constant 0 : index
    %42 = vector.load %arg10[%c0_23, %c17, %c0_24] : memref<10x18x128xbf16, #tpu.memory_space<vmem>>, vector<10x1x128xbf16>
    tpu.vector_store %arg10[%c0_23, %c17, %c0_24], %40 {strides = array<i32>} : memref<10x18x128xbf16, #tpu.memory_space<vmem>>, vector<10x1x128xbf16>,
    %c0_25 = arith.constant 0 : index
    %c1 = arith.constant 1 : index
    %c0_26 = arith.constant 0 : index
    %43 = vector.load %arg10[%c0_25, %c1, %c0_26] : memref<10x18x128xbf16, #tpu.memory_space<vmem>>, vector<1x16x128xbf16>
    %44 = vector.shape_cast %43 : vector<1x16x128xbf16> to vector<16x128xbf16>
    %45 = vector.shape_cast %14 : vector<16x128xbf16> to vector<1x16x128xbf16>
    tpu.vector_store %arg10[%c0_25, %c1, %c0_26], %45 {strides = array<i32>} : memref<10x18x128xbf16, #tpu.memory_space<vmem>>, vector<1x16x128xbf16>,
    %c1_27 = arith.constant 1 : index
    %c1_28 = arith.constant 1 : index
    %c0_29 = arith.constant 0 : index
    %46 = vector.load %arg10[%c1_27, %c1_28, %c0_29] : memref<10x18x128xbf16, #tpu.memory_space<vmem>>, vector<8x16x128xbf16>
    tpu.vector_store %arg10[%c1_27, %c1_28, %c0_29], %39 {strides = array<i32>} : memref<10x18x128xbf16, #tpu.memory_space<vmem>>, vector<8x16x128xbf16>,
    %c9 = arith.constant 9 : index
    %c1_30 = arith.constant 1 : index
    %c0_31 = arith.constant 0 : index
    %47 = vector.load %arg10[%c9, %c1_30, %c0_31] : memref<10x18x128xbf16, #tpu.memory_space<vmem>>, vector<1x16x128xbf16>
    %48 = vector.shape_cast %47 : vector<1x16x128xbf16> to vector<16x128xbf16>
    %49 = vector.shape_cast %27 : vector<16x128xbf16> to vector<1x16x128xbf16>
    tpu.vector_store %arg10[%c9, %c1_30, %c0_31], %49 {strides = array<i32>} : memref<10x18x128xbf16, #tpu.memory_space<vmem>>, vector<1x16x128xbf16>,
    %cst_32 = arith.constant 0.000000e+00 : f32
    %50 = vector.broadcast %cst_32 : f32 to vector<128x128xf32>
    %c0_33 = arith.constant 0 : index
    %c0_34 = arith.constant 0 : index
    %c0_35 = arith.constant 0 : index
    %51 = vector.load %arg10[%c0_33, %c0_34, %c0_35] : memref<10x18x128xbf16, #tpu.memory_space<vmem>>, vector<8x18x128xbf16>
    %52 = vector.extract_strided_slice %51 {offsets = [0, 0, 0], sizes = [8, 16, 128], strides = [1, 1, 1]} : vector<8x18x128xbf16> to vector<8x16x128xbf16>
    %53 = vector.extract_strided_slice %51 {offsets = [0, 1, 0], sizes = [8, 16, 128], strides = [1, 1, 1]} : vector<8x18x128xbf16> to vector<8x16x128xbf16>
    %54 = vector.extract_strided_slice %51 {offsets = [0, 2, 0], sizes = [8, 16, 128], strides = [1, 1, 1]} : vector<8x18x128xbf16> to vector<8x16x128xbf16>
    %55 = tpu.concatenate %52, %53, %54 in 2 : vector<8x16x128xbf16>, vector<8x16x128xbf16>, vector<8x16x128xbf16> -> vector<8x16x384xbf16>
    %56 = vector.shape_cast %55 : vector<8x16x384xbf16> to vector<128x384xbf16>
    %c0_36 = arith.constant 0 : index
    %c0_37 = arith.constant 0 : index
    %c0_38 = arith.constant 0 : index
    %57 = vector.load %arg7[%c0_36, %c0_37, %c0_38] : memref<3x384x128xbf16, #tpu.memory_space<vmem>>, vector<1x384x128xbf16>
    %58 = vector.shape_cast %57 : vector<1x384x128xbf16> to vector<384x128xbf16>
    %cst_39 = arith.constant dense<0.000000e+00> : vector<128x128xf32>
    %59 = tpu.matmul %56, %58, %cst_39 {dimension_numbers = #tpu.dot_dimension_numbers<[1], [0], [0], [1], [0, 0, 1, 1], [], []>} : vector<128x384xbf16>, vector<384x128xbf16>, vector<128x128xf32> -> vector<128x128xf32>
    %60 = arith.addf %50, %59 : vector<128x128xf32>
    %c1_40 = arith.constant 1 : index
    %c0_41 = arith.constant 0 : index
    %c0_42 = arith.constant 0 : index
    %61 = vector.load %arg10[%c1_40, %c0_41, %c0_42] : memref<10x18x128xbf16, #tpu.memory_space<vmem>>, vector<8x18x128xbf16>
    %62 = vector.extract_strided_slice %61 {offsets = [0, 0, 0], sizes = [8, 16, 128], strides = [1, 1, 1]} : vector<8x18x128xbf16> to vector<8x16x128xbf16>
    %63 = vector.extract_strided_slice %61 {offsets = [0, 1, 0], sizes = [8, 16, 128], strides = [1, 1, 1]} : vector<8x18x128xbf16> to vector<8x16x128xbf16>
    %64 = vector.extract_strided_slice %61 {offsets = [0, 2, 0], sizes = [8, 16, 128], strides = [1, 1, 1]} : vector<8x18x128xbf16> to vector<8x16x128xbf16>
    %65 = tpu.concatenate %62, %63, %64 in 2 : vector<8x16x128xbf16>, vector<8x16x128xbf16>, vector<8x16x128xbf16> -> vector<8x16x384xbf16>
    %66 = vector.shape_cast %65 : vector<8x16x384xbf16> to vector<128x384xbf16>
    %c1_43 = arith.constant 1 : index
    %c0_44 = arith.constant 0 : index
    %c0_45 = arith.constant 0 : index
    %67 = vector.load %arg7[%c1_43, %c0_44, %c0_45] : memref<3x384x128xbf16, #tpu.memory_space<vmem>>, vector<1x384x128xbf16>
    %68 = vector.shape_cast %67 : vector<1x384x128xbf16> to vector<384x128xbf16>
    %cst_46 = arith.constant dense<0.000000e+00> : vector<128x128xf32>
    %69 = tpu.matmul %66, %68, %cst_46 {dimension_numbers = #tpu.dot_dimension_numbers<[1], [0], [0], [1], [0, 0, 1, 1], [], []>} : vector<128x384xbf16>, vector<384x128xbf16>, vector<128x128xf32> -> vector<128x128xf32>
    %70 = arith.addf %60, %69 : vector<128x128xf32>
    %c2 = arith.constant 2 : index
    %c0_47 = arith.constant 0 : index
    %c0_48 = arith.constant 0 : index
    %71 = vector.load %arg10[%c2, %c0_47, %c0_48] : memref<10x18x128xbf16, #tpu.memory_space<vmem>>, vector<8x18x128xbf16>
    %72 = vector.extract_strided_slice %71 {offsets = [0, 0, 0], sizes = [8, 16, 128], strides = [1, 1, 1]} : vector<8x18x128xbf16> to vector<8x16x128xbf16>
    %73 = vector.extract_strided_slice %71 {offsets = [0, 1, 0], sizes = [8, 16, 128], strides = [1, 1, 1]} : vector<8x18x128xbf16> to vector<8x16x128xbf16>
    %74 = vector.extract_strided_slice %71 {offsets = [0, 2, 0], sizes = [8, 16, 128], strides = [1, 1, 1]} : vector<8x18x128xbf16> to vector<8x16x128xbf16>
    %75 = tpu.concatenate %72, %73, %74 in 2 : vector<8x16x128xbf16>, vector<8x16x128xbf16>, vector<8x16x128xbf16> -> vector<8x16x384xbf16>
    %76 = vector.shape_cast %75 : vector<8x16x384xbf16> to vector<128x384xbf16>
    %c2_49 = arith.constant 2 : index
    %c0_50 = arith.constant 0 : index
    %c0_51 = arith.constant 0 : index
    %77 = vector.load %arg7[%c2_49, %c0_50, %c0_51] : memref<3x384x128xbf16, #tpu.memory_space<vmem>>, vector<1x384x128xbf16>
    %78 = vector.shape_cast %77 : vector<1x384x128xbf16> to vector<384x128xbf16>
    %cst_52 = arith.constant dense<0.000000e+00> : vector<128x128xf32>
    %79 = tpu.matmul %76, %78, %cst_52 {dimension_numbers = #tpu.dot_dimension_numbers<[1], [0], [0], [1], [0, 0, 1, 1], [], []>} : vector<128x384xbf16>, vector<384x128xbf16>, vector<128x128xf32> -> vector<128x128xf32>
    %80 = arith.addf %70, %79 : vector<128x128xf32>
    %cst_53 = arith.constant dense<0.000000e+00> : vector<128xf32>
    %81 = vector.multi_reduction <add>, %80, %cst_53 [0] : vector<128x128xf32> to vector<128xf32>
    %82 = vector.shape_cast %81 : vector<128xf32> to vector<1x128xf32>
    %83 = arith.mulf %80, %80 : vector<128x128xf32>
    %cst_54 = arith.constant dense<0.000000e+00> : vector<128xf32>
    %84 = vector.multi_reduction <add>, %83, %cst_54 [0] : vector<128x128xf32> to vector<128xf32>
    %85 = vector.shape_cast %84 : vector<128xf32> to vector<1x128xf32>
    %cst_55 = arith.constant 0.000000e+00 : f32
    %86 = vector.broadcast %cst_55 : f32 to vector<6x128xf32>
    %87 = tpu.concatenate %82, %85, %86 in 0 : vector<1x128xf32>, vector<1x128xf32>, vector<6x128xf32> -> vector<8x128xf32>
    %c0_56 = arith.constant 0 : index
    %c0_57 = arith.constant 0 : index
    %c0_58 = arith.constant 0 : index
    %c0_59 = arith.constant 0 : index
    %88 = vector.load %arg9[%c0_56, %c0_57, %c0_58, %c0_59] : memref<1x1x8x128xf32, #tpu.memory_space<vmem>>, vector<1x1x8x128xf32>
    %89 = vector.shape_cast %88 : vector<1x1x8x128xf32> to vector<8x128xf32>
    %90 = vector.shape_cast %87 : vector<8x128xf32> to vector<1x1x8x128xf32>
    tpu.vector_store %arg9[%c0_56, %c0_57, %c0_58, %c0_59], %90 {strides = array<i32>} : memref<1x1x8x128xf32, #tpu.memory_space<vmem>>, vector<1x1x8x128xf32>,
    %91 = vector.shape_cast %80 : vector<128x128xf32> to vector<8x16x128xf32>
    %92 = arith.truncf %91 : vector<8x16x128xf32> to vector<8x16x128xbf16>
    %c0_60 = arith.constant 0 : index
    %c0_61 = arith.constant 0 : index
    %c0_62 = arith.constant 0 : index
    %c0_63 = arith.constant 0 : index
    %93 = vector.load %arg8[%c0_60, %c0_61, %c0_62, %c0_63] : memref<1x8x16x128xbf16, #tpu.memory_space<vmem>>, vector<1x8x16x128xbf16>
    %94 = vector.shape_cast %93 : vector<1x8x16x128xbf16> to vector<8x16x128xbf16>
    %95 = vector.shape_cast %92 : vector<8x16x128xbf16> to vector<1x8x16x128xbf16>
    tpu.vector_store %arg8[%c0_60, %c0_61, %c0_62, %c0_63], %95 {strides = array<i32>} : memref<1x8x16x128xbf16, #tpu.memory_space<vmem>>, vector<1x8x16x128xbf16>,
    return
  }
  func.func @transform_0(%arg0: i32, %arg1: i32) -> (i32, i32, i32, i32) {
    %c0_i32 = arith.constant 0 : i32
    %c0_i32_0 = arith.constant 0 : i32
    %c0_i32_1 = arith.constant 0 : i32
    return %arg0, %arg1, %c0_i32, %c0_i32_0 : i32, i32, i32, i32
  }
  func.func @transform_1(%arg0: i32, %arg1: i32) -> (i32, i32, i32, i32) {
    %c8_i32 = arith.constant 8 : i32
    %0 = arith.muli %arg1, %c8_i32 : i32
    %c1_i32 = arith.constant 1 : i32
    %1 = arith.subi %0, %c1_i32 : i32
    %c0_i32 = arith.constant 0 : i32
    %2 = arith.maxsi %1, %c0_i32 : i32
    %c0_i32_0 = arith.constant 0 : i32
    %c0_i32_1 = arith.constant 0 : i32
    %c0_i32_2 = arith.constant 0 : i32
    return %arg0, %2, %c0_i32_0, %c0_i32_1 : i32, i32, i32, i32
  }
  func.func @transform_2(%arg0: i32, %arg1: i32) -> (i32, i32, i32, i32) {
    %c8_i32 = arith.constant 8 : i32
    %0 = arith.muli %arg1, %c8_i32 : i32
    %c8_i32_0 = arith.constant 8 : i32
    %1 = arith.addi %0, %c8_i32_0 : i32
    %c15_i32 = arith.constant 15 : i32
    %2 = arith.minsi %1, %c15_i32 : i32
    %c0_i32 = arith.constant 0 : i32
    %c0_i32_1 = arith.constant 0 : i32
    %c0_i32_2 = arith.constant 0 : i32
    return %arg0, %2, %c0_i32, %c0_i32_1 : i32, i32, i32, i32
  }
  func.func @transform_3(%arg0: i32, %arg1: i32) -> (i32, i32) {
    %c0_i32 = arith.constant 0 : i32
    %c0_i32_0 = arith.constant 0 : i32
    %c0_i32_1 = arith.constant 0 : i32
    return %c0_i32, %c0_i32_0 : i32, i32
  }
  func.func @transform_4(%arg0: i32, %arg1: i32) -> (i32, i32) {
    %c0_i32 = arith.constant 0 : i32
    %c0_i32_0 = arith.constant 0 : i32
    %c0_i32_1 = arith.constant 0 : i32
    return %c0_i32, %c0_i32_0 : i32, i32
  }
  func.func @transform_5(%arg0: i32, %arg1: i32) -> (i32, i32, i32) {
    %c0_i32 = arith.constant 0 : i32
    %c0_i32_0 = arith.constant 0 : i32
    %c0_i32_1 = arith.constant 0 : i32
    %c0_i32_2 = arith.constant 0 : i32
    return %c0_i32, %c0_i32_0, %c0_i32_1 : i32, i32, i32
  }
  func.func @transform_6(%arg0: i32, %arg1: i32) -> (i32, i32, i32, i32) {
    %c0_i32 = arith.constant 0 : i32
    %c0_i32_0 = arith.constant 0 : i32
    %c0_i32_1 = arith.constant 0 : i32
    return %arg0, %arg1, %c0_i32, %c0_i32_0 : i32, i32, i32, i32
  }
  func.func @transform_7(%arg0: i32, %arg1: i32) -> (i32, i32, i32, i32) {
    %c0_i32 = arith.constant 0 : i32
    %c0_i32_0 = arith.constant 0 : i32
    %c0_i32_1 = arith.constant 0 : i32
    return %arg0, %arg1, %c0_i32, %c0_i32_0 : i32, i32, i32, i32
  }
}

module attributes {stable_mosaic.version = 11 : i64} {
  func.func @_bn_relu_kernel(%arg0: i32, %arg1: i32, %arg2: memref<1x8x16x128xbf16, #tpu.memory_space<vmem>>, %arg3: memref<1x128xf32, #tpu.memory_space<vmem>>, %arg4: memref<1x128xf32, #tpu.memory_space<vmem>>, %arg5: memref<1x8x16x128xf32, #tpu.memory_space<vmem>>) attributes {dimension_semantics = [#tpu.dimension_semantics<parallel>, #tpu.dimension_semantics<parallel>], iteration_bounds = array<i64: 2, 2>, scalar_prefetch = 0 : i64, scratch_operands = 0 : i64, tpu.core_type = #tpu.core_type<tc>, window_params = [{transform_indices = @transform_0, window_bounds = array<i64: 1, 8, 16, 128>}, {pipeline_mode = #tpu.pipeline_mode<synchronous>, transform_indices = @transform_1, window_bounds = array<i64: 1, 128>}, {pipeline_mode = #tpu.pipeline_mode<synchronous>, transform_indices = @transform_2, window_bounds = array<i64: 1, 128>}, {transform_indices = @transform_3, window_bounds = array<i64: 1, 8, 16, 128>}]} {
    %c0 = arith.constant 0 : index
    %c0_0 = arith.constant 0 : index
    %c0_1 = arith.constant 0 : index
    %c0_2 = arith.constant 0 : index
    %0 = vector.load %arg2[%c0, %c0_0, %c0_1, %c0_2] : memref<1x8x16x128xbf16, #tpu.memory_space<vmem>>, vector<1x8x16x128xbf16>
    %1 = vector.shape_cast %0 : vector<1x8x16x128xbf16> to vector<8x16x128xbf16>
    %2 = arith.extf %1 : vector<8x16x128xbf16> to vector<8x16x128xf32>
    %c0_3 = arith.constant 0 : index
    %c0_4 = arith.constant 0 : index
    %3 = vector.load %arg3[%c0_3, %c0_4] : memref<1x128xf32, #tpu.memory_space<vmem>>, vector<1x128xf32>
    %4 = vector.shape_cast %3 : vector<1x128xf32> to vector<1x1x128xf32>
    %5 = vector.broadcast %4 : vector<1x1x128xf32> to vector<8x16x128xf32>
    %6 = arith.mulf %2, %5 : vector<8x16x128xf32>
    %c0_5 = arith.constant 0 : index
    %c0_6 = arith.constant 0 : index
    %7 = vector.load %arg4[%c0_5, %c0_6] : memref<1x128xf32, #tpu.memory_space<vmem>>, vector<1x128xf32>
    %8 = vector.shape_cast %7 : vector<1x128xf32> to vector<1x1x128xf32>
    %9 = vector.broadcast %8 : vector<1x1x128xf32> to vector<8x16x128xf32>
    %10 = arith.addf %6, %9 : vector<8x16x128xf32>
    %cst = arith.constant 0.000000e+00 : f32
    %11 = vector.broadcast %cst : f32 to vector<8x16x128xf32>
    %12 = arith.maximumf %10, %11 : vector<8x16x128xf32>
    %c0_7 = arith.constant 0 : index
    %c0_8 = arith.constant 0 : index
    %c0_9 = arith.constant 0 : index
    %c0_10 = arith.constant 0 : index
    %13 = vector.load %arg5[%c0_7, %c0_8, %c0_9, %c0_10] : memref<1x8x16x128xf32, #tpu.memory_space<vmem>>, vector<1x8x16x128xf32>
    %14 = vector.shape_cast %13 : vector<1x8x16x128xf32> to vector<8x16x128xf32>
    %15 = vector.shape_cast %12 : vector<8x16x128xf32> to vector<1x8x16x128xf32>
    tpu.vector_store %arg5[%c0_7, %c0_8, %c0_9, %c0_10], %15 {strides = array<i32>} : memref<1x8x16x128xf32, #tpu.memory_space<vmem>>, vector<1x8x16x128xf32>,
    return
  }
  func.func @transform_0(%arg0: i32, %arg1: i32) -> (i32, i32, i32, i32) {
    %c0_i32 = arith.constant 0 : i32
    %c0_i32_0 = arith.constant 0 : i32
    %c0_i32_1 = arith.constant 0 : i32
    return %arg0, %arg1, %c0_i32, %c0_i32_0 : i32, i32, i32, i32
  }
  func.func @transform_1(%arg0: i32, %arg1: i32) -> (i32, i32) {
    %c0_i32 = arith.constant 0 : i32
    %c0_i32_0 = arith.constant 0 : i32
    %c0_i32_1 = arith.constant 0 : i32
    return %c0_i32, %c0_i32_0 : i32, i32
  }
  func.func @transform_2(%arg0: i32, %arg1: i32) -> (i32, i32) {
    %c0_i32 = arith.constant 0 : i32
    %c0_i32_0 = arith.constant 0 : i32
    %c0_i32_1 = arith.constant 0 : i32
    return %c0_i32, %c0_i32_0 : i32, i32
  }
  func.func @transform_3(%arg0: i32, %arg1: i32) -> (i32, i32, i32, i32) {
    %c0_i32 = arith.constant 0 : i32
    %c0_i32_0 = arith.constant 0 : i32
    %c0_i32_1 = arith.constant 0 : i32
    return %arg0, %arg1, %c0_i32, %c0_i32_0 : i32, i32, i32, i32
  }
}

</mosaic_0001>

<llo_original>
// kernel: inconv_forward.5
$region0: #{inconv_forward.5}
  #allocation0 [shape = 'u32[]', space=smem, size = 0x4, offset = 0x4, fixed_abs, tag = 'smem constant byte address 0x4 - core index']
  #allocation1 [shape = 'u32[72,128]{1,0:T(1,128)}', space=vmem, size = 0x9000, scoped, tag = 'internal scratch']
  %s0 = inlined_call_operand.vmem [shape: bf16[2,16,16,128], index: 0, kind: input, shape index: {}]
  %s1 = inlined_call_operand.vmem [shape: f32[1,128], index: 1, kind: input, shape index: {}]
  %s2 = inlined_call_operand.vmem [shape: f32[1,128], index: 2, kind: input, shape index: {}]
  %s3 = inlined_call_operand.vmem [shape: f32[2,16,16,128], index: 3, kind: output, shape index: {}]
  %s4 = sld [smem:[#allocation0]]
  $region45: #{inconv_forward.5} parent=0
    _
  %s6 = ssub.s32 1, %s4
  %s7 = scalar_select 0, %s6, %s4
  loop: start=0, step=1, limit=6
  $region2: #{inconv_forward.5} parent=0 // loop_pre_header
    _
  $region3: #{inconv_forward.5} parent=0 // loop_header
    %s9 = sphi 0, %s13
    %p10 = scmp.ge.s32.totalorder %s9, 6
    %s16 = sphi 0, %s28
    %s17 = sphi 0, %s24
    %s18 = sphi 0, %s16
    %s19 = sphi 0, %s17
    %s20 = sphi 0, %s18
    %s21 = sphi 0, %s19
    %s33 = sphi 0, %s35
    %s36 = sphi 0, %s33
    %s37 = sphi 0, %s36
    %s53 = sphi 0, %s37
    %s57 = sphi 0, %s57
    %s59 = sphi 0, %s57
    %s60 = sphi 0, %s59
    %s74 = sphi 0, %s60
    %s78 = sphi 0, %s78
    %s80 = sphi 0, %s78
    %s81 = sphi 0, %s80
    %s95 = sphi 0, %s81
    %s103 = sphi 0, %s105
    %s106 = sphi 0, %s103
    %s107 = sphi 0, %s106
    %s123 = sphi 0, %s107
  $region4: #{inconv_forward.5} parent=0 // loop_header_branch
    %12 = sbr.rel (%p10) target = $region8
  $region5: #{inconv_forward.5} parent=0 // loop_body
    %s14 = ssub.s32 %s9, 1
    %s15 = ssub.s32 %s9, 2
    %s22 = sadd.s32 1, %s17
    %p23 = scmp.ge.s32.totalorder %s22, 2
    %s24 = scalar_select %p23, 0, %s22
    %s25 = sadd.s32 1, %s16
    %s26 = scalar_select %p23, %s25, %s16
    %p27 = scmp.ge.s32.totalorder %s26, 2
    %s28 = scalar_select %p27, 0, %s26
    %s29 = ssub.s32 %s16, %s28
    %s30 = ssub.s32 %s17, %s24
    %s31 = sor.u32 %s29, %s30
    %p32 = scmp.eq.s32.totalorder %s31, 0
    %s34 = sadd.s32 %s33, 1
    %s35 = scalar_select %p32, %s33, %s34
    %p38 = pneg %p32
    %p39 = scmp.eq.s32.totalorder %s9, 3
    %p40 = por %p38, %p39
    %p41 = scmp.ne.s32.totalorder %s33, %s36
    %p42 = scmp.eq.s32.totalorder %s9, 0
    %p43 = por %p41, %p42
    %p44 = scmp.ne.s32.totalorder %s33, %s36
    %p45 = scmp.eq.s32.totalorder %s14, 3
    %p46 = por %p44, %p45
    %p47 = scmp.ne.s32.totalorder %s36, %s37
    %p48 = scmp.eq.s32.totalorder %s14, 0
    %p49 = por %p47, %p48
    %p50 = scmp.ne.s32.totalorder %s36, %s37
    %p51 = scmp.eq.s32.totalorder %s15, 3
    %p52 = por %p50, %p51
    %p54 = scmp.ne.s32.totalorder %s37, %s53
    %p55 = scmp.eq.s32.totalorder %s15, 0
    %p56 = por %p54, %p55
    %s58 = sadd.s32 %s57, 1
    %p61 = scmp.eq.s32.totalorder %s9, 3
    %p62 = scmp.ne.s32.totalorder %s57, %s59
    %p63 = scmp.eq.s32.totalorder %s9, 0
    %p64 = por %p62, %p63
    %p65 = scmp.ne.s32.totalorder %s57, %s59
    %p66 = scmp.eq.s32.totalorder %s14, 3
    %p67 = por %p65, %p66
    %p68 = scmp.ne.s32.totalorder %s59, %s60
    %p69 = scmp.eq.s32.totalorder %s14, 0
    %p70 = por %p68, %p69
    %p71 = scmp.ne.s32.totalorder %s59, %s60
    %p72 = scmp.eq.s32.totalorder %s15, 3
    %p73 = por %p71, %p72
    %p75 = scmp.ne.s32.totalorder %s60, %s74
    %p76 = scmp.eq.s32.totalorder %s15, 0
    %p77 = por %p75, %p76
    %s79 = sadd.s32 %s78, 1
    %p82 = scmp.eq.s32.totalorder %s9, 3
    %p83 = scmp.ne.s32.totalorder %s78, %s80
    %p84 = scmp.eq.s32.totalorder %s9, 0
    %p85 = por %p83, %p84
    %p86 = scmp.ne.s32.totalorder %s78, %s80
    %p87 = scmp.eq.s32.totalorder %s14, 3
    %p88 = por %p86, %p87
    %p89 = scmp.ne.s32.totalorder %s80, %s81
    %p90 = scmp.eq.s32.totalorder %s14, 0
    %p91 = por %p89, %p90
    %p92 = scmp.ne.s32.totalorder %s80, %s81
    %p93 = scmp.eq.s32.totalorder %s15, 3
    %p94 = por %p92, %p93
    %p96 = scmp.ne.s32.totalorder %s81, %s95
    %p97 = scmp.eq.s32.totalorder %s15, 0
    %p98 = por %p96, %p97
    %s99 = ssub.s32 %s16, %s28
    %s100 = ssub.s32 %s17, %s24
    %s101 = sor.u32 %s99, %s100
    %p102 = scmp.eq.s32.totalorder %s101, 0
    %s104 = sadd.s32 %s103, 1
    %s105 = scalar_select %p102, %s103, %s104
    %p108 = pneg %p102
    %p109 = scmp.eq.s32.totalorder %s9, 3
    %p110 = por %p108, %p109
    %p111 = scmp.ne.s32.totalorder %s103, %s106
    %p112 = scmp.eq.s32.totalorder %s9, 0
    %p113 = por %p111, %p112
    %p114 = scmp.ne.s32.totalorder %s103, %s106
    %p115 = scmp.eq.s32.totalorder %s14, 3
    %p116 = por %p114, %p115
    %p117 = scmp.ne.s32.totalorder %s106, %s107
    %p118 = scmp.eq.s32.totalorder %s14, 0
    %p119 = por %p117, %p118
    %p120 = scmp.ne.s32.totalorder %s106, %s107
    %p121 = scmp.eq.s32.totalorder %s15, 3
    %p122 = por %p120, %p121
    %p124 = scmp.ne.s32.totalorder %s107, %s123
    %p125 = scmp.eq.s32.totalorder %s15, 0
    %p126 = por %p124, %p125
    %p127 = scmp.le.s32.totalorder 1, %s9
    %p128 = scmp.lt.s32.totalorder %s9, 5
    %p129 = pnand %p127, %p128
    %p130 = pneg %p129
    // Predicated region
    $region9: #{inconv_forward.5} parent=5 // pred_check
      _
    $region10: #{inconv_forward.5} parent=5 // pred_check_branch
      %132 = sbr.rel (%p129) target = $region12
    $region11: #{inconv_forward.5} parent=5 // pred_region
      %s133 = ssub.s32 %s9, 1
      // Predicated region
      $region13: #{inconv_forward.5} parent=11 // pred_check
        %p134 = pneg %p70
      $region14: #{inconv_forward.5} parent=11 // pred_check_branch
        %136 = sbr.rel (%p134) target = $region16
      $region15: #{inconv_forward.5} parent=11 // pred_region
        _
      $region16: #{inconv_forward.5} parent=11 // pred_fallthru
        _
      // Predicated region
      $region17: #{inconv_forward.5} parent=11 // pred_check
        %p137 = pneg %p91
      $region18: #{inconv_forward.5} parent=11 // pred_check_branch
        %139 = sbr.rel (%p137) target = $region20
      $region19: #{inconv_forward.5} parent=11 // pred_region
        _
      $region20: #{inconv_forward.5} parent=11 // pred_fallthru
        _
    $region12: #{inconv_forward.5} parent=5 // pred_fallthru
      _
    %p140 = scmp.lt.s32.totalorder %s9, 4
    // Predicated region
    $region21: #{inconv_forward.5} parent=5 // pred_check
      %p141 = pneg %p140
    $region22: #{inconv_forward.5} parent=5 // pred_check_branch
      %143 = sbr.rel (%p141) target = $region24
    $region23: #{inconv_forward.5} parent=5 // pred_region
      // Predicated region
      $region25: #{inconv_forward.5} parent=23 // pred_check
        %p144 = pneg %p43
      $region26: #{inconv_forward.5} parent=23 // pred_check_branch
        %146 = sbr.rel (%p144) target = $region28
      $region27: #{inconv_forward.5} parent=23 // pred_region
        %s147 = smul.u32 8, %s17
        %p148 = scmp.lt.s32.totalorder %s16, 1
        %s149 = scalar_select %p148, %s16, 1
        %p150 = scmp.lt.s32.totalorder %s147, 15
        %s151 = scalar_select %p150, %s147, 15
        %s152 = smul.addr %s151, 2
        %s153 = smul.addr %s149, 32
        %s154 = sadd.s32 %s152, %s153
        %s155 = smul.addr %s154, 4
        %s156 = scalar_lea.vmem %s0, %s155
        %s157 = smul.u32 8, %s17
      $region28: #{inconv_forward.5} parent=23 // pred_fallthru
        _
    $region24: #{inconv_forward.5} parent=5 // pred_fallthru
      _
    %p158 = scmp.le.s32.totalorder 1, %s9
    %p159 = scmp.lt.s32.totalorder %s9, 5
    %p160 = pnand %p158, %p159
    %p161 = pneg %p160
    // Predicated region
    $region29: #{inconv_forward.5} parent=5 // pred_check
      _
    $region30: #{inconv_forward.5} parent=5 // pred_check_branch
      %163 = sbr.rel (%p160) target = $region32
    $region31: #{inconv_forward.5} parent=5 // pred_region
      %s164 = ssub.s32 %s9, 1
      %s165 = smul.u32 8, %s19
      %p166 = scmp.lt.s32.totalorder %s18, 1
      %s167 = scalar_select %p166, %s18, 1
      %p168 = scmp.lt.s32.totalorder %s165, 15
      %s169 = scalar_select %p168, %s165, 15
      %s170 = smul.addr %s169, 2
      %s171 = smul.addr %s167, 32
      %s172 = sadd.s32 %s170, %s171
      %s173 = smul.addr %s172, 4
      %s174 = scalar_lea.vmem %s0, %s173
      %p175 = pneg %p49
      %p176 = pneg %p46
      %p177 = pneg %p70
      %p178 = pneg %p67
      %p179 = pneg %p91
      %p180 = pneg %p88
      %p181 = pneg %p119
      %p182 = pneg %p116
      %s183 = smul.u32 8, %s19
      %p184 = scmp.lt.s32.totalorder %s18, 1
      %s185 = scalar_select %p184, %s18, 1
      %p186 = scmp.lt.s32.totalorder %s183, 15
      %s187 = scalar_select %p186, %s183, 15
      %s188 = smul.addr %s187, 2
      %s189 = smul.addr %s185, 32
      %s190 = sadd.s32 %s188, %s189
      %s191 = smul.addr %s190, 8
      %s192 = scalar_lea.vmem %s3, %s191
      %s193 = smul.u32 8, %s19
      %p194 = scmp.lt.s32.totalorder %s18, 1
      %s195 = scalar_select %p194, %s18, 1
      %p196 = scmp.lt.s32.totalorder %s193, 15
      %s197 = scalar_select %p196, %s193, 15
      %s198 = smul.addr %s197, 2
      %s199 = smul.addr %s195, 32
      %s200 = sadd.s32 %s198, %s199
      %s201 = smul.addr %s200, 4
      %s202 = scalar_lea.vmem %s0, %s201
      %s203 = smul.u32 8, %s19
      %s204 = smul.u32 8, %s19
      %p205 = scmp.lt.s32.totalorder %s18, 1
      %s206 = scalar_select %p205, %s18, 1
      %p207 = scmp.lt.s32.totalorder %s204, 15
      %s208 = scalar_select %p207, %s204, 15
      %s209 = smul.addr %s208, 2
      %s210 = smul.addr %s206, 32
      %s211 = sadd.s32 %s209, %s210
      %s212 = smul.addr %s211, 8
      %s213 = scalar_lea.vmem %s3, %s212
      %s214 = smul.u32 8, %s19
      %v215 = vld [vmem:[%s202] sm:$0xf]
      %v216 = vld [vmem:[%s202 + $0x4] sm:$0xf]
      %v217 = vld [vmem:[%s202 + $0x8] sm:$0xf]
      %v218 = vld [vmem:[%s202 + $0xc] sm:$0xf]
      %v219 = vld [vmem:[%s202 + $0x10] sm:$0xf]
      %v220 = vld [vmem:[%s202 + $0x14] sm:$0xf]
      %v221 = vld [vmem:[%s202 + $0x18] sm:$0xf]
      %v222 = vld [vmem:[%s202 + $0x1c] sm:$0xf]
      %v223 = vld [vmem:[%s202 + $0x20] sm:$0xf]
      %v224 = vld [vmem:[%s202 + $0x24] sm:$0xf]
      %v225 = vld [vmem:[%s202 + $0x28] sm:$0xf]
      %v226 = vld [vmem:[%s202 + $0x2c] sm:$0xf]
      %v227 = vld [vmem:[%s202 + $0x30] sm:$0xf]
      %v228 = vld [vmem:[%s202 + $0x34] sm:$0xf]
      %v229 = vld [vmem:[%s202 + $0x38] sm:$0xf]
      %v230 = vld [vmem:[%s202 + $0x3c] sm:$0xf]
      %v231 = vunpack.c.l.bf16 %v215
      %v232 = vunpack.c.l.bf16 %v216
      %v233 = vunpack.c.l.bf16 %v217
      %v234 = vunpack.c.l.bf16 %v218
      %v235 = vunpack.c.l.bf16 %v219
      %v236 = vunpack.c.l.bf16 %v220
      %v237 = vunpack.c.l.bf16 %v221
      %v238 = vunpack.c.l.bf16 %v222
      %v239 = vunpack.c.l.bf16 %v223
      %v240 = vunpack.c.l.bf16 %v224
      %v241 = vunpack.c.l.bf16 %v225
      %v242 = vunpack.c.l.bf16 %v226
      %v243 = vunpack.c.l.bf16 %v227
      %v244 = vunpack.c.l.bf16 %v228
      %v245 = vunpack.c.l.bf16 %v229
      %v246 = vunpack.c.l.bf16 %v230
      %v247 = vld [vmem:[%s1] sm:$0x1]
      %v249 = vperm.slane %v247, 0
      %v251 = vmul.f32 %v231, %v249
      %v252 = vmul.f32 %v232, %v249
      %v253 = vmul.f32 %v233, %v249
      %v254 = vmul.f32 %v234, %v249
      %v255 = vmul.f32 %v235, %v249
      %v256 = vmul.f32 %v236, %v249
      %v257 = vmul.f32 %v237, %v249
      %v258 = vmul.f32 %v238, %v249
      %v259 = vmul.f32 %v239, %v249
      %v260 = vmul.f32 %v240, %v249
      %v261 = vmul.f32 %v241, %v249
      %v262 = vmul.f32 %v242, %v249
      %v263 = vmul.f32 %v243, %v249
      %v264 = vmul.f32 %v244, %v249
      %v265 = vmul.f32 %v245, %v249
      %v266 = vmul.f32 %v246, %v249
      %v267 = vld [vmem:[%s2] sm:$0x1]
      %v269 = vperm.slane %v267, 0
      %v271 = vadd.f32 %v251, %v269
      %v272 = vadd.f32 %v252, %v269
      %v273 = vadd.f32 %v253, %v269
      %v274 = vadd.f32 %v254, %v269
      %v275 = vadd.f32 %v255, %v269
      %v276 = vadd.f32 %v256, %v269
      %v277 = vadd.f32 %v257, %v269
      %v278 = vadd.f32 %v258, %v269
      %v279 = vadd.f32 %v259, %v269
      %v280 = vadd.f32 %v260, %v269
      %v281 = vadd.f32 %v261, %v269
      %v282 = vadd.f32 %v262, %v269
      %v283 = vadd.f32 %v263, %v269
      %v284 = vadd.f32 %v264, %v269
      %v285 = vadd.f32 %v265, %v269
      %v286 = vadd.f32 %v266, %v269
      %v287 = vmax.f32 %v271, 0.0
      %v288 = vmax.f32 %v272, 0.0
      %v289 = vmax.f32 %v273, 0.0
      %v290 = vmax.f32 %v274, 0.0
      %v291 = vmax.f32 %v275, 0.0
      %v292 = vmax.f32 %v276, 0.0
      %v293 = vmax.f32 %v277, 0.0
      %v294 = vmax.f32 %v278, 0.0
      %v295 = vmax.f32 %v279, 0.0
      %v296 = vmax.f32 %v280, 0.0
      %v297 = vmax.f32 %v281, 0.0
      %v298 = vmax.f32 %v282, 0.0
      %v299 = vmax.f32 %v283, 0.0
      %v300 = vmax.f32 %v284, 0.0
      %v301 = vmax.f32 %v285, 0.0
      %v302 = vmax.f32 %v286, 0.0
      %303 = vst [vmem:[%s213] sm:$0xff] %v287
      %304 = vst [vmem:[%s213 + $0x8] sm:$0xff] %v288
      %305 = vst [vmem:[%s213 + $0x10] sm:$0xff] %v289
      %306 = vst [vmem:[%s213 + $0x18] sm:$0xff] %v290
      %307 = vst [vmem:[%s213 + $0x20] sm:$0xff] %v291
      %308 = vst [vmem:[%s213 + $0x28] sm:$0xff] %v292
      %309 = vst [vmem:[%s213 + $0x30] sm:$0xff] %v293
      %310 = vst [vmem:[%s213 + $0x38] sm:$0xff] %v294
      %311 = vst [vmem:[%s213 + $0x40] sm:$0xff] %v295
      %312 = vst [vmem:[%s213 + $0x48] sm:$0xff] %v296
      %313 = vst [vmem:[%s213 + $0x50] sm:$0xff] %v297
      %314 = vst [vmem:[%s213 + $0x58] sm:$0xff] %v298
      %315 = vst [vmem:[%s213 + $0x60] sm:$0xff] %v299
      %316 = vst [vmem:[%s213 + $0x68] sm:$0xff] %v300
      %317 = vst [vmem:[%s213 + $0x70] sm:$0xff] %v301
      %318 = vst [vmem:[%s213 + $0x78] sm:$0xff] %v302
      %s319 = smul.u32 8, %s19
      %p320 = scmp.lt.s32.totalorder %s18, 1
      %s321 = scalar_select %p320, %s18, 1
      %p322 = scmp.lt.s32.totalorder %s319, 15
      %s323 = scalar_select %p322, %s319, 15
      %s324 = smul.addr %s323, 2
      %s325 = smul.addr %s321, 32
      %s326 = sadd.s32 %s324, %s325
      %s327 = smul.addr %s326, 8
      %s328 = scalar_lea.vmem %s3, %s327
      // Predicated region
      $region33: #{inconv_forward.5} parent=31 // pred_check
        %p329 = pneg %p116
      $region34: #{inconv_forward.5} parent=31 // pred_check_branch
        %331 = sbr.rel (%p329) target = $region36
      $region35: #{inconv_forward.5} parent=31 // pred_region
        %s332 = smul.u32 8, %s19
      $region36: #{inconv_forward.5} parent=31 // pred_fallthru
        _
    $region32: #{inconv_forward.5} parent=5 // pred_fallthru
      _
    %p333 = scmp.le.s32.totalorder 2, %s9
    // Predicated region
    $region37: #{inconv_forward.5} parent=5 // pred_check
      %p334 = pneg %p333
    $region38: #{inconv_forward.5} parent=5 // pred_check_branch
      %336 = sbr.rel (%p334) target = $region40
    $region39: #{inconv_forward.5} parent=5 // pred_region
      %s337 = ssub.s32 %s9, 2
      // Predicated region
      $region41: #{inconv_forward.5} parent=39 // pred_check
        %p338 = pneg %p122
      $region42: #{inconv_forward.5} parent=39 // pred_check_branch
        %340 = sbr.rel (%p338) target = $region44
      $region43: #{inconv_forward.5} parent=39 // pred_region
        %s341 = smul.u32 8, %s21
        %p342 = scmp.lt.s32.totalorder %s20, 1
        %s343 = scalar_select %p342, %s20, 1
        %p344 = scmp.lt.s32.totalorder %s341, 15
        %s345 = scalar_select %p344, %s341, 15
        %s346 = smul.addr %s345, 2
        %s347 = smul.addr %s343, 32
        %s348 = sadd.s32 %s346, %s347
        %s349 = smul.addr %s348, 8
        %s350 = scalar_lea.vmem %s3, %s349
      $region44: #{inconv_forward.5} parent=39 // pred_fallthru
        _
    $region40: #{inconv_forward.5} parent=5 // pred_fallthru
      _
  $region6: #{inconv_forward.5} parent=0 // loop_footer
    %s13 = sadd.s32 1, %s9
  $region7: #{inconv_forward.5} parent=0 // loop_footer_branch
    %8 = sbr.rel target = $region3
  $region8: #{inconv_forward.5} parent=0 // loop_exit
    _

// kernel: inconv_forward.3
$region0: #{inconv_forward.3}
  #allocation0 [shape = 'u32[]', space=smem, size = 0x4, offset = 0x4, fixed_abs, tag = 'smem constant byte address 0x4 - core index']
  #allocation1 [shape = 'u32[72,128]{1,0:T(1,128)}', space=vmem, size = 0x9000, scoped, tag = 'internal scratch']
  #allocation2 [shape = 'bf16[10,18,4]{2,1,0:T(8,128)(2,1)}', space=vmem, size = 0xf000, scoped, tag = 'scratch operand']
  %s0 = inlined_call_operand.vmem [shape: bf16[2,16,16,4], index: 0, kind: input, shape index: {}, may-alias: {0,1,2}]
  %s1 = inlined_call_operand.vmem [shape: bf16[2,16,16,4], index: 1, kind: input, shape index: {}, may-alias: {0,1,2}]
  %s2 = inlined_call_operand.vmem [shape: bf16[2,16,16,4], index: 2, kind: input, shape index: {}, may-alias: {0,1,2}]
  %s3 = inlined_call_operand.vmem [shape: bf16[3,12,128], index: 3, kind: input, shape index: {}]
  %s4 = inlined_call_operand.vmem [shape: bf16[2,16,16,128], index: 4, kind: output, shape index: {0}]
  %s5 = inlined_call_operand.vmem [shape: f32[2,2,8,128], index: 5, kind: output, shape index: {1}]
  %6 = xla_tuple %s4, %s5
  %s7 = sld [smem:[#allocation0]]
  $region57: #{inconv_forward.3} parent=0
    _
  %s9 = ssub.s32 1, %s7
  %s10 = scalar_select 0, %s9, %s7
  loop: start=0, step=1, limit=6
  $region2: #{inconv_forward.3} parent=0 // loop_pre_header
    _
  $region3: #{inconv_forward.3} parent=0 // loop_header
    %s12 = sphi 0, %s16
    %p13 = scmp.ge.s32.totalorder %s12, 6
    %s19 = sphi 0, %s31
    %s20 = sphi 0, %s27
    %s21 = sphi 0, %s19
    %s22 = sphi 0, %s20
    %s23 = sphi 0, %s21
    %s24 = sphi 0, %s22
    %s36 = sphi 0, %s38
    %s39 = sphi 0, %s36
    %s40 = sphi 0, %s39
    %s56 = sphi 0, %s40
    %s72 = sphi 0, %s74
    %s75 = sphi 0, %s72
    %s76 = sphi 0, %s75
    %s92 = sphi 0, %s76
    %s108 = sphi 0, %s110
    %s111 = sphi 0, %s108
    %s112 = sphi 0, %s111
    %s128 = sphi 0, %s112
    %s132 = sphi 0, %s132
    %s134 = sphi 0, %s132
    %s135 = sphi 0, %s134
    %s149 = sphi 0, %s135
    %s157 = sphi 0, %s159
    %s160 = sphi 0, %s157
    %s161 = sphi 0, %s160
    %s177 = sphi 0, %s161
    %s185 = sphi 0, %s187
    %s188 = sphi 0, %s185
    %s189 = sphi 0, %s188
    %s205 = sphi 0, %s189
  $region4: #{inconv_forward.3} parent=0 // loop_header_branch
    %15 = sbr.rel (%p13) target = $region8
  $region5: #{inconv_forward.3} parent=0 // loop_body
    %s17 = ssub.s32 %s12, 1
    %s18 = ssub.s32 %s12, 2
    %s25 = sadd.s32 1, %s20
    %p26 = scmp.ge.s32.totalorder %s25, 2
    %s27 = scalar_select %p26, 0, %s25
    %s28 = sadd.s32 1, %s19
    %s29 = scalar_select %p26, %s28, %s19
    %p30 = scmp.ge.s32.totalorder %s29, 2
    %s31 = scalar_select %p30, 0, %s29
    %s32 = ssub.s32 %s19, %s31
    %s33 = ssub.s32 %s20, %s27
    %s34 = sor.u32 %s32, %s33
    %p35 = scmp.eq.s32.totalorder %s34, 0
    %s37 = sadd.s32 %s36, 1
    %s38 = scalar_select %p35, %s36, %s37
    %p41 = pneg %p35
    %p42 = scmp.eq.s32.totalorder %s12, 3
    %p43 = por %p41, %p42
    %p44 = scmp.ne.s32.totalorder %s36, %s39
    %p45 = scmp.eq.s32.totalorder %s12, 0
    %p46 = por %p44, %p45
    %p47 = scmp.ne.s32.totalorder %s36, %s39
    %p48 = scmp.eq.s32.totalorder %s17, 3
    %p49 = por %p47, %p48
    %p50 = scmp.ne.s32.totalorder %s39, %s40
    %p51 = scmp.eq.s32.totalorder %s17, 0
    %p52 = por %p50, %p51
    %p53 = scmp.ne.s32.totalorder %s39, %s40
    %p54 = scmp.eq.s32.totalorder %s18, 3
    %p55 = por %p53, %p54
    %p57 = scmp.ne.s32.totalorder %s40, %s56
    %p58 = scmp.eq.s32.totalorder %s18, 0
    %p59 = por %p57, %p58
    %s60 = smul.u32 %s20, 8
    %s61 = ssub.s32 %s60, 1
    %p62 = scmp.gt.s32.totalorder %s61, 0
    %s63 = scalar_select %p62, %s61, 0
    %s64 = smul.u32 %s27, 8
    %s65 = ssub.s32 %s64, 1
    %p66 = scmp.gt.s32.totalorder %s65, 0
    %s67 = scalar_select %p66, %s65, 0
    %s68 = ssub.s32 %s19, %s31
    %s69 = ssub.s32 %s63, %s67
    %s70 = sor.u32 %s68, %s69
    %p71 = scmp.eq.s32.totalorder %s70, 0
    %s73 = sadd.s32 %s72, 1
    %s74 = scalar_select %p71, %s72, %s73
    %p77 = pneg %p71
    %p78 = scmp.eq.s32.totalorder %s12, 3
    %p79 = por %p77, %p78
    %p80 = scmp.ne.s32.totalorder %s72, %s75
    %p81 = scmp.eq.s32.totalorder %s12, 0
    %p82 = por %p80, %p81
    %p83 = scmp.ne.s32.totalorder %s72, %s75
    %p84 = scmp.eq.s32.totalorder %s17, 3
    %p85 = por %p83, %p84
    %p86 = scmp.ne.s32.totalorder %s75, %s76
    %p87 = scmp.eq.s32.totalorder %s17, 0
    %p88 = por %p86, %p87
    %p89 = scmp.ne.s32.totalorder %s75, %s76
    %p90 = scmp.eq.s32.totalorder %s18, 3
    %p91 = por %p89, %p90
    %p93 = scmp.ne.s32.totalorder %s76, %s92
    %p94 = scmp.eq.s32.totalorder %s18, 0
    %p95 = por %p93, %p94
    %s96 = smul.u32 %s20, 8
    %s97 = sadd.s32 %s96, 8
    %p98 = scmp.lt.s32.totalorder %s97, 15
    %s99 = scalar_select %p98, %s97, 15
    %s100 = smul.u32 %s27, 8
    %s101 = sadd.s32 %s100, 8
    %p102 = scmp.lt.s32.totalorder %s101, 15
    %s103 = scalar_select %p102, %s101, 15
    %s104 = ssub.s32 %s19, %s31
    %s105 = ssub.s32 %s99, %s103
    %s106 = sor.u32 %s104, %s105
    %p107 = scmp.eq.s32.totalorder %s106, 0
    %s109 = sadd.s32 %s108, 1
    %s110 = scalar_select %p107, %s108, %s109
    %p113 = pneg %p107
    %p114 = scmp.eq.s32.totalorder %s12, 3
    %p115 = por %p113, %p114
    %p116 = scmp.ne.s32.totalorder %s108, %s111
    %p117 = scmp.eq.s32.totalorder %s12, 0
    %p118 = por %p116, %p117
    %p119 = scmp.ne.s32.totalorder %s108, %s111
    %p120 = scmp.eq.s32.totalorder %s17, 3
    %p121 = por %p119, %p120
    %p122 = scmp.ne.s32.totalorder %s111, %s112
    %p123 = scmp.eq.s32.totalorder %s17, 0
    %p124 = por %p122, %p123
    %p125 = scmp.ne.s32.totalorder %s111, %s112
    %p126 = scmp.eq.s32.totalorder %s18, 3
    %p127 = por %p125, %p126
    %p129 = scmp.ne.s32.totalorder %s112, %s128
    %p130 = scmp.eq.s32.totalorder %s18, 0
    %p131 = por %p129, %p130
    %s133 = sadd.s32 %s132, 1
    %p136 = scmp.eq.s32.totalorder %s12, 3
    %p137 = scmp.ne.s32.totalorder %s132, %s134
    %p138 = scmp.eq.s32.totalorder %s12, 0
    %p139 = por %p137, %p138
    %p140 = scmp.ne.s32.totalorder %s132, %s134
    %p141 = scmp.eq.s32.totalorder %s17, 3
    %p142 = por %p140, %p141
    %p143 = scmp.ne.s32.totalorder %s134, %s135
    %p144 = scmp.eq.s32.totalorder %s17, 0
    %p145 = por %p143, %p144
    %p146 = scmp.ne.s32.totalorder %s134, %s135
    %p147 = scmp.eq.s32.totalorder %s18, 3
    %p148 = por %p146, %p147
    %p150 = scmp.ne.s32.totalorder %s135, %s149
    %p151 = scmp.eq.s32.totalorder %s18, 0
    %p152 = por %p150, %p151
    %s153 = ssub.s32 %s19, %s31
    %s154 = ssub.s32 %s20, %s27
    %s155 = sor.u32 %s153, %s154
    %p156 = scmp.eq.s32.totalorder %s155, 0
    %s158 = sadd.s32 %s157, 1
    %s159 = scalar_select %p156, %s157, %s158
    %p162 = pneg %p156
    %p163 = scmp.eq.s32.totalorder %s12, 3
    %p164 = por %p162, %p163
    %p165 = scmp.ne.s32.totalorder %s157, %s160
    %p166 = scmp.eq.s32.totalorder %s12, 0
    %p167 = por %p165, %p166
    %p168 = scmp.ne.s32.totalorder %s157, %s160
    %p169 = scmp.eq.s32.totalorder %s17, 3
    %p170 = por %p168, %p169
    %p171 = scmp.ne.s32.totalorder %s160, %s161
    %p172 = scmp.eq.s32.totalorder %s17, 0
    %p173 = por %p171, %p172
    %p174 = scmp.ne.s32.totalorder %s160, %s161
    %p175 = scmp.eq.s32.totalorder %s18, 3
    %p176 = por %p174, %p175
    %p178 = scmp.ne.s32.totalorder %s161, %s177
    %p179 = scmp.eq.s32.totalorder %s18, 0
    %p180 = por %p178, %p179
    %s181 = ssub.s32 %s19, %s31
    %s182 = ssub.s32 %s20, %s27
    %s183 = sor.u32 %s181, %s182
    %p184 = scmp.eq.s32.totalorder %s183, 0
    %s186 = sadd.s32 %s185, 1
    %s187 = scalar_select %p184, %s185, %s186
    %p190 = pneg %p184
    %p191 = scmp.eq.s32.totalorder %s12, 3
    %p192 = por %p190, %p191
    %p193 = scmp.ne.s32.totalorder %s185, %s188
    %p194 = scmp.eq.s32.totalorder %s12, 0
    %p195 = por %p193, %p194
    %p196 = scmp.ne.s32.totalorder %s185, %s188
    %p197 = scmp.eq.s32.totalorder %s17, 3
    %p198 = por %p196, %p197
    %p199 = scmp.ne.s32.totalorder %s188, %s189
    %p200 = scmp.eq.s32.totalorder %s17, 0
    %p201 = por %p199, %p200
    %p202 = scmp.ne.s32.totalorder %s188, %s189
    %p203 = scmp.eq.s32.totalorder %s18, 3
    %p204 = por %p202, %p203
    %p206 = scmp.ne.s32.totalorder %s189, %s205
    %p207 = scmp.eq.s32.totalorder %s18, 0
    %p208 = por %p206, %p207
    %p209 = scmp.le.s32.totalorder 1, %s12
    %p210 = scmp.lt.s32.totalorder %s12, 5
    %p211 = pnand %p209, %p210
    %p212 = pneg %p211
    // Predicated region
    $region9: #{inconv_forward.3} parent=5 // pred_check
      _
    $region10: #{inconv_forward.3} parent=5 // pred_check_branch
      %214 = sbr.rel (%p211) target = $region12
    $region11: #{inconv_forward.3} parent=5 // pred_region
      %s215 = ssub.s32 %s12, 1
      // Predicated region
      $region13: #{inconv_forward.3} parent=11 // pred_check
        %p216 = pneg %p145
      $region14: #{inconv_forward.3} parent=11 // pred_check_branch
        %218 = sbr.rel (%p216) target = $region16
      $region15: #{inconv_forward.3} parent=11 // pred_region
        _
      $region16: #{inconv_forward.3} parent=11 // pred_fallthru
        _
    $region12: #{inconv_forward.3} parent=5 // pred_fallthru
      _
    %p219 = scmp.lt.s32.totalorder %s12, 4
    // Predicated region
    $region17: #{inconv_forward.3} parent=5 // pred_check
      %p220 = pneg %p219
    $region18: #{inconv_forward.3} parent=5 // pred_check_branch
      %222 = sbr.rel (%p220) target = $region20
    $region19: #{inconv_forward.3} parent=5 // pred_region
      // Predicated region
      $region21: #{inconv_forward.3} parent=19 // pred_check
        %p223 = pneg %p46
      $region22: #{inconv_forward.3} parent=19 // pred_check_branch
        %225 = sbr.rel (%p223) target = $region24
      $region23: #{inconv_forward.3} parent=19 // pred_region
        %s226 = smul.u32 8, %s20
        %p227 = scmp.lt.s32.totalorder %s19, 1
        %s228 = scalar_select %p227, %s19, 1
        %p229 = scmp.lt.s32.totalorder %s226, 15
        %s230 = scalar_select %p229, %s226, 15
        %s231 = smul.addr %s230, 2
        %s232 = smul.addr %s228, 32
        %s233 = sadd.s32 %s231, %s232
        %s234 = smul.addr %s233, 4
        %s235 = scalar_lea.vmem %s0, %s234
        %s236 = smul.u32 8, %s20
      $region24: #{inconv_forward.3} parent=19 // pred_fallthru
        _
      // Predicated region
      $region25: #{inconv_forward.3} parent=19 // pred_check
        %p237 = pneg %p82
      $region26: #{inconv_forward.3} parent=19 // pred_check_branch
        %239 = sbr.rel (%p237) target = $region28
      $region27: #{inconv_forward.3} parent=19 // pred_region
        %s240 = smul.u32 %s20, 8
        %s241 = ssub.s32 %s240, 1
        %p242 = scmp.gt.s32.totalorder %s241, 0
        %s243 = scalar_select %p242, %s241, 0
        %p244 = scmp.lt.s32.totalorder %s19, 1
        %s245 = scalar_select %p244, %s19, 1
        %p246 = scmp.lt.s32.totalorder %s243, 15
        %s247 = scalar_select %p246, %s243, 15
        %s248 = smul.addr %s247, 2
        %s249 = smul.addr %s245, 32
        %s250 = sadd.s32 %s248, %s249
        %s251 = smul.addr %s250, 4
        %s252 = scalar_lea.vmem %s1, %s251
        %s253 = smul.u32 %s20, 8
        %s254 = ssub.s32 %s253, 1
        %p255 = scmp.gt.s32.totalorder %s254, 0
        %s256 = scalar_select %p255, %s254, 0
      $region28: #{inconv_forward.3} parent=19 // pred_fallthru
        _
      // Predicated region
      $region29: #{inconv_forward.3} parent=19 // pred_check
        %p257 = pneg %p118
      $region30: #{inconv_forward.3} parent=19 // pred_check_branch
        %259 = sbr.rel (%p257) target = $region32
      $region31: #{inconv_forward.3} parent=19 // pred_region
        %s260 = smul.u32 %s20, 8
        %s261 = sadd.s32 %s260, 8
        %p262 = scmp.lt.s32.totalorder %s261, 15
        %s263 = scalar_select %p262, %s261, 15
        %p264 = scmp.lt.s32.totalorder %s19, 1
        %s265 = scalar_select %p264, %s19, 1
        %p266 = scmp.lt.s32.totalorder %s263, 15
        %s267 = scalar_select %p266, %s263, 15
        %s268 = smul.addr %s267, 2
        %s269 = smul.addr %s265, 32
        %s270 = sadd.s32 %s268, %s269
        %s271 = smul.addr %s270, 4
        %s272 = scalar_lea.vmem %s2, %s271
        %s273 = smul.u32 %s20, 8
        %s274 = sadd.s32 %s273, 8
        %p275 = scmp.lt.s32.totalorder %s274, 15
        %s276 = scalar_select %p275, %s274, 15
      $region32: #{inconv_forward.3} parent=19 // pred_fallthru
        _
    $region20: #{inconv_forward.3} parent=5 // pred_fallthru
      _
    %p277 = scmp.le.s32.totalorder 1, %s12
    %p278 = scmp.lt.s32.totalorder %s12, 5
    %p279 = pnand %p277, %p278
    %p280 = pneg %p279
    // Predicated region
    $region33: #{inconv_forward.3} parent=5 // pred_check
      _
    $region34: #{inconv_forward.3} parent=5 // pred_check_branch
      %282 = sbr.rel (%p279) target = $region36
    $region35: #{inconv_forward.3} parent=5 // pred_region
      %s283 = ssub.s32 %s12, 1
      %s284 = smul.u32 8, %s22
      %p285 = scmp.lt.s32.totalorder %s21, 1
      %s286 = scalar_select %p285, %s21, 1
      %p287 = scmp.lt.s32.totalorder %s284, 15
      %s288 = scalar_select %p287, %s284, 15
      %s289 = smul.addr %s288, 2
      %s290 = smul.addr %s286, 32
      %s291 = sadd.s32 %s289, %s290
      %s292 = smul.addr %s291, 4
      %s293 = scalar_lea.vmem %s0, %s292
      %p294 = pneg %p52
      %p295 = pneg %p49
      %s296 = smul.u32 %s22, 8
      %s297 = ssub.s32 %s296, 1
      %p298 = scmp.gt.s32.totalorder %s297, 0
      %s299 = scalar_select %p298, %s297, 0
      %p300 = scmp.lt.s32.totalorder %s21, 1
      %s301 = scalar_select %p300, %s21, 1
      %p302 = scmp.lt.s32.totalorder %s299, 15
      %s303 = scalar_select %p302, %s299, 15
      %s304 = smul.addr %s303, 2
      %s305 = smul.addr %s301, 32
      %s306 = sadd.s32 %s304, %s305
      %s307 = smul.addr %s306, 4
      %s308 = scalar_lea.vmem %s1, %s307
      %p309 = pneg %p88
      %p310 = pneg %p85
      %s311 = smul.u32 %s22, 8
      %s312 = sadd.s32 %s311, 8
      %p313 = scmp.lt.s32.totalorder %s312, 15
      %s314 = scalar_select %p313, %s312, 15
      %p315 = scmp.lt.s32.totalorder %s21, 1
      %s316 = scalar_select %p315, %s21, 1
      %p317 = scmp.lt.s32.totalorder %s314, 15
      %s318 = scalar_select %p317, %s314, 15
      %s319 = smul.addr %s318, 2
      %s320 = smul.addr %s316, 32
      %s321 = sadd.s32 %s319, %s320
      %s322 = smul.addr %s321, 4
      %s323 = scalar_lea.vmem %s2, %s322
      %p324 = pneg %p124
      %p325 = pneg %p121
      %p326 = pneg %p145
      %p327 = pneg %p142
      %p328 = pneg %p173
      %p329 = pneg %p170
      %s330 = smul.u32 8, %s22
      %p331 = scmp.lt.s32.totalorder %s21, 1
      %s332 = scalar_select %p331, %s21, 1
      %p333 = scmp.lt.s32.totalorder %s330, 15
      %s334 = scalar_select %p333, %s330, 15
      %s335 = smul.addr %s334, 2
      %s336 = smul.addr %s332, 32
      %s337 = sadd.s32 %s335, %s336
      %s338 = smul.addr %s337, 4
      %s339 = scalar_lea.vmem %s4, %s338
      %p340 = pneg %p201
      %p341 = pneg %p198
      %p342 = scmp.lt.s32.totalorder %s21, 1
      %s343 = scalar_select %p342, %s21, 1
      %p344 = scmp.lt.s32.totalorder %s22, 1
      %s345 = scalar_select %p344, %s22, 1
      %s346 = smul.addr %s343, 2
      %s347 = sadd.s32 %s345, %s346
      %s348 = smul.addr %s347, 8
      %s349 = scalar_lea.vmem %s5, %s348
      %s350 = smul.u32 8, %s22
      %p351 = scmp.lt.s32.totalorder %s21, 1
      %s352 = scalar_select %p351, %s21, 1
      %p353 = scmp.lt.s32.totalorder %s350, 15
      %s354 = scalar_select %p353, %s350, 15
      %s355 = smul.addr %s354, 2
      %s356 = smul.addr %s352, 32
      %s357 = sadd.s32 %s355, %s356
      %s358 = smul.addr %s357, 4
      %s359 = scalar_lea.vmem %s0, %s358
      %s360 = smul.u32 8, %s22
      %s361 = smul.u32 %s22, 8
      %s362 = ssub.s32 %s361, 1
      %p363 = scmp.gt.s32.totalorder %s362, 0
      %s364 = scalar_select %p363, %s362, 0
      %p365 = scmp.lt.s32.totalorder %s21, 1
      %s366 = scalar_select %p365, %s21, 1
      %p367 = scmp.lt.s32.totalorder %s364, 15
      %s368 = scalar_select %p367, %s364, 15
      %s369 = smul.addr %s368, 2
      %s370 = smul.addr %s366, 32
      %s371 = sadd.s32 %s369, %s370
      %s372 = smul.addr %s371, 4
      %s373 = scalar_lea.vmem %s1, %s372
      %s374 = smul.u32 %s22, 8
      %s375 = ssub.s32 %s374, 1
      %p376 = scmp.gt.s32.totalorder %s375, 0
      %s377 = scalar_select %p376, %s375, 0
      %s378 = smul.u32 %s22, 8
      %s379 = sadd.s32 %s378, 8
      %p380 = scmp.lt.s32.totalorder %s379, 15
      %s381 = scalar_select %p380, %s379, 15
      %p382 = scmp.lt.s32.totalorder %s21, 1
      %s383 = scalar_select %p382, %s21, 1
      %p384 = scmp.lt.s32.totalorder %s381, 15
      %s385 = scalar_select %p384, %s381, 15
      %s386 = smul.addr %s385, 2
      %s387 = smul.addr %s383, 32
      %s388 = sadd.s32 %s386, %s387
      %s389 = smul.addr %s388, 4
      %s390 = scalar_lea.vmem %s2, %s389
      %s391 = smul.u32 %s22, 8
      %s392 = sadd.s32 %s391, 8
      %p393 = scmp.lt.s32.totalorder %s392, 15
      %s394 = scalar_select %p393, %s392, 15
      %s395 = smul.u32 8, %s22
      %p396 = scmp.lt.s32.totalorder %s21, 1
      %s397 = scalar_select %p396, %s21, 1
      %p398 = scmp.lt.s32.totalorder %s395, 15
      %s399 = scalar_select %p398, %s395, 15
      %s400 = smul.addr %s399, 2
      %s401 = smul.addr %s397, 32
      %s402 = sadd.s32 %s400, %s401
      %s403 = smul.addr %s402, 4
      %s404 = scalar_lea.vmem %s4, %s403
      %s405 = smul.u32 8, %s22
      %p406 = scmp.lt.s32.totalorder %s21, 1
      %s407 = scalar_select %p406, %s21, 1
      %p408 = scmp.lt.s32.totalorder %s22, 1
      %s409 = scalar_select %p408, %s22, 1
      %s410 = smul.addr %s407, 2
      %s411 = sadd.s32 %s409, %s410
      %s412 = smul.addr %s411, 8
      %s413 = scalar_lea.vmem %s5, %s412
      %v415 = vld [vmem:[%s373] sm:$0xf]
      %v416 = vld [vmem:[%s373 + $0x4] sm:$0xf]
      %p417 = scmp.eq.s32.totalorder %s22, 0
      %s418 = scalar_select %p417, 1, 0
      %v419 = vstv %s418
      %vm420 = vcmp.eq.s32.totalorder %v419, 1
      %v421 = vsel %vm420, 0, %v415
      %v422 = vsel %vm420, 0, %v416
      %v423 = vld [vmem:[%s390] sm:$0xf]
      %v424 = vld [vmem:[%s390 + $0x4] sm:$0xf]
      %p425 = scmp.eq.s32.totalorder %s22, 1
      %s426 = scalar_select %p425, 1, 0
      %v427 = vstv %s426
      %vm428 = vcmp.eq.s32.totalorder %v427, 1
      %v429 = vsel %vm428, 0, %v423
      %v430 = vsel %vm428, 0, %v424
      %v431 = vld [vmem:[%s359] sm:$0xf]
      %v432 = vld [vmem:[%s359 + $0x4] sm:$0xf]
      %v433 = vld [vmem:[%s359 + $0x8] sm:$0xf]
      %v434 = vld [vmem:[%s359 + $0xc] sm:$0xf]
      %v435 = vld [vmem:[%s359 + $0x10] sm:$0xf]
      %v436 = vld [vmem:[%s359 + $0x14] sm:$0xf]
      %v437 = vld [vmem:[%s359 + $0x18] sm:$0xf]
      %v438 = vld [vmem:[%s359 + $0x1c] sm:$0xf]
      %v439 = vld [vmem:[%s359 + $0x20] sm:$0xf]
      %v440 = vld [vmem:[%s359 + $0x24] sm:$0xf]
      %v441 = vld [vmem:[%s359 + $0x28] sm:$0xf]
      %v442 = vld [vmem:[%s359 + $0x2c] sm:$0xf]
      %v443 = vld [vmem:[%s359 + $0x30] sm:$0xf]
      %v444 = vld [vmem:[%s359 + $0x34] sm:$0xf]
      %v445 = vld [vmem:[%s359 + $0x38] sm:$0xf]
      %v446 = vld [vmem:[%s359 + $0x3c] sm:$0xf]
      %vm447 = vcmask 24576
      %vm448 = vsmask.f32 256
      %vm449 = vmand %vm447, %vm448
      %v450 = vld [vmem:[#allocation2] sm:$0x1]
      %v451 = vsel %vm449, 0, %v450
      %452 = vst [vmem:[#allocation2] sm:$0x1] %v451
      %v453 = vld [vmem:[#allocation2 + $0xc] sm:$0x1]
      %v454 = vsel %vm449, 0, %v453
      %455 = vst [vmem:[#allocation2 + $0xc] sm:$0x1] %v454
      %v456 = vld [vmem:[#allocation2 + $0x18] sm:$0x1]
      %v457 = vsel %vm449, 0, %v456
      %458 = vst [vmem:[#allocation2 + $0x18] sm:$0x1] %v457
      %v459 = vld [vmem:[#allocation2 + $0x24] sm:$0x1]
      %v460 = vsel %vm449, 0, %v459
      %461 = vst [vmem:[#allocation2 + $0x24] sm:$0x1] %v460
      %v462 = vld [vmem:[#allocation2 + $0x30] sm:$0x1]
      %v463 = vsel %vm449, 0, %v462
      %464 = vst [vmem:[#allocation2 + $0x30] sm:$0x1] %v463
      %v465 = vld [vmem:[#allocation2 + $0x3c] sm:$0x1]
      %v466 = vsel %vm449, 0, %v465
      %467 = vst [vmem:[#allocation2 + $0x3c] sm:$0x1] %v466
      %v468 = vld [vmem:[#allocation2 + $0x48] sm:$0x1]
      %v469 = vsel %vm449, 0, %v468
      %470 = vst [vmem:[#allocation2 + $0x48] sm:$0x1] %v469
      %v471 = vld [vmem:[#allocation2 + $0x54] sm:$0x1]
      %v472 = vsel %vm449, 0, %v471
      %473 = vst [vmem:[#allocation2 + $0x54] sm:$0x1] %v472
      %v474 = vld [vmem:[#allocation2 + $0x60] sm:$0x1]
      %v475 = vsel %vm449, 0, %v474
      %476 = vst [vmem:[#allocation2 + $0x60] sm:$0x1] %v475
      %v477 = vld [vmem:[#allocation2 + $0x6c] sm:$0x1]
      %v478 = vsel %vm449, 0, %v477
      %479 = vst [vmem:[#allocation2 + $0x6c] sm:$0x1] %v478
      %vm480 = vsmask.f32 7938
      %vm481 = vmand %vm447, %vm480
      %v482 = vld [vmem:[#allocation2 + $0x8] sm:$0x1]
      %v483 = vsel %vm481, 0, %v482
      %484 = vst [vmem:[#allocation2 + $0x8] sm:$0x1] %v483
      %v485 = vld [vmem:[#allocation2 + $0x14] sm:$0x1]
      %v486 = vsel %vm481, 0, %v485
      %487 = vst [vmem:[#allocation2 + $0x14] sm:$0x1] %v486
      %v488 = vld [vmem:[#allocation2 + $0x20] sm:$0x1]
      %v489 = vsel %vm481, 0, %v488
      %490 = vst [vmem:[#allocation2 + $0x20] sm:$0x1] %v489
      %v491 = vld [vmem:[#allocation2 + $0x2c] sm:$0x1]
      %v492 = vsel %vm481, 0, %v491
      %493 = vst [vmem:[#allocation2 + $0x2c] sm:$0x1] %v492
      %v494 = vld [vmem:[#allocation2 + $0x38] sm:$0x1]
      %v495 = vsel %vm481, 0, %v494
      %496 = vst [vmem:[#allocation2 + $0x38] sm:$0x1] %v495
      %v497 = vld [vmem:[#allocation2 + $0x44] sm:$0x1]
      %v498 = vsel %vm481, 0, %v497
      %499 = vst [vmem:[#allocation2 + $0x44] sm:$0x1] %v498
      %v500 = vld [vmem:[#allocation2 + $0x50] sm:$0x1]
      %v501 = vsel %vm481, 0, %v500
      %502 = vst [vmem:[#allocation2 + $0x50] sm:$0x1] %v501
      %v503 = vld [vmem:[#allocation2 + $0x5c] sm:$0x1]
      %v504 = vsel %vm481, 0, %v503
      %505 = vst [vmem:[#allocation2 + $0x5c] sm:$0x1] %v504
      %v506 = vld [vmem:[#allocation2 + $0x68] sm:$0x1]
      %v507 = vsel %vm481, 0, %v506
      %508 = vst [vmem:[#allocation2 + $0x68] sm:$0x1] %v507
      %v509 = vld [vmem:[#allocation2 + $0x74] sm:$0x1]
      %v510 = vsel %vm481, 0, %v509
      %511 = vst [vmem:[#allocation2 + $0x74] sm:$0x1] %v510
      %vm512 = vsmask.f32 4368
      %vm513 = vmor %vm448, %vm512
      %v515 = vshrl.u32 %v421, 16
      %v517 = vrot.slane %v515, 7
      %v518 = vshll.u32 %v421, 16
      %v520 = vor.u32 %v517, %v518
      %v521 = vrot.slane %v517, 4
      %v523 = vshrl.u32 %v422, 16
      %v525 = vrot.slane %v523, 7
      %v526 = vshll.u32 %v422, 16
      %v528 = vor.u32 %v525, %v526
      %v529 = vsel %vm513, %v521, %v528
      %v530 = vrot.slane %v525, 4
      %vm534 = vcmask 27648
      %vm535 = vmand %vm534, %vm480
      %v536 = vld [vmem:[#allocation2] sm:$0xf]
      %v537 = vsel %vm535, %v520, %v536
      %538 = vst [vmem:[#allocation2] sm:$0xf] %v537
      %vm539 = vcmask 27648
      %540 = vst.msk [vmem:[#allocation2 + $0x4] sm:$0xf] %vm539, %v529
      %v541 = vld [vmem:[#allocation2 + $0x8] sm:$0x1]
      %v542 = vsel %vm449, %v530, %v541
      %543 = vst [vmem:[#allocation2 + $0x8] sm:$0x1] %v542
      %v545 = vshrl.u32 %v431, 16
      %v547 = vrot.slane %v545, 7
      %v548 = vshll.u32 %v431, 16
      %v550 = vor.u32 %v547, %v548
      %v551 = vrot.slane %v547, 4
      %v553 = vshrl.u32 %v432, 16
      %v555 = vrot.slane %v553, 7
      %v556 = vshll.u32 %v432, 16
      %v558 = vor.u32 %v555, %v556
      %v559 = vsel %vm513, %v551, %v558
      %v560 = vrot.slane %v555, 4
      %v562 = vshrl.u32 %v433, 16
      %v564 = vrot.slane %v562, 7
      %v565 = vshll.u32 %v433, 16
      %v567 = vor.u32 %v564, %v565
      %v568 = vrot.slane %v564, 4
      %v570 = vshrl.u32 %v434, 16
      %v572 = vrot.slane %v570, 7
      %v573 = vshll.u32 %v434, 16
      %v575 = vor.u32 %v572, %v573
      %v576 = vsel %vm513, %v568, %v575
      %v577 = vrot.slane %v572, 4
      %v579 = vshrl.u32 %v435, 16
      %v581 = vrot.slane %v579, 7
      %v582 = vshll.u32 %v435, 16
      %v584 = vor.u32 %v581, %v582
      %v585 = vrot.slane %v581, 4
      %v587 = vshrl.u32 %v436, 16
      %v589 = vrot.slane %v587, 7
      %v590 = vshll.u32 %v436, 16
      %v592 = vor.u32 %v589, %v590
      %v593 = vsel %vm513, %v585, %v592
      %v594 = vrot.slane %v589, 4
      %v596 = vshrl.u32 %v437, 16
      %v598 = vrot.slane %v596, 7
      %v599 = vshll.u32 %v437, 16
      %v601 = vor.u32 %v598, %v599
      %v602 = vrot.slane %v598, 4
      %v604 = vshrl.u32 %v438, 16
      %v606 = vrot.slane %v604, 7
      %v607 = vshll.u32 %v438, 16
      %v609 = vor.u32 %v606, %v607
      %v610 = vsel %vm513, %v602, %v609
      %v611 = vrot.slane %v606, 4
      %v613 = vshrl.u32 %v439, 16
      %v615 = vrot.slane %v613, 7
      %v616 = vshll.u32 %v439, 16
      %v618 = vor.u32 %v615, %v616
      %v619 = vrot.slane %v615, 4
      %v621 = vshrl.u32 %v440, 16
      %v623 = vrot.slane %v621, 7
      %v624 = vshll.u32 %v440, 16
      %v626 = vor.u32 %v623, %v624
      %v627 = vsel %vm513, %v619, %v626
      %v628 = vrot.slane %v623, 4
      %v630 = vshrl.u32 %v441, 16
      %v632 = vrot.slane %v630, 7
      %v633 = vshll.u32 %v441, 16
      %v635 = vor.u32 %v632, %v633
      %v636 = vrot.slane %v632, 4
      %v638 = vshrl.u32 %v442, 16
      %v640 = vrot.slane %v638, 7
      %v641 = vshll.u32 %v442, 16
      %v643 = vor.u32 %v640, %v641
      %v644 = vsel %vm513, %v636, %v643
      %v645 = vrot.slane %v640, 4
      %v647 = vshrl.u32 %v443, 16
      %v649 = vrot.slane %v647, 7
      %v650 = vshll.u32 %v443, 16
      %v652 = vor.u32 %v649, %v650
      %v653 = vrot.slane %v649, 4
      %v655 = vshrl.u32 %v444, 16
      %v657 = vrot.slane %v655, 7
      %v658 = vshll.u32 %v444, 16
      %v660 = vor.u32 %v657, %v658
      %v661 = vsel %vm513, %v653, %v660
      %v662 = vrot.slane %v657, 4
      %v664 = vshrl.u32 %v445, 16
      %v666 = vrot.slane %v664, 7
      %v667 = vshll.u32 %v445, 16
      %v669 = vor.u32 %v666, %v667
      %v670 = vrot.slane %v666, 4
      %v672 = vshrl.u32 %v446, 16
      %v674 = vrot.slane %v672, 7
      %v675 = vshll.u32 %v446, 16
      %v677 = vor.u32 %v674, %v675
      %v678 = vsel %vm513, %v670, %v677
      %v679 = vrot.slane %v674, 4
      %s704 = scalar_lea.vmem [#allocation2], 12
      %v705 = vld [vmem:[%s704] sm:$0xf]
      %v706 = vsel %vm535, %v550, %v705
      %707 = vst [vmem:[%s704] sm:$0xf] %v706
      %708 = vst.msk [vmem:[%s704 + $0x4] sm:$0xf] %vm539, %v559
      %v709 = vld [vmem:[%s704 + $0x8] sm:$0x1]
      %v710 = vsel %vm449, %v560, %v709
      %711 = vst [vmem:[%s704 + $0x8] sm:$0x1] %v710
      %v712 = vld [vmem:[%s704 + $0xc] sm:$0xf]
      %v713 = vsel %vm535, %v567, %v712
      %714 = vst [vmem:[%s704 + $0xc] sm:$0xf] %v713
      %715 = vst.msk [vmem:[%s704 + $0x10] sm:$0xf] %vm539, %v576
      %v716 = vld [vmem:[%s704 + $0x14] sm:$0x1]
      %v717 = vsel %vm449, %v577, %v716
      %718 = vst [vmem:[%s704 + $0x14] sm:$0x1] %v717
      %v719 = vld [vmem:[%s704 + $0x18] sm:$0xf]
      %v720 = vsel %vm535, %v584, %v719
      %721 = vst [vmem:[%s704 + $0x18] sm:$0xf] %v720
      %722 = vst.msk [vmem:[%s704 + $0x1c] sm:$0xf] %vm539, %v593
      %v723 = vld [vmem:[%s704 + $0x20] sm:$0x1]
      %v724 = vsel %vm449, %v594, %v723
      %725 = vst [vmem:[%s704 + $0x20] sm:$0x1] %v724
      %v726 = vld [vmem:[%s704 + $0x24] sm:$0xf]
      %v727 = vsel %vm535, %v601, %v726
      %728 = vst [vmem:[%s704 + $0x24] sm:$0xf] %v727
      %729 = vst.msk [vmem:[%s704 + $0x28] sm:$0xf] %vm539, %v610
      %v730 = vld [vmem:[%s704 + $0x2c] sm:$0x1]
      %v731 = vsel %vm449, %v611, %v730
      %732 = vst [vmem:[%s704 + $0x2c] sm:$0x1] %v731
      %v733 = vld [vmem:[%s704 + $0x30] sm:$0xf]
      %v734 = vsel %vm535, %v618, %v733
      %735 = vst [vmem:[%s704 + $0x30] sm:$0xf] %v734
      %736 = vst.msk [vmem:[%s704 + $0x34] sm:$0xf] %vm539, %v627
      %v737 = vld [vmem:[%s704 + $0x38] sm:$0x1]
      %v738 = vsel %vm449, %v628, %v737
      %739 = vst [vmem:[%s704 + $0x38] sm:$0x1] %v738
      %v740 = vld [vmem:[%s704 + $0x3c] sm:$0xf]
      %v741 = vsel %vm535, %v635, %v740
      %742 = vst [vmem:[%s704 + $0x3c] sm:$0xf] %v741
      %743 = vst.msk [vmem:[%s704 + $0x40] sm:$0xf] %vm539, %v644
      %v744 = vld [vmem:[%s704 + $0x44] sm:$0x1]
      %v745 = vsel %vm449, %v645, %v744
      %746 = vst [vmem:[%s704 + $0x44] sm:$0x1] %v745
      %v747 = vld [vmem:[%s704 + $0x48] sm:$0xf]
      %v748 = vsel %vm535, %v652, %v747
      %749 = vst [vmem:[%s704 + $0x48] sm:$0xf] %v748
      %750 = vst.msk [vmem:[%s704 + $0x4c] sm:$0xf] %vm539, %v661
      %v751 = vld [vmem:[%s704 + $0x50] sm:$0x1]
      %v752 = vsel %vm449, %v662, %v751
      %753 = vst [vmem:[%s704 + $0x50] sm:$0x1] %v752
      %v754 = vld [vmem:[%s704 + $0x54] sm:$0xf]
      %v755 = vsel %vm535, %v669, %v754
      %756 = vst [vmem:[%s704 + $0x54] sm:$0xf] %v755
      %757 = vst.msk [vmem:[%s704 + $0x58] sm:$0xf] %vm539, %v678
      %v758 = vld [vmem:[%s704 + $0x5c] sm:$0x1]
      %v759 = vsel %vm449, %v679, %v758
      %760 = vst [vmem:[%s704 + $0x5c] sm:$0x1] %v759
      %v762 = vshrl.u32 %v429, 16
      %v764 = vrot.slane %v762, 7
      %v765 = vshll.u32 %v429, 16
      %v767 = vor.u32 %v764, %v765
      %v768 = vrot.slane %v764, 4
      %v770 = vshrl.u32 %v430, 16
      %v772 = vrot.slane %v770, 7
      %v773 = vshll.u32 %v430, 16
      %v775 = vor.u32 %v772, %v773
      %v776 = vsel %vm513, %v768, %v775
      %v777 = vrot.slane %v772, 4
      %s781 = scalar_lea.vmem [#allocation2], 108
      %v782 = vld [vmem:[%s781] sm:$0xf]
      %v783 = vsel %vm535, %v767, %v782
      %784 = vst [vmem:[%s781] sm:$0xf] %v783
      %785 = vst.msk [vmem:[%s781 + $0x4] sm:$0xf] %vm539, %v776
      %v786 = vld [vmem:[%s781 + $0x8] sm:$0x1]
      %v787 = vsel %vm449, %v777, %v786
      %788 = vst [vmem:[%s781 + $0x8] sm:$0x1] %v787
      %v789 = vld [vmem:[#allocation2] sm:$0xf]
      %v790 = vld [vmem:[#allocation2 + $0x4] sm:$0xf]
      %v791 = vld [vmem:[#allocation2 + $0x8] sm:$0x1]
      %v792 = vld [vmem:[#allocation2 + $0xc] sm:$0xf]
      %v793 = vld [vmem:[#allocation2 + $0x10] sm:$0xf]
      %v794 = vld [vmem:[#allocation2 + $0x14] sm:$0x1]
      %v795 = vld [vmem:[#allocation2 + $0x18] sm:$0xf]
      %v796 = vld [vmem:[#allocation2 + $0x1c] sm:$0xf]
      %v797 = vld [vmem:[#allocation2 + $0x20] sm:$0x1]
      %v798 = vld [vmem:[#allocation2 + $0x24] sm:$0xf]
      %v799 = vld [vmem:[#allocation2 + $0x28] sm:$0xf]
      %v800 = vld [vmem:[#allocation2 + $0x2c] sm:$0x1]
      %v801 = vld [vmem:[#allocation2 + $0x30] sm:$0xf]
      %v802 = vld [vmem:[#allocation2 + $0x34] sm:$0xf]
      %v803 = vld [vmem:[#allocation2 + $0x38] sm:$0x1]
      %v804 = vld [vmem:[#allocation2 + $0x3c] sm:$0xf]
      %v805 = vld [vmem:[#allocation2 + $0x40] sm:$0xf]
      %v806 = vld [vmem:[#allocation2 + $0x44] sm:$0x1]
      %v807 = vld [vmem:[#allocation2 + $0x48] sm:$0xf]
      %v808 = vld [vmem:[#allocation2 + $0x4c] sm:$0xf]
      %v809 = vld [vmem:[#allocation2 + $0x50] sm:$0x1]
      %v810 = vld [vmem:[#allocation2 + $0x54] sm:$0xf]
      %v811 = vld [vmem:[#allocation2 + $0x58] sm:$0xf]
      %v812 = vld [vmem:[#allocation2 + $0x5c] sm:$0x1]
      %v829 = vunpack.c.l.b16 %v789
      %v830 = vunpack.c.l.b16 %v790
      %v831 = vunpack.c.l.b16 %v792
      %v832 = vunpack.c.l.b16 %v793
      %v833 = vunpack.c.l.b16 %v795
      %v834 = vunpack.c.l.b16 %v796
      %v835 = vunpack.c.l.b16 %v798
      %v836 = vunpack.c.l.b16 %v799
      %v837 = vunpack.c.l.b16 %v801
      %v838 = vunpack.c.l.b16 %v802
      %v839 = vunpack.c.l.b16 %v804
      %v840 = vunpack.c.l.b16 %v805
      %v841 = vunpack.c.l.b16 %v807
      %v842 = vunpack.c.l.b16 %v808
      %v843 = vunpack.c.l.b16 %v810
      %v844 = vunpack.c.l.b16 %v811
      %v845 = vpack.c.b16 %v830, %v829
      %v846 = vpack.c.b16 %v832, %v831
      %v847 = vpack.c.b16 %v834, %v833
      %v848 = vpack.c.b16 %v836, %v835
      %v849 = vpack.c.b16 %v838, %v837
      %v850 = vpack.c.b16 %v840, %v839
      %v851 = vpack.c.b16 %v842, %v841
      %v852 = vpack.c.b16 %v844, %v843
      %v861 = vunpack.c.l.b16 %v791
      %v862 = vunpack.c.l.b16 %v794
      %v863 = vunpack.c.l.b16 %v797
      %v864 = vunpack.c.l.b16 %v800
      %v865 = vunpack.c.l.b16 %v803
      %v866 = vunpack.c.l.b16 %v806
      %v867 = vunpack.c.l.b16 %v809
      %v868 = vunpack.c.l.b16 %v812
      %v869 = vpack.c.b16 %v861, %v861
      %v870 = vpack.c.b16 %v862, %v862
      %v871 = vpack.c.b16 %v863, %v863
      %v872 = vpack.c.b16 %v864, %v864
      %v873 = vpack.c.b16 %v865, %v865
      %v874 = vpack.c.b16 %v866, %v866
      %v875 = vpack.c.b16 %v867, %v867
      %v876 = vpack.c.b16 %v868, %v868
      %vm877 = vsmask.f32 7424
      %v879 = vshrl.u32 %v845, 16
      %v881 = vshll.u32 %v845, 16
      %v883 = vrot.slane %v881, 1
      %v884 = vor.u32 %v879, %v883
      %v886 = vshll.u32 %v869, 16
      %v888 = vrot.slane %v886, 1
      %v889 = vsel %vm877, %v884, %v888
      %v891 = vshrl.u32 %v846, 16
      %v893 = vshll.u32 %v846, 16
      %v895 = vrot.slane %v893, 1
      %v896 = vor.u32 %v891, %v895
      %v898 = vshll.u32 %v870, 16
      %v900 = vrot.slane %v898, 1
      %v901 = vsel %vm877, %v896, %v900
      %v903 = vshrl.u32 %v847, 16
      %v905 = vshll.u32 %v847, 16
      %v907 = vrot.slane %v905, 1
      %v908 = vor.u32 %v903, %v907
      %v910 = vshll.u32 %v871, 16
      %v912 = vrot.slane %v910, 1
      %v913 = vsel %vm877, %v908, %v912
      %v915 = vshrl.u32 %v848, 16
      %v917 = vshll.u32 %v848, 16
      %v919 = vrot.slane %v917, 1
      %v920 = vor.u32 %v915, %v919
      %v922 = vshll.u32 %v872, 16
      %v924 = vrot.slane %v922, 1
      %v925 = vsel %vm877, %v920, %v924
      %v927 = vshrl.u32 %v849, 16
      %v929 = vshll.u32 %v849, 16
      %v931 = vrot.slane %v929, 1
      %v932 = vor.u32 %v927, %v931
      %v934 = vshll.u32 %v873, 16
      %v936 = vrot.slane %v934, 1
      %v937 = vsel %vm877, %v932, %v936
      %v939 = vshrl.u32 %v850, 16
      %v941 = vshll.u32 %v850, 16
      %v943 = vrot.slane %v941, 1
      %v944 = vor.u32 %v939, %v943
      %v946 = vshll.u32 %v874, 16
      %v948 = vrot.slane %v946, 1
      %v949 = vsel %vm877, %v944, %v948
      %v951 = vshrl.u32 %v851, 16
      %v953 = vshll.u32 %v851, 16
      %v955 = vrot.slane %v953, 1
      %v956 = vor.u32 %v951, %v955
      %v958 = vshll.u32 %v875, 16
      %v960 = vrot.slane %v958, 1
      %v961 = vsel %vm877, %v956, %v960
      %v963 = vshrl.u32 %v852, 16
      %v965 = vshll.u32 %v852, 16
      %v967 = vrot.slane %v965, 1
      %v968 = vor.u32 %v963, %v967
      %v970 = vshll.u32 %v876, 16
      %v972 = vrot.slane %v970, 1
      %v973 = vsel %vm877, %v968, %v972
      %974 = vrot.lane.b32.xlu0 %v889, 4
      %v975 = vpop.permute.xlu0 %974
      %976 = vrot.lane.b32.xlu0 %v901, 4
      %v977 = vpop.permute.xlu0 %976
      %978 = vrot.lane.b32.xlu0 %v913, 4
      %v979 = vpop.permute.xlu0 %978
      %980 = vrot.lane.b32.xlu0 %v925, 4
      %v981 = vpop.permute.xlu0 %980
      %982 = vrot.lane.b32.xlu0 %v937, 4
      %v983 = vpop.permute.xlu0 %982
      %984 = vrot.lane.b32.xlu0 %v949, 4
      %v985 = vpop.permute.xlu0 %984
      %986 = vrot.lane.b32.xlu0 %v961, 4
      %v987 = vpop.permute.xlu0 %986
      %988 = vrot.lane.b32.xlu0 %v973, 4
      %v989 = vpop.permute.xlu0 %988
      %vm990 = vcmask 1046528
      %v991 = vrot.slane %v845, 1
      %v992 = vrot.slane %v869, 1
      %v993 = vsel %vm990, %v991, %v992
      %v994 = vrot.slane %v846, 1
      %v995 = vrot.slane %v870, 1
      %v996 = vsel %vm990, %v994, %v995
      %v997 = vrot.slane %v847, 1
      %v998 = vrot.slane %v871, 1
      %v999 = vsel %vm990, %v997, %v998
      %v1000 = vrot.slane %v848, 1
      %v1001 = vrot.slane %v872, 1
      %v1002 = vsel %vm990, %v1000, %v1001
      %v1003 = vrot.slane %v849, 1
      %v1004 = vrot.slane %v873, 1
      %v1005 = vsel %vm990, %v1003, %v1004
      %v1006 = vrot.slane %v850, 1
      %v1007 = vrot.slane %v874, 1
      %v1008 = vsel %vm990, %v1006, %v1007
      %v1009 = vrot.slane %v851, 1
      %v1010 = vrot.slane %v875, 1
      %v1011 = vsel %vm990, %v1009, %v1010
      %v1012 = vrot.slane %v852, 1
      %v1013 = vrot.slane %v876, 1
      %v1014 = vsel %vm990, %v1012, %v1013
      %1015 = vrot.lane.b32.xlu0 %v993, 8
      %v1016 = vpop.permute.xlu0 %1015
      %1017 = vrot.lane.b32.xlu0 %v996, 8
      %v1018 = vpop.permute.xlu0 %1017
      %1019 = vrot.lane.b32.xlu0 %v999, 8
      %v1020 = vpop.permute.xlu0 %1019
      %1021 = vrot.lane.b32.xlu0 %v1002, 8
      %v1022 = vpop.permute.xlu0 %1021
      %1023 = vrot.lane.b32.xlu0 %v1005, 8
      %v1024 = vpop.permute.xlu0 %1023
      %1025 = vrot.lane.b32.xlu0 %v1008, 8
      %v1026 = vpop.permute.xlu0 %1025
      %1027 = vrot.lane.b32.xlu0 %v1011, 8
      %v1028 = vpop.permute.xlu0 %1027
      %1029 = vrot.lane.b32.xlu0 %v1014, 8
      %v1030 = vpop.permute.xlu0 %1029
      %vm1031 = vcmask 31744
      %v1033 = vsel %vm1031, %v845, %v975
      %v1035 = vsel %vm1031, %v846, %v977
      %v1037 = vsel %vm1031, %v847, %v979
      %v1039 = vsel %vm1031, %v848, %v981
      %v1041 = vsel %vm1031, %v849, %v983
      %v1043 = vsel %vm1031, %v850, %v985
      %v1045 = vsel %vm1031, %v851, %v987
      %v1047 = vsel %vm1031, %v852, %v989
      %vm1048 = vcmask 64512
      %v1050 = vsel %vm1048, %v1033, %v1016
      %v1052 = vsel %vm1048, %v1035, %v1018
      %v1054 = vsel %vm1048, %v1037, %v1020
      %v1056 = vsel %vm1048, %v1039, %v1022
      %v1058 = vsel %vm1048, %v1041, %v1024
      %v1060 = vsel %vm1048, %v1043, %v1026
      %v1062 = vsel %vm1048, %v1045, %v1028
      %v1064 = vsel %vm1048, %v1047, %v1030
      %v1065 = vld [vmem:[%s3] sm:$0xf]
      %v1066 = vld [vmem:[%s3 + $0x4] sm:$0x3]
      %v1067 = vld [vmem:[%s704] sm:$0xf]
      %v1068 = vld [vmem:[%s704 + $0x4] sm:$0xf]
      %v1069 = vld [vmem:[%s704 + $0x8] sm:$0x1]
      %v1070 = vld [vmem:[%s704 + $0xc] sm:$0xf]
      %v1071 = vld [vmem:[%s704 + $0x10] sm:$0xf]
      %v1072 = vld [vmem:[%s704 + $0x14] sm:$0x1]
      %v1073 = vld [vmem:[%s704 + $0x18] sm:$0xf]
      %v1074 = vld [vmem:[%s704 + $0x1c] sm:$0xf]
      %v1075 = vld [vmem:[%s704 + $0x20] sm:$0x1]
      %v1076 = vld [vmem:[%s704 + $0x24] sm:$0xf]
      %v1077 = vld [vmem:[%s704 + $0x28] sm:$0xf]
      %v1078 = vld [vmem:[%s704 + $0x2c] sm:$0x1]
      %v1079 = vld [vmem:[%s704 + $0x30] sm:$0xf]
      %v1080 = vld [vmem:[%s704 + $0x34] sm:$0xf]
      %v1081 = vld [vmem:[%s704 + $0x38] sm:$0x1]
      %v1082 = vld [vmem:[%s704 + $0x3c] sm:$0xf]
      %v1083 = vld [vmem:[%s704 + $0x40] sm:$0xf]
      %v1084 = vld [vmem:[%s704 + $0x44] sm:$0x1]
      %v1085 = vld [vmem:[%s704 + $0x48] sm:$0xf]
      %v1086 = vld [vmem:[%s704 + $0x4c] sm:$0xf]
      %v1087 = vld [vmem:[%s704 + $0x50] sm:$0x1]
      %v1088 = vld [vmem:[%s704 + $0x54] sm:$0xf]
      %v1089 = vld [vmem:[%s704 + $0x58] sm:$0xf]
      %v1090 = vld [vmem:[%s704 + $0x5c] sm:$0x1]
      %v1107 = vunpack.c.l.b16 %v1067
      %v1108 = vunpack.c.l.b16 %v1068
      %v1109 = vunpack.c.l.b16 %v1070
      %v1110 = vunpack.c.l.b16 %v1071
      %v1111 = vunpack.c.l.b16 %v1073
      %v1112 = vunpack.c.l.b16 %v1074
      %v1113 = vunpack.c.l.b16 %v1076
      %v1114 = vunpack.c.l.b16 %v1077
      %v1115 = vunpack.c.l.b16 %v1079
      %v1116 = vunpack.c.l.b16 %v1080
      %v1117 = vunpack.c.l.b16 %v1082
      %v1118 = vunpack.c.l.b16 %v1083
      %v1119 = vunpack.c.l.b16 %v1085
      %v1120 = vunpack.c.l.b16 %v1086
      %v1121 = vunpack.c.l.b16 %v1088
      %v1122 = vunpack.c.l.b16 %v1089
      %v1123 = vpack.c.b16 %v1108, %v1107
      %v1124 = vpack.c.b16 %v1110, %v1109
      %v1125 = vpack.c.b16 %v1112, %v1111
      %v1126 = vpack.c.b16 %v1114, %v1113
      %v1127 = vpack.c.b16 %v1116, %v1115
      %v1128 = vpack.c.b16 %v1118, %v1117
      %v1129 = vpack.c.b16 %v1120, %v1119
      %v1130 = vpack.c.b16 %v1122, %v1121
      %v1139 = vunpack.c.l.b16 %v1069
      %v1140 = vunpack.c.l.b16 %v1072
      %v1141 = vunpack.c.l.b16 %v1075
      %v1142 = vunpack.c.l.b16 %v1078
      %v1143 = vunpack.c.l.b16 %v1081
      %v1144 = vunpack.c.l.b16 %v1084
      %v1145 = vunpack.c.l.b16 %v1087
      %v1146 = vunpack.c.l.b16 %v1090
      %v1147 = vpack.c.b16 %v1139, %v1139
      %v1148 = vpack.c.b16 %v1140, %v1140
      %v1149 = vpack.c.b16 %v1141, %v1141
      %v1150 = vpack.c.b16 %v1142, %v1142
      %v1151 = vpack.c.b16 %v1143, %v1143
      %v1152 = vpack.c.b16 %v1144, %v1144
      %v1153 = vpack.c.b16 %v1145, %v1145
      %v1154 = vpack.c.b16 %v1146, %v1146
      %v1156 = vshrl.u32 %v1123, 16
      %v1158 = vshll.u32 %v1123, 16
      %v1160 = vrot.slane %v1158, 1
      %v1161 = vor.u32 %v1156, %v1160
      %v1163 = vshll.u32 %v1147, 16
      %v1165 = vrot.slane %v1163, 1
      %v1166 = vsel %vm877, %v1161, %v1165
      %v1168 = vshrl.u32 %v1124, 16
      %v1170 = vshll.u32 %v1124, 16
      %v1172 = vrot.slane %v1170, 1
      %v1173 = vor.u32 %v1168, %v1172
      %v1175 = vshll.u32 %v1148, 16
      %v1177 = vrot.slane %v1175, 1
      %v1178 = vsel %vm877, %v1173, %v1177
      %v1180 = vshrl.u32 %v1125, 16
      %v1182 = vshll.u32 %v1125, 16
      %v1184 = vrot.slane %v1182, 1
      %v1185 = vor.u32 %v1180, %v1184
      %v1187 = vshll.u32 %v1149, 16
      %v1189 = vrot.slane %v1187, 1
      %v1190 = vsel %vm877, %v1185, %v1189
      %v1192 = vshrl.u32 %v1126, 16
      %v1194 = vshll.u32 %v1126, 16
      %v1196 = vrot.slane %v1194, 1
      %v1197 = vor.u32 %v1192, %v1196
      %v1199 = vshll.u32 %v1150, 16
      %v1201 = vrot.slane %v1199, 1
      %v1202 = vsel %vm877, %v1197, %v1201
      %v1204 = vshrl.u32 %v1127, 16
      %v1206 = vshll.u32 %v1127, 16
      %v1208 = vrot.slane %v1206, 1
      %v1209 = vor.u32 %v1204, %v1208
      %v1211 = vshll.u32 %v1151, 16
      %v1213 = vrot.slane %v1211, 1
      %v1214 = vsel %vm877, %v1209, %v1213
      %v1216 = vshrl.u32 %v1128, 16
      %v1218 = vshll.u32 %v1128, 16
      %v1220 = vrot.slane %v1218, 1
      %v1221 = vor.u32 %v1216, %v1220
      %v1223 = vshll.u32 %v1152, 16
      %v1225 = vrot.slane %v1223, 1
      %v1226 = vsel %vm877, %v1221, %v1225
      %v1228 = vshrl.u32 %v1129, 16
      %v1230 = vshll.u32 %v1129, 16
      %v1232 = vrot.slane %v1230, 1
      %v1233 = vor.u32 %v1228, %v1232
      %v1235 = vshll.u32 %v1153, 16
      %v1237 = vrot.slane %v1235, 1
      %v1238 = vsel %vm877, %v1233, %v1237
      %v1240 = vshrl.u32 %v1130, 16
      %v1242 = vshll.u32 %v1130, 16
      %v1244 = vrot.slane %v1242, 1
      %v1245 = vor.u32 %v1240, %v1244
      %v1247 = vshll.u32 %v1154, 16
      %v1249 = vrot.slane %v1247, 1
      %v1250 = vsel %vm877, %v1245, %v1249
      %1251 = vrot.lane.b32.xlu0 %v1166, 4
      %v1252 = vpop.permute.xlu0 %1251
      %1253 = vrot.lane.b32.xlu0 %v1178, 4
      %v1254 = vpop.permute.xlu0 %1253
      %1255 = vrot.lane.b32.xlu0 %v1190, 4
      %v1256 = vpop.permute.xlu0 %1255
      %1257 = vrot.lane.b32.xlu0 %v1202, 4
      %v1258 = vpop.permute.xlu0 %1257
      %1259 = vrot.lane.b32.xlu0 %v1214, 4
      %v1260 = vpop.permute.xlu0 %1259
      %1261 = vrot.lane.b32.xlu0 %v1226, 4
      %v1262 = vpop.permute.xlu0 %1261
      %1263 = vrot.lane.b32.xlu0 %v1238, 4
      %v1264 = vpop.permute.xlu0 %1263
      %1265 = vrot.lane.b32.xlu0 %v1250, 4
      %v1266 = vpop.permute.xlu0 %1265
      %v1267 = vrot.slane %v1123, 1
      %v1268 = vrot.slane %v1147, 1
      %v1269 = vsel %vm990, %v1267, %v1268
      %v1270 = vrot.slane %v1124, 1
      %v1271 = vrot.slane %v1148, 1
      %v1272 = vsel %vm990, %v1270, %v1271
      %v1273 = vrot.slane %v1125, 1
      %v1274 = vrot.slane %v1149, 1
      %v1275 = vsel %vm990, %v1273, %v1274
      %v1276 = vrot.slane %v1126, 1
      %v1277 = vrot.slane %v1150, 1
      %v1278 = vsel %vm990, %v1276, %v1277
      %v1279 = vrot.slane %v1127, 1
      %v1280 = vrot.slane %v1151, 1
      %v1281 = vsel %vm990, %v1279, %v1280
      %v1282 = vrot.slane %v1128, 1
      %v1283 = vrot.slane %v1152, 1
      %v1284 = vsel %vm990, %v1282, %v1283
      %v1285 = vrot.slane %v1129, 1
      %v1286 = vrot.slane %v1153, 1
      %v1287 = vsel %vm990, %v1285, %v1286
      %v1288 = vrot.slane %v1130, 1
      %v1289 = vrot.slane %v1154, 1
      %v1290 = vsel %vm990, %v1288, %v1289
      %1291 = vrot.lane.b32.xlu0 %v1269, 8
      %v1292 = vpop.permute.xlu0 %1291
      %1293 = vrot.lane.b32.xlu0 %v1272, 8
      %v1294 = vpop.permute.xlu0 %1293
      %1295 = vrot.lane.b32.xlu0 %v1275, 8
      %v1296 = vpop.permute.xlu0 %1295
      %1297 = vrot.lane.b32.xlu0 %v1278, 8
      %v1298 = vpop.permute.xlu0 %1297
      %1299 = vrot.lane.b32.xlu0 %v1281, 8
      %v1300 = vpop.permute.xlu0 %1299
      %1301 = vrot.lane.b32.xlu0 %v1284, 8
      %v1302 = vpop.permute.xlu0 %1301
      %1303 = vrot.lane.b32.xlu0 %v1287, 8
      %v1304 = vpop.permute.xlu0 %1303
      %1305 = vrot.lane.b32.xlu0 %v1290, 8
      %v1306 = vpop.permute.xlu0 %1305
      %v1308 = vsel %vm1031, %v1123, %v1252
      %v1310 = vsel %vm1031, %v1124, %v1254
      %v1312 = vsel %vm1031, %v1125, %v1256
      %v1314 = vsel %vm1031, %v1126, %v1258
      %v1316 = vsel %vm1031, %v1127, %v1260
      %v1318 = vsel %vm1031, %v1128, %v1262
      %v1320 = vsel %vm1031, %v1129, %v1264
      %v1322 = vsel %vm1031, %v1130, %v1266
      %v1324 = vsel %vm1048, %v1308, %v1292
      %v1326 = vsel %vm1048, %v1310, %v1294
      %v1328 = vsel %vm1048, %v1312, %v1296
      %v1330 = vsel %vm1048, %v1314, %v1298
      %v1332 = vsel %vm1048, %v1316, %v1300
      %v1334 = vsel %vm1048, %v1318, %v1302
      %v1336 = vsel %vm1048, %v1320, %v1304
      %v1338 = vsel %vm1048, %v1322, %v1306
      %s1339 = scalar_lea.vmem %s3, 8
      %v1340 = vld [vmem:[%s1339] sm:$0xf]
      %v1341 = vld [vmem:[%s1339 + $0x4] sm:$0x3]
      %v1344 = vunpack.c.l.b16 %v1340
      %v1345 = vunpack.c.l.b16 %v1341
      %v1346 = vpack.c.b16 %v1345, %v1344
      %vm1347 = vcmask 97280
      %v1348 = vsel %vm1347, %v1324, 0
      %v1350 = vsel %vm1347, %v1326, 0
      %v1352 = vsel %vm1347, %v1328, 0
      %v1354 = vsel %vm1347, %v1330, 0
      %v1356 = vsel %vm1347, %v1332, 0
      %v1358 = vsel %vm1347, %v1334, 0
      %v1360 = vsel %vm1347, %v1336, 0
      %v1362 = vsel %vm1347, %v1338, 0
      %vm1364 = vcmask 1045504
      %v1366 = vsel %vm1364, %v1346, 0
      %1368 = vmatpush.bf16.msra.mxu0 0
      %1369 = vmatpush.bf16.msra.mxu0 0
      %1370 = vmatpush.bf16.msra.mxu0 0
      %1371 = vmatpush.bf16.msra.mxu0 0
      %1372 = vmatpush.bf16.msra.mxu0 0
      %1373 = vmatpush.bf16.msra.mxu0 0
      %1374 = vmatpush.bf16.msra.mxu0 0
      %1375 = vmatpush.bf16.msra.mxu0 %v1366
      %1376 = vmatmul.bf16.gmra.mxu0 %v1348
      %v1377 = vpop.f32.mrf.mxu0
      %v1378 = vadd.f32 0.0, %v1377
      %v1379 = vpop.f32.mrf.mxu0
      %v1380 = vadd.f32 0.0, %v1379
      %1381 = vmatmul.bf16.gmra.mxu0 %v1350
      %v1382 = vpop.f32.mrf.mxu0
      %v1383 = vadd.f32 0.0, %v1382
      %v1384 = vpop.f32.mrf.mxu0
      %v1385 = vadd.f32 0.0, %v1384
      %1386 = vmatmul.bf16.gmra.mxu0 %v1352
      %v1387 = vpop.f32.mrf.mxu0
      %v1388 = vadd.f32 0.0, %v1387
      %v1389 = vpop.f32.mrf.mxu0
      %v1390 = vadd.f32 0.0, %v1389
      %1391 = vmatmul.bf16.gmra.mxu0 %v1354
      %v1392 = vpop.f32.mrf.mxu0
      %v1393 = vadd.f32 0.0, %v1392
      %v1394 = vpop.f32.mrf.mxu0
      %v1395 = vadd.f32 0.0, %v1394
      %1396 = vmatmul.bf16.gmra.mxu0 %v1356
      %v1397 = vpop.f32.mrf.mxu0
      %v1398 = vadd.f32 0.0, %v1397
      %v1399 = vpop.f32.mrf.mxu0
      %v1400 = vadd.f32 0.0, %v1399
      %1401 = vmatmul.bf16.gmra.mxu0 %v1358
      %v1402 = vpop.f32.mrf.mxu0
      %v1403 = vadd.f32 0.0, %v1402
      %v1404 = vpop.f32.mrf.mxu0
      %v1405 = vadd.f32 0.0, %v1404
      %1406 = vmatmul.bf16.gmra.mxu0 %v1360
      %v1407 = vpop.f32.mrf.mxu0
      %v1408 = vadd.f32 0.0, %v1407
      %v1409 = vpop.f32.mrf.mxu0
      %v1410 = vadd.f32 0.0, %v1409
      %1411 = vmatmul.bf16.gmra.mxu0 %v1362
      %v1412 = vpop.f32.mrf.mxu0
      %v1413 = vadd.f32 0.0, %v1412
      %v1414 = vpop.f32.mrf.mxu0
      %v1415 = vadd.f32 0.0, %v1414
      %1416 = vdwg.mxu0
      %v1419 = vunpack.c.l.b16 %v1065
      %v1420 = vunpack.c.l.b16 %v1066
      %v1421 = vpack.c.b16 %v1420, %v1419
      %v1422 = vsel %vm1347, %v1050, 0
      %v1424 = vsel %vm1347, %v1052, 0
      %v1426 = vsel %vm1347, %v1054, 0
      %v1428 = vsel %vm1347, %v1056, 0
      %v1430 = vsel %vm1347, %v1058, 0
      %v1432 = vsel %vm1347, %v1060, 0
      %v1434 = vsel %vm1347, %v1062, 0
      %v1436 = vsel %vm1347, %v1064, 0
      %v1439 = vsel %vm1364, %v1421, 0
      %1441 = vmatpush.bf16.msra.mxu0 0
      %1442 = vmatpush.bf16.msra.mxu0 0
      %1443 = vmatpush.bf16.msra.mxu0 0
      %1444 = vmatpush.bf16.msra.mxu0 0
      %1445 = vmatpush.bf16.msra.mxu0 0
      %1446 = vmatpush.bf16.msra.mxu0 0
      %1447 = vmatpush.bf16.msra.mxu0 0
      %1448 = vmatpush.bf16.msra.mxu0 %v1439
      %1449 = vmatmul.bf16.gmra.mxu0 %v1422
      %v1450 = vpop.f32.mrf.mxu0
      %v1451 = vadd.f32 %v1378, %v1450
      %v1452 = vpop.f32.mrf.mxu0
      %v1453 = vadd.f32 %v1380, %v1452
      %1454 = vmatmul.bf16.gmra.mxu0 %v1424
      %v1455 = vpop.f32.mrf.mxu0
      %v1456 = vadd.f32 %v1383, %v1455
      %v1457 = vpop.f32.mrf.mxu0
      %v1458 = vadd.f32 %v1385, %v1457
      %1459 = vmatmul.bf16.gmra.mxu0 %v1426
      %v1460 = vpop.f32.mrf.mxu0
      %v1461 = vadd.f32 %v1388, %v1460
      %v1462 = vpop.f32.mrf.mxu0
      %v1463 = vadd.f32 %v1390, %v1462
      %1464 = vmatmul.bf16.gmra.mxu0 %v1428
      %v1465 = vpop.f32.mrf.mxu0
      %v1466 = vadd.f32 %v1393, %v1465
      %v1467 = vpop.f32.mrf.mxu0
      %v1468 = vadd.f32 %v1395, %v1467
      %1469 = vmatmul.bf16.gmra.mxu0 %v1430
      %v1470 = vpop.f32.mrf.mxu0
      %v1471 = vadd.f32 %v1398, %v1470
      %v1472 = vpop.f32.mrf.mxu0
      %v1473 = vadd.f32 %v1400, %v1472
      %1474 = vmatmul.bf16.gmra.mxu0 %v1432
      %v1475 = vpop.f32.mrf.mxu0
      %v1476 = vadd.f32 %v1403, %v1475
      %v1477 = vpop.f32.mrf.mxu0
      %v1478 = vadd.f32 %v1405, %v1477
      %1479 = vmatmul.bf16.gmra.mxu0 %v1434
      %v1480 = vpop.f32.mrf.mxu0
      %v1481 = vadd.f32 %v1408, %v1480
      %v1482 = vpop.f32.mrf.mxu0
      %v1483 = vadd.f32 %v1410, %v1482
      %1484 = vmatmul.bf16.gmra.mxu0 %v1436
      %v1485 = vpop.f32.mrf.mxu0
      %v1486 = vadd.f32 %v1413, %v1485
      %v1487 = vpop.f32.mrf.mxu0
      %v1488 = vadd.f32 %v1415, %v1487
      %1489 = vdwg.mxu0
      %s1490 = scalar_lea.vmem [#allocation2], 24
      %v1491 = vld [vmem:[%s1490] sm:$0xf]
      %v1492 = vld [vmem:[%s1490 + $0x4] sm:$0xf]
      %v1493 = vld [vmem:[%s1490 + $0x8] sm:$0x1]
      %v1494 = vld [vmem:[%s1490 + $0xc] sm:$0xf]
      %v1495 = vld [vmem:[%s1490 + $0x10] sm:$0xf]
      %v1496 = vld [vmem:[%s1490 + $0x14] sm:$0x1]
      %v1497 = vld [vmem:[%s1490 + $0x18] sm:$0xf]
      %v1498 = vld [vmem:[%s1490 + $0x1c] sm:$0xf]
      %v1499 = vld [vmem:[%s1490 + $0x20] sm:$0x1]
      %v1500 = vld [vmem:[%s1490 + $0x24] sm:$0xf]
      %v1501 = vld [vmem:[%s1490 + $0x28] sm:$0xf]
      %v1502 = vld [vmem:[%s1490 + $0x2c] sm:$0x1]
      %v1503 = vld [vmem:[%s1490 + $0x30] sm:$0xf]
      %v1504 = vld [vmem:[%s1490 + $0x34] sm:$0xf]
      %v1505 = vld [vmem:[%s1490 + $0x38] sm:$0x1]
      %v1506 = vld [vmem:[%s1490 + $0x3c] sm:$0xf]
      %v1507 = vld [vmem:[%s1490 + $0x40] sm:$0xf]
      %v1508 = vld [vmem:[%s1490 + $0x44] sm:$0x1]
      %v1509 = vld [vmem:[%s1490 + $0x48] sm:$0xf]
      %v1510 = vld [vmem:[%s1490 + $0x4c] sm:$0xf]
      %v1511 = vld [vmem:[%s1490 + $0x50] sm:$0x1]
      %v1512 = vld [vmem:[%s1490 + $0x54] sm:$0xf]
      %v1513 = vld [vmem:[%s1490 + $0x58] sm:$0xf]
      %v1514 = vld [vmem:[%s1490 + $0x5c] sm:$0x1]
      %v1531 = vunpack.c.l.b16 %v1491
      %v1532 = vunpack.c.l.b16 %v1492
      %v1533 = vunpack.c.l.b16 %v1494
      %v1534 = vunpack.c.l.b16 %v1495
      %v1535 = vunpack.c.l.b16 %v1497
      %v1536 = vunpack.c.l.b16 %v1498
      %v1537 = vunpack.c.l.b16 %v1500
      %v1538 = vunpack.c.l.b16 %v1501
      %v1539 = vunpack.c.l.b16 %v1503
      %v1540 = vunpack.c.l.b16 %v1504
      %v1541 = vunpack.c.l.b16 %v1506
      %v1542 = vunpack.c.l.b16 %v1507
      %v1543 = vunpack.c.l.b16 %v1509
      %v1544 = vunpack.c.l.b16 %v1510
      %v1545 = vunpack.c.l.b16 %v1512
      %v1546 = vunpack.c.l.b16 %v1513
      %v1547 = vpack.c.b16 %v1532, %v1531
      %v1548 = vpack.c.b16 %v1534, %v1533
      %v1549 = vpack.c.b16 %v1536, %v1535
      %v1550 = vpack.c.b16 %v1538, %v1537
      %v1551 = vpack.c.b16 %v1540, %v1539
      %v1552 = vpack.c.b16 %v1542, %v1541
      %v1553 = vpack.c.b16 %v1544, %v1543
      %v1554 = vpack.c.b16 %v1546, %v1545
      %v1563 = vunpack.c.l.b16 %v1493
      %v1564 = vunpack.c.l.b16 %v1496
      %v1565 = vunpack.c.l.b16 %v1499
      %v1566 = vunpack.c.l.b16 %v1502
      %v1567 = vunpack.c.l.b16 %v1505
      %v1568 = vunpack.c.l.b16 %v1508
      %v1569 = vunpack.c.l.b16 %v1511
      %v1570 = vunpack.c.l.b16 %v1514
      %v1571 = vpack.c.b16 %v1563, %v1563
      %v1572 = vpack.c.b16 %v1564, %v1564
      %v1573 = vpack.c.b16 %v1565, %v1565
      %v1574 = vpack.c.b16 %v1566, %v1566
      %v1575 = vpack.c.b16 %v1567, %v1567
      %v1576 = vpack.c.b16 %v1568, %v1568
      %v1577 = vpack.c.b16 %v1569, %v1569
      %v1578 = vpack.c.b16 %v1570, %v1570
      %v1580 = vshrl.u32 %v1547, 16
      %v1582 = vshll.u32 %v1547, 16
      %v1584 = vrot.slane %v1582, 1
      %v1585 = vor.u32 %v1580, %v1584
      %v1587 = vshll.u32 %v1571, 16
      %v1589 = vrot.slane %v1587, 1
      %v1590 = vsel %vm877, %v1585, %v1589
      %v1592 = vshrl.u32 %v1548, 16
      %v1594 = vshll.u32 %v1548, 16
      %v1596 = vrot.slane %v1594, 1
      %v1597 = vor.u32 %v1592, %v1596
      %v1599 = vshll.u32 %v1572, 16
      %v1601 = vrot.slane %v1599, 1
      %v1602 = vsel %vm877, %v1597, %v1601
      %v1604 = vshrl.u32 %v1549, 16
      %v1606 = vshll.u32 %v1549, 16
      %v1608 = vrot.slane %v1606, 1
      %v1609 = vor.u32 %v1604, %v1608
      %v1611 = vshll.u32 %v1573, 16
      %v1613 = vrot.slane %v1611, 1
      %v1614 = vsel %vm877, %v1609, %v1613
      %v1616 = vshrl.u32 %v1550, 16
      %v1618 = vshll.u32 %v1550, 16
      %v1620 = vrot.slane %v1618, 1
      %v1621 = vor.u32 %v1616, %v1620
      %v1623 = vshll.u32 %v1574, 16
      %v1625 = vrot.slane %v1623, 1
      %v1626 = vsel %vm877, %v1621, %v1625
      %v1628 = vshrl.u32 %v1551, 16
      %v1630 = vshll.u32 %v1551, 16
      %v1632 = vrot.slane %v1630, 1
      %v1633 = vor.u32 %v1628, %v1632
      %v1635 = vshll.u32 %v1575, 16
      %v1637 = vrot.slane %v1635, 1
      %v1638 = vsel %vm877, %v1633, %v1637
      %v1640 = vshrl.u32 %v1552, 16
      %v1642 = vshll.u32 %v1552, 16
      %v1644 = vrot.slane %v1642, 1
      %v1645 = vor.u32 %v1640, %v1644
      %v1647 = vshll.u32 %v1576, 16
      %v1649 = vrot.slane %v1647, 1
      %v1650 = vsel %vm877, %v1645, %v1649
      %v1652 = vshrl.u32 %v1553, 16
      %v1654 = vshll.u32 %v1553, 16
      %v1656 = vrot.slane %v1654, 1
      %v1657 = vor.u32 %v1652, %v1656
      %v1659 = vshll.u32 %v1577, 16
      %v1661 = vrot.slane %v1659, 1
      %v1662 = vsel %vm877, %v1657, %v1661
      %v1664 = vshrl.u32 %v1554, 16
      %v1666 = vshll.u32 %v1554, 16
      %v1668 = vrot.slane %v1666, 1
      %v1669 = vor.u32 %v1664, %v1668
      %v1671 = vshll.u32 %v1578, 16
      %v1673 = vrot.slane %v1671, 1
      %v1674 = vsel %vm877, %v1669, %v1673
      %1675 = vrot.lane.b32.xlu0 %v1590, 4
      %v1676 = vpop.permute.xlu0 %1675
      %1677 = vrot.lane.b32.xlu0 %v1602, 4
      %v1678 = vpop.permute.xlu0 %1677
      %1679 = vrot.lane.b32.xlu0 %v1614, 4
      %v1680 = vpop.permute.xlu0 %1679
      %1681 = vrot.lane.b32.xlu0 %v1626, 4
      %v1682 = vpop.permute.xlu0 %1681
      %1683 = vrot.lane.b32.xlu0 %v1638, 4
      %v1684 = vpop.permute.xlu0 %1683
      %1685 = vrot.lane.b32.xlu0 %v1650, 4
      %v1686 = vpop.permute.xlu0 %1685
      %1687 = vrot.lane.b32.xlu0 %v1662, 4
      %v1688 = vpop.permute.xlu0 %1687
      %1689 = vrot.lane.b32.xlu0 %v1674, 4
      %v1690 = vpop.permute.xlu0 %1689
      %v1691 = vrot.slane %v1547, 1
      %v1692 = vrot.slane %v1571, 1
      %v1693 = vsel %vm990, %v1691, %v1692
      %v1694 = vrot.slane %v1548, 1
      %v1695 = vrot.slane %v1572, 1
      %v1696 = vsel %vm990, %v1694, %v1695
      %v1697 = vrot.slane %v1549, 1
      %v1698 = vrot.slane %v1573, 1
      %v1699 = vsel %vm990, %v1697, %v1698
      %v1700 = vrot.slane %v1550, 1
      %v1701 = vrot.slane %v1574, 1
      %v1702 = vsel %vm990, %v1700, %v1701
      %v1703 = vrot.slane %v1551, 1
      %v1704 = vrot.slane %v1575, 1
      %v1705 = vsel %vm990, %v1703, %v1704
      %v1706 = vrot.slane %v1552, 1
      %v1707 = vrot.slane %v1576, 1
      %v1708 = vsel %vm990, %v1706, %v1707
      %v1709 = vrot.slane %v1553, 1
      %v1710 = vrot.slane %v1577, 1
      %v1711 = vsel %vm990, %v1709, %v1710
      %v1712 = vrot.slane %v1554, 1
      %v1713 = vrot.slane %v1578, 1
      %v1714 = vsel %vm990, %v1712, %v1713
      %1715 = vrot.lane.b32.xlu0 %v1693, 8
      %v1716 = vpop.permute.xlu0 %1715
      %1717 = vrot.lane.b32.xlu0 %v1696, 8
      %v1718 = vpop.permute.xlu0 %1717
      %1719 = vrot.lane.b32.xlu0 %v1699, 8
      %v1720 = vpop.permute.xlu0 %1719
      %1721 = vrot.lane.b32.xlu0 %v1702, 8
      %v1722 = vpop.permute.xlu0 %1721
      %1723 = vrot.lane.b32.xlu0 %v1705, 8
      %v1724 = vpop.permute.xlu0 %1723
      %1725 = vrot.lane.b32.xlu0 %v1708, 8
      %v1726 = vpop.permute.xlu0 %1725
      %1727 = vrot.lane.b32.xlu0 %v1711, 8
      %v1728 = vpop.permute.xlu0 %1727
      %1729 = vrot.lane.b32.xlu0 %v1714, 8
      %v1730 = vpop.permute.xlu0 %1729
      %v1732 = vsel %vm1031, %v1547, %v1676
      %v1734 = vsel %vm1031, %v1548, %v1678
      %v1736 = vsel %vm1031, %v1549, %v1680
      %v1738 = vsel %vm1031, %v1550, %v1682
      %v1740 = vsel %vm1031, %v1551, %v1684
      %v1742 = vsel %vm1031, %v1552, %v1686
      %v1744 = vsel %vm1031, %v1553, %v1688
      %v1746 = vsel %vm1031, %v1554, %v1690
      %v1748 = vsel %vm1048, %v1732, %v1716
      %v1750 = vsel %vm1048, %v1734, %v1718
      %v1752 = vsel %vm1048, %v1736, %v1720
      %v1754 = vsel %vm1048, %v1738, %v1722
      %v1756 = vsel %vm1048, %v1740, %v1724
      %v1758 = vsel %vm1048, %v1742, %v1726
      %v1760 = vsel %vm1048, %v1744, %v1728
      %v1762 = vsel %vm1048, %v1746, %v1730
      %s1763 = scalar_lea.vmem %s3, 16
      %v1764 = vld [vmem:[%s1763] sm:$0xf]
      %v1765 = vld [vmem:[%s1763 + $0x4] sm:$0x3]
      %v1768 = vunpack.c.l.b16 %v1764
      %v1769 = vunpack.c.l.b16 %v1765
      %v1770 = vpack.c.b16 %v1769, %v1768
      %v1771 = vsel %vm1347, %v1748, 0
      %v1773 = vsel %vm1347, %v1750, 0
      %v1775 = vsel %vm1347, %v1752, 0
      %v1777 = vsel %vm1347, %v1754, 0
      %v1779 = vsel %vm1347, %v1756, 0
      %v1781 = vsel %vm1347, %v1758, 0
      %v1783 = vsel %vm1347, %v1760, 0
      %v1785 = vsel %vm1347, %v1762, 0
      %v1788 = vsel %vm1364, %v1770, 0
      %1790 = vmatpush.bf16.msra.mxu0 0
      %1791 = vmatpush.bf16.msra.mxu0 0
      %1792 = vmatpush.bf16.msra.mxu0 0
      %1793 = vmatpush.bf16.msra.mxu0 0
      %1794 = vmatpush.bf16.msra.mxu0 0
      %1795 = vmatpush.bf16.msra.mxu0 0
      %1796 = vmatpush.bf16.msra.mxu0 0
      %1797 = vmatpush.bf16.msra.mxu0 %v1788
      %1798 = vmatmul.bf16.gmra.mxu0 %v1771
      %v1799 = vpop.f32.mrf.mxu0
      %v1800 = vadd.f32 0.0, %v1799
      %v1801 = vpop.f32.mrf.mxu0
      %v1802 = vadd.f32 0.0, %v1801
      %1803 = vmatmul.bf16.gmra.mxu0 %v1773
      %v1804 = vpop.f32.mrf.mxu0
      %v1805 = vadd.f32 0.0, %v1804
      %v1806 = vpop.f32.mrf.mxu0
      %v1807 = vadd.f32 0.0, %v1806
      %1808 = vmatmul.bf16.gmra.mxu0 %v1775
      %v1809 = vpop.f32.mrf.mxu0
      %v1810 = vadd.f32 0.0, %v1809
      %v1811 = vpop.f32.mrf.mxu0
      %v1812 = vadd.f32 0.0, %v1811
      %1813 = vmatmul.bf16.gmra.mxu0 %v1777
      %v1814 = vpop.f32.mrf.mxu0
      %v1815 = vadd.f32 0.0, %v1814
      %v1816 = vpop.f32.mrf.mxu0
      %v1817 = vadd.f32 0.0, %v1816
      %1818 = vmatmul.bf16.gmra.mxu0 %v1779
      %v1819 = vpop.f32.mrf.mxu0
      %v1820 = vadd.f32 0.0, %v1819
      %v1821 = vpop.f32.mrf.mxu0
      %v1822 = vadd.f32 0.0, %v1821
      %1823 = vmatmul.bf16.gmra.mxu0 %v1781
      %v1824 = vpop.f32.mrf.mxu0
      %v1825 = vadd.f32 0.0, %v1824
      %v1826 = vpop.f32.mrf.mxu0
      %v1827 = vadd.f32 0.0, %v1826
      %1828 = vmatmul.bf16.gmra.mxu0 %v1783
      %v1829 = vpop.f32.mrf.mxu0
      %v1830 = vadd.f32 0.0, %v1829
      %v1831 = vpop.f32.mrf.mxu0
      %v1832 = vadd.f32 0.0, %v1831
      %1833 = vmatmul.bf16.gmra.mxu0 %v1785
      %v1834 = vpop.f32.mrf.mxu0
      %v1835 = vadd.f32 0.0, %v1834
      %v1836 = vpop.f32.mrf.mxu0
      %v1837 = vadd.f32 0.0, %v1836
      %1838 = vdwg.mxu0
      %v1839 = vadd.f32 %v1451, %v1800
      %v1840 = vadd.f32 %v1453, %v1802
      %v1841 = vadd.f32 %v1456, %v1805
      %v1842 = vadd.f32 %v1458, %v1807
      %v1843 = vadd.f32 %v1461, %v1810
      %v1844 = vadd.f32 %v1463, %v1812
      %v1845 = vadd.f32 %v1466, %v1815
      %v1846 = vadd.f32 %v1468, %v1817
      %v1847 = vadd.f32 %v1471, %v1820
      %v1848 = vadd.f32 %v1473, %v1822
      %v1849 = vadd.f32 %v1476, %v1825
      %v1850 = vadd.f32 %v1478, %v1827
      %v1851 = vadd.f32 %v1481, %v1830
      %v1852 = vadd.f32 %v1483, %v1832
      %v1853 = vadd.f32 %v1486, %v1835
      %v1854 = vadd.f32 %v1488, %v1837
      %v1855 = vadd.f32 %v1839, %v1840
      %v1856 = vadd.f32 %v1855, %v1841
      %v1857 = vadd.f32 %v1856, %v1842
      %v1858 = vadd.f32 %v1857, %v1843
      %v1859 = vadd.f32 %v1858, %v1844
      %v1860 = vadd.f32 %v1859, %v1845
      %v1861 = vadd.f32 %v1860, %v1846
      %v1862 = vadd.f32 %v1861, %v1847
      %v1863 = vadd.f32 %v1862, %v1848
      %v1864 = vadd.f32 %v1863, %v1849
      %v1865 = vadd.f32 %v1864, %v1850
      %v1866 = vadd.f32 %v1865, %v1851
      %v1867 = vadd.f32 %v1866, %v1852
      %v1868 = vadd.f32 %v1867, %v1853
      %v1869 = vadd.f32 %v1868, %v1854
      %v1870 = vrot.slane %v1869, 4
      %v1871 = vadd.f32 %v1869, %v1870
      %v1872 = vrot.slane %v1871, 2
      %v1873 = vadd.f32 %v1871, %v1872
      %v1874 = vrot.slane %v1873, 1
      %v1875 = vadd.f32 %v1873, %v1874
      %v1876 = vmul.f32 %v1839, %v1839
      %v1877 = vmul.f32 %v1840, %v1840
      %v1878 = vmul.f32 %v1841, %v1841
      %v1879 = vmul.f32 %v1842, %v1842
      %v1880 = vmul.f32 %v1843, %v1843
      %v1881 = vmul.f32 %v1844, %v1844
      %v1882 = vmul.f32 %v1845, %v1845
      %v1883 = vmul.f32 %v1846, %v1846
      %v1884 = vmul.f32 %v1847, %v1847
      %v1885 = vmul.f32 %v1848, %v1848
      %v1886 = vmul.f32 %v1849, %v1849
      %v1887 = vmul.f32 %v1850, %v1850
      %v1888 = vmul.f32 %v1851, %v1851
      %v1889 = vmul.f32 %v1852, %v1852
      %v1890 = vmul.f32 %v1853, %v1853
      %v1891 = vmul.f32 %v1854, %v1854
      %v1892 = vadd.f32 %v1876, %v1877
      %v1893 = vadd.f32 %v1892, %v1878
      %v1894 = vadd.f32 %v1893, %v1879
      %v1895 = vadd.f32 %v1894, %v1880
      %v1896 = vadd.f32 %v1895, %v1881
      %v1897 = vadd.f32 %v1896, %v1882
      %v1898 = vadd.f32 %v1897, %v1883
      %v1899 = vadd.f32 %v1898, %v1884
      %v1900 = vadd.f32 %v1899, %v1885
      %v1901 = vadd.f32 %v1900, %v1886
      %v1902 = vadd.f32 %v1901, %v1887
      %v1903 = vadd.f32 %v1902, %v1888
      %v1904 = vadd.f32 %v1903, %v1889
      %v1905 = vadd.f32 %v1904, %v1890
      %v1906 = vadd.f32 %v1905, %v1891
      %v1907 = vrot.slane %v1906, 4
      %v1908 = vadd.f32 %v1906, %v1907
      %v1909 = vrot.slane %v1908, 2
      %v1910 = vadd.f32 %v1908, %v1909
      %v1911 = vrot.slane %v1910, 1
      %v1912 = vadd.f32 %v1910, %v1911
      %vm1913 = vcmask 1040384
      %v1914 = vsel %vm1913, %v1875, %v1912
      %vm1915 = vcmask 1041408
      %v1916 = vsel %vm1915, %v1914, 0.0
      %1917 = vst [vmem:[%s413] sm:$0xff] %v1916
      %v1918 = vpack.c.bf16 %v1839, %v1839
      %v1919 = vpack.c.bf16 %v1840, %v1840
      %v1920 = vpack.c.bf16 %v1841, %v1841
      %v1921 = vpack.c.bf16 %v1842, %v1842
      %v1922 = vpack.c.bf16 %v1843, %v1843
      %v1923 = vpack.c.bf16 %v1844, %v1844
      %v1924 = vpack.c.bf16 %v1845, %v1845
      %v1925 = vpack.c.bf16 %v1846, %v1846
      %v1926 = vpack.c.bf16 %v1847, %v1847
      %v1927 = vpack.c.bf16 %v1848, %v1848
      %v1928 = vpack.c.bf16 %v1849, %v1849
      %v1929 = vpack.c.bf16 %v1850, %v1850
      %v1930 = vpack.c.bf16 %v1851, %v1851
      %v1931 = vpack.c.bf16 %v1852, %v1852
      %v1932 = vpack.c.bf16 %v1853, %v1853
      %v1933 = vpack.c.bf16 %v1854, %v1854
      %1934 = vst [vmem:[%s404] sm:$0xf] %v1918
      %1935 = vst [vmem:[%s404 + $0x4] sm:$0xf] %v1919
      %1936 = vst [vmem:[%s404 + $0x8] sm:$0xf] %v1920
      %1937 = vst [vmem:[%s404 + $0xc] sm:$0xf] %v1921
      %1938 = vst [vmem:[%s404 + $0x10] sm:$0xf] %v1922
      %1939 = vst [vmem:[%s404 + $0x14] sm:$0xf] %v1923
      %1940 = vst [vmem:[%s404 + $0x18] sm:$0xf] %v1924
      %1941 = vst [vmem:[%s404 + $0x1c] sm:$0xf] %v1925
      %1942 = vst [vmem:[%s404 + $0x20] sm:$0xf] %v1926
      %1943 = vst [vmem:[%s404 + $0x24] sm:$0xf] %v1927
      %1944 = vst [vmem:[%s404 + $0x28] sm:$0xf] %v1928
      %1945 = vst [vmem:[%s404 + $0x2c] sm:$0xf] %v1929
      %1946 = vst [vmem:[%s404 + $0x30] sm:$0xf] %v1930
      %1947 = vst [vmem:[%s404 + $0x34] sm:$0xf] %v1931
      %1948 = vst [vmem:[%s404 + $0x38] sm:$0xf] %v1932
      %1949 = vst [vmem:[%s404 + $0x3c] sm:$0xf] %v1933
      %s1950 = smul.u32 8, %s22
      %p1951 = scmp.lt.s32.totalorder %s21, 1
      %s1952 = scalar_select %p1951, %s21, 1
      %p1953 = scmp.lt.s32.totalorder %s1950, 15
      %s1954 = scalar_select %p1953, %s1950, 15
      %s1955 = smul.addr %s1954, 2
      %s1956 = smul.addr %s1952, 32
      %s1957 = sadd.s32 %s1955, %s1956
      %s1958 = smul.addr %s1957, 4
      %s1959 = scalar_lea.vmem %s4, %s1958
      %p1960 = scmp.lt.s32.totalorder %s21, 1
      %s1961 = scalar_select %p1960, %s21, 1
      %p1962 = scmp.lt.s32.totalorder %s22, 1
      %s1963 = scalar_select %p1962, %s22, 1
      %s1964 = smul.addr %s1961, 2
      %s1965 = sadd.s32 %s1963, %s1964
      %s1966 = smul.addr %s1965, 8
      %s1967 = scalar_lea.vmem %s5, %s1966
      // Predicated region
      $region37: #{inconv_forward.3} parent=35 // pred_check
        %p1968 = pneg %p170
      $region38: #{inconv_forward.3} parent=35 // pred_check_branch
        %1970 = sbr.rel (%p1968) target = $region40
      $region39: #{inconv_forward.3} parent=35 // pred_region
        %s1971 = smul.u32 8, %s22
      $region40: #{inconv_forward.3} parent=35 // pred_fallthru
        _
      // Predicated region
      $region41: #{inconv_forward.3} parent=35 // pred_check
        %p1972 = pneg %p198
      $region42: #{inconv_forward.3} parent=35 // pred_check_branch
        %1974 = sbr.rel (%p1972) target = $region44
      $region43: #{inconv_forward.3} parent=35 // pred_region
        _
      $region44: #{inconv_forward.3} parent=35 // pred_fallthru
        _
    $region36: #{inconv_forward.3} parent=5 // pred_fallthru
      _
    %p1975 = scmp.le.s32.totalorder 2, %s12
    // Predicated region
    $region45: #{inconv_forward.3} parent=5 // pred_check
      %p1976 = pneg %p1975
    $region46: #{inconv_forward.3} parent=5 // pred_check_branch
      %1978 = sbr.rel (%p1976) target = $region48
    $region47: #{inconv_forward.3} parent=5 // pred_region
      %s1979 = ssub.s32 %s12, 2
      // Predicated region
      $region49: #{inconv_forward.3} parent=47 // pred_check
        %p1980 = pneg %p176
      $region50: #{inconv_forward.3} parent=47 // pred_check_branch
        %1982 = sbr.rel (%p1980) target = $region52
      $region51: #{inconv_forward.3} parent=47 // pred_region
        %s1983 = smul.u32 8, %s24
        %p1984 = scmp.lt.s32.totalorder %s23, 1
        %s1985 = scalar_select %p1984, %s23, 1
        %p1986 = scmp.lt.s32.totalorder %s1983, 15
        %s1987 = scalar_select %p1986, %s1983, 15
        %s1988 = smul.addr %s1987, 2
        %s1989 = smul.addr %s1985, 32
        %s1990 = sadd.s32 %s1988, %s1989
        %s1991 = smul.addr %s1990, 4
        %s1992 = scalar_lea.vmem %s4, %s1991
      $region52: #{inconv_forward.3} parent=47 // pred_fallthru
        _
      // Predicated region
      $region53: #{inconv_forward.3} parent=47 // pred_check
        %p1993 = pneg %p204
      $region54: #{inconv_forward.3} parent=47 // pred_check_branch
        %1995 = sbr.rel (%p1993) target = $region56
      $region55: #{inconv_forward.3} parent=47 // pred_region
        %p1996 = scmp.lt.s32.totalorder %s23, 1
        %s1997 = scalar_select %p1996, %s23, 1
        %p1998 = scmp.lt.s32.totalorder %s24, 1
        %s1999 = scalar_select %p1998, %s24, 1
        %s2000 = smul.addr %s1997, 2
        %s2001 = sadd.s32 %s1999, %s2000
        %s2002 = smul.addr %s2001, 8
        %s2003 = scalar_lea.vmem %s5, %s2002
      $region56: #{inconv_forward.3} parent=47 // pred_fallthru
        _
    $region48: #{inconv_forward.3} parent=5 // pred_fallthru
      _
  $region6: #{inconv_forward.3} parent=0 // loop_footer
    %s16 = sadd.s32 1, %s12
  $region7: #{inconv_forward.3} parent=0 // loop_footer_branch
    %11 = sbr.rel target = $region3
  $region8: #{inconv_forward.3} parent=0 // loop_exit
    _

// kernel: inconv_forward.4
$region0: #{inconv_forward.4}
  #allocation0 [shape = 'u32[]', space=smem, size = 0x4, offset = 0x4, fixed_abs, tag = 'smem constant byte address 0x4 - core index']
  #allocation1 [shape = 'u32[72,128]{1,0:T(1,128)}', space=vmem, size = 0x9000, scoped, tag = 'internal scratch']
  #allocation2 [shape = 'bf16[10,18,128]{2,1,0:T(8,128)(2,1)}', space=vmem, size = 0xf000, scoped, tag = 'scratch operand']
  %s0 = inlined_call_operand.vmem [shape: bf16[2,16,16,128], index: 0, kind: input, shape index: {}, may-alias: {0,1,2}]
  %s1 = inlined_call_operand.vmem [shape: bf16[2,16,16,128], index: 1, kind: input, shape index: {}, may-alias: {0,1,2}]
  %s2 = inlined_call_operand.vmem [shape: bf16[2,16,16,128], index: 2, kind: input, shape index: {}, may-alias: {0,1,2}]
  %s3 = inlined_call_operand.vmem [shape: f32[1,128], index: 3, kind: input, shape index: {}]
  %s4 = inlined_call_operand.vmem [shape: f32[1,128], index: 4, kind: input, shape index: {}]
  %s5 = inlined_call_operand.hbm [shape: bf16[3,384,128], index: 5, kind: input, shape index: {}]
  %s6 = inlined_call_operand.vmem [shape: bf16[2,16,16,128], index: 6, kind: output, shape index: {0}]
  %s7 = inlined_call_operand.vmem [shape: f32[2,2,8,128], index: 7, kind: output, shape index: {1}]
  %8 = xla_tuple %s6, %s7
  %s9 = sld [smem:[#allocation0]]
  $region69: #{inconv_forward.4} parent=0
    _
  %s11 = ssub.s32 1, %s9
  %s12 = scalar_select 0, %s11, %s9
  $region1: #{inconv_forward.4} parent=0
    #allocation3 [shape = 'u8[294912]{0}', space=vmem, size = 0x48000, scoped, tag = 'input window, operand 5, single buffered']
    #allocation4 [shape = 's32[2]{0}', space=sflag, size = 0x8, scoped, tag = 'scoped memory for inconv_forward.4']
    %13 = vsyncpa [#allocation4], 0
    loop: start=0, step=1, limit=6
    $region2: #{inconv_forward.4} parent=1 // loop_pre_header
      _
    $region3: #{inconv_forward.4} parent=1 // loop_header
      %s15 = sphi 0, %s19
      %p16 = scmp.ge.s32.totalorder %s15, 6
      %s22 = sphi 0, %s34
      %s23 = sphi 0, %s30
      %s24 = sphi 0, %s22
      %s25 = sphi 0, %s23
      %s26 = sphi 0, %s24
      %s27 = sphi 0, %s25
      %s39 = sphi 0, %s41
      %s42 = sphi 0, %s39
      %s43 = sphi 0, %s42
      %s59 = sphi 0, %s43
      %s75 = sphi 0, %s77
      %s78 = sphi 0, %s75
      %s79 = sphi 0, %s78
      %s95 = sphi 0, %s79
      %s111 = sphi 0, %s113
      %s114 = sphi 0, %s111
      %s115 = sphi 0, %s114
      %s131 = sphi 0, %s115
      %s135 = sphi 0, %s135
      %s137 = sphi 0, %s135
      %s138 = sphi 0, %s137
      %s152 = sphi 0, %s138
      %s156 = sphi 0, %s156
      %s158 = sphi 0, %s156
      %s159 = sphi 0, %s158
      %s173 = sphi 0, %s159
      %s177 = sphi 0, %s177
      %s179 = sphi 0, %s177
      %s180 = sphi 0, %s179
      %s194 = sphi 0, %s180
      %s202 = sphi 0, %s204
      %s205 = sphi 0, %s202
      %s206 = sphi 0, %s205
      %s222 = sphi 0, %s206
      %s230 = sphi 0, %s232
      %s233 = sphi 0, %s230
      %s234 = sphi 0, %s233
      %s250 = sphi 0, %s234
    $region4: #{inconv_forward.4} parent=1 // loop_header_branch
      %18 = sbr.rel (%p16) target = $region8
    $region5: #{inconv_forward.4} parent=1 // loop_body
      %s20 = ssub.s32 %s15, 1
      %s21 = ssub.s32 %s15, 2
      %s28 = sadd.s32 1, %s23
      %p29 = scmp.ge.s32.totalorder %s28, 2
      %s30 = scalar_select %p29, 0, %s28
      %s31 = sadd.s32 1, %s22
      %s32 = scalar_select %p29, %s31, %s22
      %p33 = scmp.ge.s32.totalorder %s32, 2
      %s34 = scalar_select %p33, 0, %s32
      %s35 = ssub.s32 %s22, %s34
      %s36 = ssub.s32 %s23, %s30
      %s37 = sor.u32 %s35, %s36
      %p38 = scmp.eq.s32.totalorder %s37, 0
      %s40 = sadd.s32 %s39, 1
      %s41 = scalar_select %p38, %s39, %s40
      %p44 = pneg %p38
      %p45 = scmp.eq.s32.totalorder %s15, 3
      %p46 = por %p44, %p45
      %p47 = scmp.ne.s32.totalorder %s39, %s42
      %p48 = scmp.eq.s32.totalorder %s15, 0
      %p49 = por %p47, %p48
      %p50 = scmp.ne.s32.totalorder %s39, %s42
      %p51 = scmp.eq.s32.totalorder %s20, 3
      %p52 = por %p50, %p51
      %p53 = scmp.ne.s32.totalorder %s42, %s43
      %p54 = scmp.eq.s32.totalorder %s20, 0
      %p55 = por %p53, %p54
      %p56 = scmp.ne.s32.totalorder %s42, %s43
      %p57 = scmp.eq.s32.totalorder %s21, 3
      %p58 = por %p56, %p57
      %p60 = scmp.ne.s32.totalorder %s43, %s59
      %p61 = scmp.eq.s32.totalorder %s21, 0
      %p62 = por %p60, %p61
      %s63 = smul.u32 %s23, 8
      %s64 = ssub.s32 %s63, 1
      %p65 = scmp.gt.s32.totalorder %s64, 0
      %s66 = scalar_select %p65, %s64, 0
      %s67 = smul.u32 %s30, 8
      %s68 = ssub.s32 %s67, 1
      %p69 = scmp.gt.s32.totalorder %s68, 0
      %s70 = scalar_select %p69, %s68, 0
      %s71 = ssub.s32 %s22, %s34
      %s72 = ssub.s32 %s66, %s70
      %s73 = sor.u32 %s71, %s72
      %p74 = scmp.eq.s32.totalorder %s73, 0
      %s76 = sadd.s32 %s75, 1
      %s77 = scalar_select %p74, %s75, %s76
      %p80 = pneg %p74
      %p81 = scmp.eq.s32.totalorder %s15, 3
      %p82 = por %p80, %p81
      %p83 = scmp.ne.s32.totalorder %s75, %s78
      %p84 = scmp.eq.s32.totalorder %s15, 0
      %p85 = por %p83, %p84
      %p86 = scmp.ne.s32.totalorder %s75, %s78
      %p87 = scmp.eq.s32.totalorder %s20, 3
      %p88 = por %p86, %p87
      %p89 = scmp.ne.s32.totalorder %s78, %s79
      %p90 = scmp.eq.s32.totalorder %s20, 0
      %p91 = por %p89, %p90
      %p92 = scmp.ne.s32.totalorder %s78, %s79
      %p93 = scmp.eq.s32.totalorder %s21, 3
      %p94 = por %p92, %p93
      %p96 = scmp.ne.s32.totalorder %s79, %s95
      %p97 = scmp.eq.s32.totalorder %s21, 0
      %p98 = por %p96, %p97
      %s99 = smul.u32 %s23, 8
      %s100 = sadd.s32 %s99, 8
      %p101 = scmp.lt.s32.totalorder %s100, 15
      %s102 = scalar_select %p101, %s100, 15
      %s103 = smul.u32 %s30, 8
      %s104 = sadd.s32 %s103, 8
      %p105 = scmp.lt.s32.totalorder %s104, 15
      %s106 = scalar_select %p105, %s104, 15
      %s107 = ssub.s32 %s22, %s34
      %s108 = ssub.s32 %s102, %s106
      %s109 = sor.u32 %s107, %s108
      %p110 = scmp.eq.s32.totalorder %s109, 0
      %s112 = sadd.s32 %s111, 1
      %s113 = scalar_select %p110, %s111, %s112
      %p116 = pneg %p110
      %p117 = scmp.eq.s32.totalorder %s15, 3
      %p118 = por %p116, %p117
      %p119 = scmp.ne.s32.totalorder %s111, %s114
      %p120 = scmp.eq.s32.totalorder %s15, 0
      %p121 = por %p119, %p120
      %p122 = scmp.ne.s32.totalorder %s111, %s114
      %p123 = scmp.eq.s32.totalorder %s20, 3
      %p124 = por %p122, %p123
      %p125 = scmp.ne.s32.totalorder %s114, %s115
      %p126 = scmp.eq.s32.totalorder %s20, 0
      %p127 = por %p125, %p126
      %p128 = scmp.ne.s32.totalorder %s114, %s115
      %p129 = scmp.eq.s32.totalorder %s21, 3
      %p130 = por %p128, %p129
      %p132 = scmp.ne.s32.totalorder %s115, %s131
      %p133 = scmp.eq.s32.totalorder %s21, 0
      %p134 = por %p132, %p133
      %s136 = sadd.s32 %s135, 1
      %p139 = scmp.eq.s32.totalorder %s15, 3
      %p140 = scmp.ne.s32.totalorder %s135, %s137
      %p141 = scmp.eq.s32.totalorder %s15, 0
      %p142 = por %p140, %p141
      %p143 = scmp.ne.s32.totalorder %s135, %s137
      %p144 = scmp.eq.s32.totalorder %s20, 3
      %p145 = por %p143, %p144
      %p146 = scmp.ne.s32.totalorder %s137, %s138
      %p147 = scmp.eq.s32.totalorder %s20, 0
      %p148 = por %p146, %p147
      %p149 = scmp.ne.s32.totalorder %s137, %s138
      %p150 = scmp.eq.s32.totalorder %s21, 3
      %p151 = por %p149, %p150
      %p153 = scmp.ne.s32.totalorder %s138, %s152
      %p154 = scmp.eq.s32.totalorder %s21, 0
      %p155 = por %p153, %p154
      %s157 = sadd.s32 %s156, 1
      %p160 = scmp.eq.s32.totalorder %s15, 3
      %p161 = scmp.ne.s32.totalorder %s156, %s158
      %p162 = scmp.eq.s32.totalorder %s15, 0
      %p163 = por %p161, %p162
      %p164 = scmp.ne.s32.totalorder %s156, %s158
      %p165 = scmp.eq.s32.totalorder %s20, 3
      %p166 = por %p164, %p165
      %p167 = scmp.ne.s32.totalorder %s158, %s159
      %p168 = scmp.eq.s32.totalorder %s20, 0
      %p169 = por %p167, %p168
      %p170 = scmp.ne.s32.totalorder %s158, %s159
      %p171 = scmp.eq.s32.totalorder %s21, 3
      %p172 = por %p170, %p171
      %p174 = scmp.ne.s32.totalorder %s159, %s173
      %p175 = scmp.eq.s32.totalorder %s21, 0
      %p176 = por %p174, %p175
      %s178 = sadd.s32 %s177, 1
      %p181 = scmp.eq.s32.totalorder %s15, 3
      %p182 = scmp.ne.s32.totalorder %s177, %s179
      %p183 = scmp.eq.s32.totalorder %s15, 0
      %p184 = por %p182, %p183
      %p185 = scmp.ne.s32.totalorder %s177, %s179
      %p186 = scmp.eq.s32.totalorder %s20, 3
      %p187 = por %p185, %p186
      %p188 = scmp.ne.s32.totalorder %s179, %s180
      %p189 = scmp.eq.s32.totalorder %s20, 0
      %p190 = por %p188, %p189
      %p191 = scmp.ne.s32.totalorder %s179, %s180
      %p192 = scmp.eq.s32.totalorder %s21, 3
      %p193 = por %p191, %p192
      %p195 = scmp.ne.s32.totalorder %s180, %s194
      %p196 = scmp.eq.s32.totalorder %s21, 0
      %p197 = por %p195, %p196
      %s198 = ssub.s32 %s22, %s34
      %s199 = ssub.s32 %s23, %s30
      %s200 = sor.u32 %s198, %s199
      %p201 = scmp.eq.s32.totalorder %s200, 0
      %s203 = sadd.s32 %s202, 1
      %s204 = scalar_select %p201, %s202, %s203
      %p207 = pneg %p201
      %p208 = scmp.eq.s32.totalorder %s15, 3
      %p209 = por %p207, %p208
      %p210 = scmp.ne.s32.totalorder %s202, %s205
      %p211 = scmp.eq.s32.totalorder %s15, 0
      %p212 = por %p210, %p211
      %p213 = scmp.ne.s32.totalorder %s202, %s205
      %p214 = scmp.eq.s32.totalorder %s20, 3
      %p215 = por %p213, %p214
      %p216 = scmp.ne.s32.totalorder %s205, %s206
      %p217 = scmp.eq.s32.totalorder %s20, 0
      %p218 = por %p216, %p217
      %p219 = scmp.ne.s32.totalorder %s205, %s206
      %p220 = scmp.eq.s32.totalorder %s21, 3
      %p221 = por %p219, %p220
      %p223 = scmp.ne.s32.totalorder %s206, %s222
      %p224 = scmp.eq.s32.totalorder %s21, 0
      %p225 = por %p223, %p224
      %s226 = ssub.s32 %s22, %s34
      %s227 = ssub.s32 %s23, %s30
      %s228 = sor.u32 %s226, %s227
      %p229 = scmp.eq.s32.totalorder %s228, 0
      %s231 = sadd.s32 %s230, 1
      %s232 = scalar_select %p229, %s230, %s231
      %p235 = pneg %p229
      %p236 = scmp.eq.s32.totalorder %s15, 3
      %p237 = por %p235, %p236
      %p238 = scmp.ne.s32.totalorder %s230, %s233
      %p239 = scmp.eq.s32.totalorder %s15, 0
      %p240 = por %p238, %p239
      %p241 = scmp.ne.s32.totalorder %s230, %s233
      %p242 = scmp.eq.s32.totalorder %s20, 3
      %p243 = por %p241, %p242
      %p244 = scmp.ne.s32.totalorder %s233, %s234
      %p245 = scmp.eq.s32.totalorder %s20, 0
      %p246 = por %p244, %p245
      %p247 = scmp.ne.s32.totalorder %s233, %s234
      %p248 = scmp.eq.s32.totalorder %s21, 3
      %p249 = por %p247, %p248
      %p251 = scmp.ne.s32.totalorder %s234, %s250
      %p252 = scmp.eq.s32.totalorder %s21, 0
      %p253 = por %p251, %p252
      %p254 = scmp.le.s32.totalorder 1, %s15
      %p255 = scmp.lt.s32.totalorder %s15, 5
      %p256 = pnand %p254, %p255
      %p257 = pneg %p256
      // Predicated region
      $region9: #{inconv_forward.4} parent=5 // pred_check
        _
      $region10: #{inconv_forward.4} parent=5 // pred_check_branch
        %259 = sbr.rel (%p256) target = $region12
      $region11: #{inconv_forward.4} parent=5 // pred_region
        %s260 = ssub.s32 %s15, 1
        // Predicated region
        $region13: #{inconv_forward.4} parent=11 // pred_check
          %p261 = pneg %p148
        $region14: #{inconv_forward.4} parent=11 // pred_check_branch
          %263 = sbr.rel (%p261) target = $region16
        $region15: #{inconv_forward.4} parent=11 // pred_region
          _
        $region16: #{inconv_forward.4} parent=11 // pred_fallthru
          _
        // Predicated region
        $region17: #{inconv_forward.4} parent=11 // pred_check
          %p264 = pneg %p169
        $region18: #{inconv_forward.4} parent=11 // pred_check_branch
          %266 = sbr.rel (%p264) target = $region20
        $region19: #{inconv_forward.4} parent=11 // pred_region
          _
        $region20: #{inconv_forward.4} parent=11 // pred_fallthru
          _
        // Predicated region
        $region21: #{inconv_forward.4} parent=11 // pred_check
          %p267 = pneg %p190
        $region22: #{inconv_forward.4} parent=11 // pred_check_branch
          %269 = sbr.rel (%p267) target = $region24
        $region23: #{inconv_forward.4} parent=11 // pred_region
          %271 = vsyncadd [#allocation4], 0
          %s272 = sshll.u32 %s5, 4
          %s273 = int_to_ptr.hbm [resolvable:$true] %s272
          %s274 = sshll.u32 [#allocation3], 4
          %s275 = int_to_ptr.vmem [resolvable:$true] %s274
          %280 = dma.hbm_to_vmem [thread:$0]  %s273, 9216, %s275, [#allocation4], 64, 64, 4
        $region24: #{inconv_forward.4} parent=11 // pred_fallthru
          _
      $region12: #{inconv_forward.4} parent=5 // pred_fallthru
        _
      %p281 = scmp.lt.s32.totalorder %s15, 4
      // Predicated region
      $region25: #{inconv_forward.4} parent=5 // pred_check
        %p282 = pneg %p281
      $region26: #{inconv_forward.4} parent=5 // pred_check_branch
        %284 = sbr.rel (%p282) target = $region28
      $region27: #{inconv_forward.4} parent=5 // pred_region
        // Predicated region
        $region29: #{inconv_forward.4} parent=27 // pred_check
          %p285 = pneg %p49
        $region30: #{inconv_forward.4} parent=27 // pred_check_branch
          %287 = sbr.rel (%p285) target = $region32
        $region31: #{inconv_forward.4} parent=27 // pred_region
          %s288 = smul.u32 8, %s23
          %p289 = scmp.lt.s32.totalorder %s22, 1
          %s290 = scalar_select %p289, %s22, 1
          %p291 = scmp.lt.s32.totalorder %s288, 15
          %s292 = scalar_select %p291, %s288, 15
          %s293 = smul.addr %s292, 2
          %s294 = smul.addr %s290, 32
          %s295 = sadd.s32 %s293, %s294
          %s296 = smul.addr %s295, 4
          %s297 = scalar_lea.vmem %s0, %s296
          %s298 = smul.u32 8, %s23
        $region32: #{inconv_forward.4} parent=27 // pred_fallthru
          _
        // Predicated region
        $region33: #{inconv_forward.4} parent=27 // pred_check
          %p299 = pneg %p85
        $region34: #{inconv_forward.4} parent=27 // pred_check_branch
          %301 = sbr.rel (%p299) target = $region36
        $region35: #{inconv_forward.4} parent=27 // pred_region
          %s302 = smul.u32 %s23, 8
          %s303 = ssub.s32 %s302, 1
          %p304 = scmp.gt.s32.totalorder %s303, 0
          %s305 = scalar_select %p304, %s303, 0
          %p306 = scmp.lt.s32.totalorder %s22, 1
          %s307 = scalar_select %p306, %s22, 1
          %p308 = scmp.lt.s32.totalorder %s305, 15
          %s309 = scalar_select %p308, %s305, 15
          %s310 = smul.addr %s309, 2
          %s311 = smul.addr %s307, 32
          %s312 = sadd.s32 %s310, %s311
          %s313 = smul.addr %s312, 4
          %s314 = scalar_lea.vmem %s1, %s313
          %s315 = smul.u32 %s23, 8
          %s316 = ssub.s32 %s315, 1
          %p317 = scmp.gt.s32.totalorder %s316, 0
          %s318 = scalar_select %p317, %s316, 0
        $region36: #{inconv_forward.4} parent=27 // pred_fallthru
          _
        // Predicated region
        $region37: #{inconv_forward.4} parent=27 // pred_check
          %p319 = pneg %p121
        $region38: #{inconv_forward.4} parent=27 // pred_check_branch
          %321 = sbr.rel (%p319) target = $region40
        $region39: #{inconv_forward.4} parent=27 // pred_region
          %s322 = smul.u32 %s23, 8
          %s323 = sadd.s32 %s322, 8
          %p324 = scmp.lt.s32.totalorder %s323, 15
          %s325 = scalar_select %p324, %s323, 15
          %p326 = scmp.lt.s32.totalorder %s22, 1
          %s327 = scalar_select %p326, %s22, 1
          %p328 = scmp.lt.s32.totalorder %s325, 15
          %s329 = scalar_select %p328, %s325, 15
          %s330 = smul.addr %s329, 2
          %s331 = smul.addr %s327, 32
          %s332 = sadd.s32 %s330, %s331
          %s333 = smul.addr %s332, 4
          %s334 = scalar_lea.vmem %s2, %s333
          %s335 = smul.u32 %s23, 8
          %s336 = sadd.s32 %s335, 8
          %p337 = scmp.lt.s32.totalorder %s336, 15
          %s338 = scalar_select %p337, %s336, 15
        $region40: #{inconv_forward.4} parent=27 // pred_fallthru
          _
      $region28: #{inconv_forward.4} parent=5 // pred_fallthru
        _
      %p339 = scmp.le.s32.totalorder 1, %s15
      %p340 = scmp.lt.s32.totalorder %s15, 5
      %p341 = pnand %p339, %p340
      %p342 = pneg %p341
      // Predicated region
      $region41: #{inconv_forward.4} parent=5 // pred_check
        _
      $region42: #{inconv_forward.4} parent=5 // pred_check_branch
        %344 = sbr.rel (%p341) target = $region44
      $region43: #{inconv_forward.4} parent=5 // pred_region
        %s345 = ssub.s32 %s15, 1
        // Predicated region
        $region45: #{inconv_forward.4} parent=43 // pred_check
          %p346 = pneg %p190
        $region46: #{inconv_forward.4} parent=43 // pred_check_branch
          %348 = sbr.rel (%p346) target = $region48
        $region47: #{inconv_forward.4} parent=43 // pred_region
          %350 = dma.done [#allocation4], 9216
        $region48: #{inconv_forward.4} parent=43 // pred_fallthru
          _
        %s351 = smul.u32 8, %s25
        %p352 = scmp.lt.s32.totalorder %s24, 1
        %s353 = scalar_select %p352, %s24, 1
        %p354 = scmp.lt.s32.totalorder %s351, 15
        %s355 = scalar_select %p354, %s351, 15
        %s356 = smul.addr %s355, 2
        %s357 = smul.addr %s353, 32
        %s358 = sadd.s32 %s356, %s357
        %s359 = smul.addr %s358, 4
        %s360 = scalar_lea.vmem %s0, %s359
        %p361 = pneg %p55
        %p362 = pneg %p52
        %s363 = smul.u32 %s25, 8
        %s364 = ssub.s32 %s363, 1
        %p365 = scmp.gt.s32.totalorder %s364, 0
        %s366 = scalar_select %p365, %s364, 0
        %p367 = scmp.lt.s32.totalorder %s24, 1
        %s368 = scalar_select %p367, %s24, 1
        %p369 = scmp.lt.s32.totalorder %s366, 15
        %s370 = scalar_select %p369, %s366, 15
        %s371 = smul.addr %s370, 2
        %s372 = smul.addr %s368, 32
        %s373 = sadd.s32 %s371, %s372
        %s374 = smul.addr %s373, 4
        %s375 = scalar_lea.vmem %s1, %s374
        %p376 = pneg %p91
        %p377 = pneg %p88
        %s378 = smul.u32 %s25, 8
        %s379 = sadd.s32 %s378, 8
        %p380 = scmp.lt.s32.totalorder %s379, 15
        %s381 = scalar_select %p380, %s379, 15
        %p382 = scmp.lt.s32.totalorder %s24, 1
        %s383 = scalar_select %p382, %s24, 1
        %p384 = scmp.lt.s32.totalorder %s381, 15
        %s385 = scalar_select %p384, %s381, 15
        %s386 = smul.addr %s385, 2
        %s387 = smul.addr %s383, 32
        %s388 = sadd.s32 %s386, %s387
        %s389 = smul.addr %s388, 4
        %s390 = scalar_lea.vmem %s2, %s389
        %p391 = pneg %p127
        %p392 = pneg %p124
        %p393 = pneg %p148
        %p394 = pneg %p145
        %p395 = pneg %p169
        %p396 = pneg %p166
        %p397 = pneg %p190
        %p398 = pneg %p187
        %p399 = pneg %p218
        %p400 = pneg %p215
        %s401 = smul.u32 8, %s25
        %p402 = scmp.lt.s32.totalorder %s24, 1
        %s403 = scalar_select %p402, %s24, 1
        %p404 = scmp.lt.s32.totalorder %s401, 15
        %s405 = scalar_select %p404, %s401, 15
        %s406 = smul.addr %s405, 2
        %s407 = smul.addr %s403, 32
        %s408 = sadd.s32 %s406, %s407
        %s409 = smul.addr %s408, 4
        %s410 = scalar_lea.vmem %s6, %s409
        %p411 = pneg %p246
        %p412 = pneg %p243
        %p413 = scmp.lt.s32.totalorder %s24, 1
        %s414 = scalar_select %p413, %s24, 1
        %p415 = scmp.lt.s32.totalorder %s25, 1
        %s416 = scalar_select %p415, %s25, 1
        %s417 = smul.addr %s414, 2
        %s418 = sadd.s32 %s416, %s417
        %s419 = smul.addr %s418, 8
        %s420 = scalar_lea.vmem %s7, %s419
        %s421 = smul.u32 8, %s25
        %p422 = scmp.lt.s32.totalorder %s24, 1
        %s423 = scalar_select %p422, %s24, 1
        %p424 = scmp.lt.s32.totalorder %s421, 15
        %s425 = scalar_select %p424, %s421, 15
        %s426 = smul.addr %s425, 2
        %s427 = smul.addr %s423, 32
        %s428 = sadd.s32 %s426, %s427
        %s429 = smul.addr %s428, 4
        %s430 = scalar_lea.vmem %s0, %s429
        %s431 = smul.u32 8, %s25
        %s432 = smul.u32 %s25, 8
        %s433 = ssub.s32 %s432, 1
        %p434 = scmp.gt.s32.totalorder %s433, 0
        %s435 = scalar_select %p434, %s433, 0
        %p436 = scmp.lt.s32.totalorder %s24, 1
        %s437 = scalar_select %p436, %s24, 1
        %p438 = scmp.lt.s32.totalorder %s435, 15
        %s439 = scalar_select %p438, %s435, 15
        %s440 = smul.addr %s439, 2
        %s441 = smul.addr %s437, 32
        %s442 = sadd.s32 %s440, %s441
        %s443 = smul.addr %s442, 4
        %s444 = scalar_lea.vmem %s1, %s443
        %s445 = smul.u32 %s25, 8
        %s446 = ssub.s32 %s445, 1
        %p447 = scmp.gt.s32.totalorder %s446, 0
        %s448 = scalar_select %p447, %s446, 0
        %s449 = smul.u32 %s25, 8
        %s450 = sadd.s32 %s449, 8
        %p451 = scmp.lt.s32.totalorder %s450, 15
        %s452 = scalar_select %p451, %s450, 15
        %p453 = scmp.lt.s32.totalorder %s24, 1
        %s454 = scalar_select %p453, %s24, 1
        %p455 = scmp.lt.s32.totalorder %s452, 15
        %s456 = scalar_select %p455, %s452, 15
        %s457 = smul.addr %s456, 2
        %s458 = smul.addr %s454, 32
        %s459 = sadd.s32 %s457, %s458
        %s460 = smul.addr %s459, 4
        %s461 = scalar_lea.vmem %s2, %s460
        %s462 = smul.u32 %s25, 8
        %s463 = sadd.s32 %s462, 8
        %p464 = scmp.lt.s32.totalorder %s463, 15
        %s465 = scalar_select %p464, %s463, 15
        %s466 = smul.u32 8, %s25
        %p467 = scmp.lt.s32.totalorder %s24, 1
        %s468 = scalar_select %p467, %s24, 1
        %p469 = scmp.lt.s32.totalorder %s466, 15
        %s470 = scalar_select %p469, %s466, 15
        %s471 = smul.addr %s470, 2
        %s472 = smul.addr %s468, 32
        %s473 = sadd.s32 %s471, %s472
        %s474 = smul.addr %s473, 4
        %s475 = scalar_lea.vmem %s6, %s474
        %s476 = smul.u32 8, %s25
        %p477 = scmp.lt.s32.totalorder %s24, 1
        %s478 = scalar_select %p477, %s24, 1
        %p479 = scmp.lt.s32.totalorder %s25, 1
        %s480 = scalar_select %p479, %s25, 1
        %s481 = smul.addr %s478, 2
        %s482 = sadd.s32 %s480, %s481
        %s483 = smul.addr %s482, 8
        %s484 = scalar_lea.vmem %s7, %s483
        %v486 = vld [vmem:[%s3] sm:$0x1]
        %v487 = vld [vmem:[%s4] sm:$0x1]
        %v488 = vld [vmem:[%s444] sm:$0xf]
        %v489 = vld [vmem:[%s444 + $0x4] sm:$0xf]
        %v490 = vunpack.c.l.bf16 %v488
        %v491 = vunpack.c.l.bf16 %v489
        %v493 = vperm.slane %v486, 0
        %v495 = vmul.f32 %v490, %v493
        %v496 = vmul.f32 %v491, %v493
        %v498 = vperm.slane %v487, 0
        %v500 = vadd.f32 %v495, %v498
        %v501 = vadd.f32 %v496, %v498
        %v502 = vmax.f32 %v500, 0.0
        %v503 = vmax.f32 %v501, 0.0
        %v504 = vpack.c.bf16 %v502, %v502
        %v505 = vpack.c.bf16 %v503, %v503
        %p506 = scmp.eq.s32.totalorder %s25, 0
        %s507 = scalar_select %p506, 1, 0
        %v508 = vstv %s507
        %vm509 = vcmp.eq.s32.totalorder %v508, 1
        %v510 = vsel %vm509, 0, %v504
        %v511 = vsel %vm509, 0, %v505
        %v512 = vld [vmem:[%s461] sm:$0xf]
        %v513 = vld [vmem:[%s461 + $0x4] sm:$0xf]
        %v514 = vunpack.c.l.bf16 %v512
        %v515 = vunpack.c.l.bf16 %v513
        %v516 = vmul.f32 %v514, %v493
        %v517 = vmul.f32 %v515, %v493
        %v518 = vadd.f32 %v516, %v498
        %v519 = vadd.f32 %v517, %v498
        %v520 = vmax.f32 %v518, 0.0
        %v521 = vmax.f32 %v519, 0.0
        %v522 = vpack.c.bf16 %v520, %v520
        %v523 = vpack.c.bf16 %v521, %v521
        %p524 = scmp.eq.s32.totalorder %s25, 1
        %s525 = scalar_select %p524, 1, 0
        %v526 = vstv %s525
        %vm527 = vcmp.eq.s32.totalorder %v526, 1
        %v528 = vsel %vm527, 0, %v522
        %v529 = vsel %vm527, 0, %v523
        %v530 = vld [vmem:[%s430] sm:$0xf]
        %v531 = vld [vmem:[%s430 + $0x4] sm:$0xf]
        %v532 = vld [vmem:[%s430 + $0x8] sm:$0xf]
        %v533 = vld [vmem:[%s430 + $0xc] sm:$0xf]
        %v534 = vld [vmem:[%s430 + $0x10] sm:$0xf]
        %v535 = vld [vmem:[%s430 + $0x14] sm:$0xf]
        %v536 = vld [vmem:[%s430 + $0x18] sm:$0xf]
        %v537 = vld [vmem:[%s430 + $0x1c] sm:$0xf]
        %v538 = vld [vmem:[%s430 + $0x20] sm:$0xf]
        %v539 = vld [vmem:[%s430 + $0x24] sm:$0xf]
        %v540 = vld [vmem:[%s430 + $0x28] sm:$0xf]
        %v541 = vld [vmem:[%s430 + $0x2c] sm:$0xf]
        %v542 = vld [vmem:[%s430 + $0x30] sm:$0xf]
        %v543 = vld [vmem:[%s430 + $0x34] sm:$0xf]
        %v544 = vld [vmem:[%s430 + $0x38] sm:$0xf]
        %v545 = vld [vmem:[%s430 + $0x3c] sm:$0xf]
        %v546 = vunpack.c.l.bf16 %v530
        %v547 = vunpack.c.l.bf16 %v531
        %v548 = vunpack.c.l.bf16 %v532
        %v549 = vunpack.c.l.bf16 %v533
        %v550 = vunpack.c.l.bf16 %v534
        %v551 = vunpack.c.l.bf16 %v535
        %v552 = vunpack.c.l.bf16 %v536
        %v553 = vunpack.c.l.bf16 %v537
        %v554 = vunpack.c.l.bf16 %v538
        %v555 = vunpack.c.l.bf16 %v539
        %v556 = vunpack.c.l.bf16 %v540
        %v557 = vunpack.c.l.bf16 %v541
        %v558 = vunpack.c.l.bf16 %v542
        %v559 = vunpack.c.l.bf16 %v543
        %v560 = vunpack.c.l.bf16 %v544
        %v561 = vunpack.c.l.bf16 %v545
        %v562 = vmul.f32 %v546, %v493
        %v563 = vmul.f32 %v547, %v493
        %v564 = vmul.f32 %v548, %v493
        %v565 = vmul.f32 %v549, %v493
        %v566 = vmul.f32 %v550, %v493
        %v567 = vmul.f32 %v551, %v493
        %v568 = vmul.f32 %v552, %v493
        %v569 = vmul.f32 %v553, %v493
        %v570 = vmul.f32 %v554, %v493
        %v571 = vmul.f32 %v555, %v493
        %v572 = vmul.f32 %v556, %v493
        %v573 = vmul.f32 %v557, %v493
        %v574 = vmul.f32 %v558, %v493
        %v575 = vmul.f32 %v559, %v493
        %v576 = vmul.f32 %v560, %v493
        %v577 = vmul.f32 %v561, %v493
        %v578 = vadd.f32 %v562, %v498
        %v579 = vadd.f32 %v563, %v498
        %v580 = vadd.f32 %v564, %v498
        %v581 = vadd.f32 %v565, %v498
        %v582 = vadd.f32 %v566, %v498
        %v583 = vadd.f32 %v567, %v498
        %v584 = vadd.f32 %v568, %v498
        %v585 = vadd.f32 %v569, %v498
        %v586 = vadd.f32 %v570, %v498
        %v587 = vadd.f32 %v571, %v498
        %v588 = vadd.f32 %v572, %v498
        %v589 = vadd.f32 %v573, %v498
        %v590 = vadd.f32 %v574, %v498
        %v591 = vadd.f32 %v575, %v498
        %v592 = vadd.f32 %v576, %v498
        %v593 = vadd.f32 %v577, %v498
        %v594 = vmax.f32 %v578, 0.0
        %v595 = vmax.f32 %v579, 0.0
        %v596 = vmax.f32 %v580, 0.0
        %v597 = vmax.f32 %v581, 0.0
        %v598 = vmax.f32 %v582, 0.0
        %v599 = vmax.f32 %v583, 0.0
        %v600 = vmax.f32 %v584, 0.0
        %v601 = vmax.f32 %v585, 0.0
        %v602 = vmax.f32 %v586, 0.0
        %v603 = vmax.f32 %v587, 0.0
        %v604 = vmax.f32 %v588, 0.0
        %v605 = vmax.f32 %v589, 0.0
        %v606 = vmax.f32 %v590, 0.0
        %v607 = vmax.f32 %v591, 0.0
        %v608 = vmax.f32 %v592, 0.0
        %v609 = vmax.f32 %v593, 0.0
        %v610 = vpack.c.bf16 %v594, %v594
        %v611 = vpack.c.bf16 %v595, %v595
        %v612 = vpack.c.bf16 %v596, %v596
        %v613 = vpack.c.bf16 %v597, %v597
        %v614 = vpack.c.bf16 %v598, %v598
        %v615 = vpack.c.bf16 %v599, %v599
        %v616 = vpack.c.bf16 %v600, %v600
        %v617 = vpack.c.bf16 %v601, %v601
        %v618 = vpack.c.bf16 %v602, %v602
        %v619 = vpack.c.bf16 %v603, %v603
        %v620 = vpack.c.bf16 %v604, %v604
        %v621 = vpack.c.bf16 %v605, %v605
        %v622 = vpack.c.bf16 %v606, %v606
        %v623 = vpack.c.bf16 %v607, %v607
        %v624 = vpack.c.bf16 %v608, %v608
        %v625 = vpack.c.bf16 %v609, %v609
        %vm626 = vcmask 1040384
        %vm627 = vsmask.f32 256
        %vm628 = vmand %vm626, %vm627
        %v629 = vld [vmem:[#allocation2] sm:$0x1]
        %v630 = vsel %vm628, 0, %v629
        %631 = vst [vmem:[#allocation2] sm:$0x1] %v630
        %v632 = vld [vmem:[#allocation2 + $0xc] sm:$0x1]
        %v633 = vsel %vm628, 0, %v632
        %634 = vst [vmem:[#allocation2 + $0xc] sm:$0x1] %v633
        %v635 = vld [vmem:[#allocation2 + $0x18] sm:$0x1]
        %v636 = vsel %vm628, 0, %v635
        %637 = vst [vmem:[#allocation2 + $0x18] sm:$0x1] %v636
        %v638 = vld [vmem:[#allocation2 + $0x24] sm:$0x1]
        %v639 = vsel %vm628, 0, %v638
        %640 = vst [vmem:[#allocation2 + $0x24] sm:$0x1] %v639
        %v641 = vld [vmem:[#allocation2 + $0x30] sm:$0x1]
        %v642 = vsel %vm628, 0, %v641
        %643 = vst [vmem:[#allocation2 + $0x30] sm:$0x1] %v642
        %v644 = vld [vmem:[#allocation2 + $0x3c] sm:$0x1]
        %v645 = vsel %vm628, 0, %v644
        %646 = vst [vmem:[#allocation2 + $0x3c] sm:$0x1] %v645
        %v647 = vld [vmem:[#allocation2 + $0x48] sm:$0x1]
        %v648 = vsel %vm628, 0, %v647
        %649 = vst [vmem:[#allocation2 + $0x48] sm:$0x1] %v648
        %v650 = vld [vmem:[#allocation2 + $0x54] sm:$0x1]
        %v651 = vsel %vm628, 0, %v650
        %652 = vst [vmem:[#allocation2 + $0x54] sm:$0x1] %v651
        %v653 = vld [vmem:[#allocation2 + $0x60] sm:$0x1]
        %v654 = vsel %vm628, 0, %v653
        %655 = vst [vmem:[#allocation2 + $0x60] sm:$0x1] %v654
        %v656 = vld [vmem:[#allocation2 + $0x6c] sm:$0x1]
        %v657 = vsel %vm628, 0, %v656
        %658 = vst [vmem:[#allocation2 + $0x6c] sm:$0x1] %v657
        %vm659 = vsmask.f32 7938
        %vm660 = vmand %vm626, %vm659
        %v661 = vld [vmem:[#allocation2 + $0x8] sm:$0x1]
        %v662 = vsel %vm660, 0, %v661
        %663 = vst [vmem:[#allocation2 + $0x8] sm:$0x1] %v662
        %v664 = vld [vmem:[#allocation2 + $0x14] sm:$0x1]
        %v665 = vsel %vm660, 0, %v664
        %666 = vst [vmem:[#allocation2 + $0x14] sm:$0x1] %v665
        %v667 = vld [vmem:[#allocation2 + $0x20] sm:$0x1]
        %v668 = vsel %vm660, 0, %v667
        %669 = vst [vmem:[#allocation2 + $0x20] sm:$0x1] %v668
        %v670 = vld [vmem:[#allocation2 + $0x2c] sm:$0x1]
        %v671 = vsel %vm660, 0, %v670
        %672 = vst [vmem:[#allocation2 + $0x2c] sm:$0x1] %v671
        %v673 = vld [vmem:[#allocation2 + $0x38] sm:$0x1]
        %v674 = vsel %vm660, 0, %v673
        %675 = vst [vmem:[#allocation2 + $0x38] sm:$0x1] %v674
        %v676 = vld [vmem:[#allocation2 + $0x44] sm:$0x1]
        %v677 = vsel %vm660, 0, %v676
        %678 = vst [vmem:[#allocation2 + $0x44] sm:$0x1] %v677
        %v679 = vld [vmem:[#allocation2 + $0x50] sm:$0x1]
        %v680 = vsel %vm660, 0, %v679
        %681 = vst [vmem:[#allocation2 + $0x50] sm:$0x1] %v680
        %v682 = vld [vmem:[#allocation2 + $0x5c] sm:$0x1]
        %v683 = vsel %vm660, 0, %v682
        %684 = vst [vmem:[#allocation2 + $0x5c] sm:$0x1] %v683
        %v685 = vld [vmem:[#allocation2 + $0x68] sm:$0x1]
        %v686 = vsel %vm660, 0, %v685
        %687 = vst [vmem:[#allocation2 + $0x68] sm:$0x1] %v686
        %v688 = vld [vmem:[#allocation2 + $0x74] sm:$0x1]
        %v689 = vsel %vm660, 0, %v688
        %690 = vst [vmem:[#allocation2 + $0x74] sm:$0x1] %v689
        %vm691 = vsmask.f32 4368
        %vm692 = vmor %vm627, %vm691
        %v694 = vshrl.u32 %v510, 16
        %v696 = vrot.slane %v694, 7
        %v697 = vshll.u32 %v510, 16
        %v699 = vor.u32 %v696, %v697
        %v700 = vrot.slane %v696, 4
        %v702 = vshrl.u32 %v511, 16
        %v704 = vrot.slane %v702, 7
        %v705 = vshll.u32 %v511, 16
        %v707 = vor.u32 %v704, %v705
        %v708 = vsel %vm692, %v700, %v707
        %v709 = vrot.slane %v704, 4
        %vm713 = vcmask 1043456
        %vm714 = vmand %vm713, %vm659
        %v715 = vld [vmem:[#allocation2] sm:$0xf]
        %v716 = vsel %vm714, %v699, %v715
        %717 = vst [vmem:[#allocation2] sm:$0xf] %v716
        %718 = vst [vmem:[#allocation2 + $0x4] sm:$0xf] %v708
        %v719 = vld [vmem:[#allocation2 + $0x8] sm:$0x1]
        %v720 = vsel %vm628, %v709, %v719
        %721 = vst [vmem:[#allocation2 + $0x8] sm:$0x1] %v720
        %v723 = vshrl.u32 %v610, 16
        %v725 = vrot.slane %v723, 7
        %v726 = vshll.u32 %v610, 16
        %v728 = vor.u32 %v725, %v726
        %v729 = vrot.slane %v725, 4
        %v731 = vshrl.u32 %v611, 16
        %v733 = vrot.slane %v731, 7
        %v734 = vshll.u32 %v611, 16
        %v736 = vor.u32 %v733, %v734
        %v737 = vsel %vm692, %v729, %v736
        %v738 = vrot.slane %v733, 4
        %v740 = vshrl.u32 %v612, 16
        %v742 = vrot.slane %v740, 7
        %v743 = vshll.u32 %v612, 16
        %v745 = vor.u32 %v742, %v743
        %v746 = vrot.slane %v742, 4
        %v748 = vshrl.u32 %v613, 16
        %v750 = vrot.slane %v748, 7
        %v751 = vshll.u32 %v613, 16
        %v753 = vor.u32 %v750, %v751
        %v754 = vsel %vm692, %v746, %v753
        %v755 = vrot.slane %v750, 4
        %v757 = vshrl.u32 %v614, 16
        %v759 = vrot.slane %v757, 7
        %v760 = vshll.u32 %v614, 16
        %v762 = vor.u32 %v759, %v760
        %v763 = vrot.slane %v759, 4
        %v765 = vshrl.u32 %v615, 16
        %v767 = vrot.slane %v765, 7
        %v768 = vshll.u32 %v615, 16
        %v770 = vor.u32 %v767, %v768
        %v771 = vsel %vm692, %v763, %v770
        %v772 = vrot.slane %v767, 4
        %v774 = vshrl.u32 %v616, 16
        %v776 = vrot.slane %v774, 7
        %v777 = vshll.u32 %v616, 16
        %v779 = vor.u32 %v776, %v777
        %v780 = vrot.slane %v776, 4
        %v782 = vshrl.u32 %v617, 16
        %v784 = vrot.slane %v782, 7
        %v785 = vshll.u32 %v617, 16
        %v787 = vor.u32 %v784, %v785
        %v788 = vsel %vm692, %v780, %v787
        %v789 = vrot.slane %v784, 4
        %v791 = vshrl.u32 %v618, 16
        %v793 = vrot.slane %v791, 7
        %v794 = vshll.u32 %v618, 16
        %v796 = vor.u32 %v793, %v794
        %v797 = vrot.slane %v793, 4
        %v799 = vshrl.u32 %v619, 16
        %v801 = vrot.slane %v799, 7
        %v802 = vshll.u32 %v619, 16
        %v804 = vor.u32 %v801, %v802
        %v805 = vsel %vm692, %v797, %v804
        %v806 = vrot.slane %v801, 4
        %v808 = vshrl.u32 %v620, 16
        %v810 = vrot.slane %v808, 7
        %v811 = vshll.u32 %v620, 16
        %v813 = vor.u32 %v810, %v811
        %v814 = vrot.slane %v810, 4
        %v816 = vshrl.u32 %v621, 16
        %v818 = vrot.slane %v816, 7
        %v819 = vshll.u32 %v621, 16
        %v821 = vor.u32 %v818, %v819
        %v822 = vsel %vm692, %v814, %v821
        %v823 = vrot.slane %v818, 4
        %v825 = vshrl.u32 %v622, 16
        %v827 = vrot.slane %v825, 7
        %v828 = vshll.u32 %v622, 16
        %v830 = vor.u32 %v827, %v828
        %v831 = vrot.slane %v827, 4
        %v833 = vshrl.u32 %v623, 16
        %v835 = vrot.slane %v833, 7
        %v836 = vshll.u32 %v623, 16
        %v838 = vor.u32 %v835, %v836
        %v839 = vsel %vm692, %v831, %v838
        %v840 = vrot.slane %v835, 4
        %v842 = vshrl.u32 %v624, 16
        %v844 = vrot.slane %v842, 7
        %v845 = vshll.u32 %v624, 16
        %v847 = vor.u32 %v844, %v845
        %v848 = vrot.slane %v844, 4
        %v850 = vshrl.u32 %v625, 16
        %v852 = vrot.slane %v850, 7
        %v853 = vshll.u32 %v625, 16
        %v855 = vor.u32 %v852, %v853
        %v856 = vsel %vm692, %v848, %v855
        %v857 = vrot.slane %v852, 4
        %s882 = scalar_lea.vmem [#allocation2], 12
        %v883 = vld [vmem:[%s882] sm:$0xf]
        %v884 = vsel %vm714, %v728, %v883
        %885 = vst [vmem:[%s882] sm:$0xf] %v884
        %886 = vst [vmem:[%s882 + $0x4] sm:$0xf] %v737
        %v887 = vld [vmem:[%s882 + $0x8] sm:$0x1]
        %v888 = vsel %vm628, %v738, %v887
        %889 = vst [vmem:[%s882 + $0x8] sm:$0x1] %v888
        %v890 = vld [vmem:[%s882 + $0xc] sm:$0xf]
        %v891 = vsel %vm714, %v745, %v890
        %892 = vst [vmem:[%s882 + $0xc] sm:$0xf] %v891
        %893 = vst [vmem:[%s882 + $0x10] sm:$0xf] %v754
        %v894 = vld [vmem:[%s882 + $0x14] sm:$0x1]
        %v895 = vsel %vm628, %v755, %v894
        %896 = vst [vmem:[%s882 + $0x14] sm:$0x1] %v895
        %v897 = vld [vmem:[%s882 + $0x18] sm:$0xf]
        %v898 = vsel %vm714, %v762, %v897
        %899 = vst [vmem:[%s882 + $0x18] sm:$0xf] %v898
        %900 = vst [vmem:[%s882 + $0x1c] sm:$0xf] %v771
        %v901 = vld [vmem:[%s882 + $0x20] sm:$0x1]
        %v902 = vsel %vm628, %v772, %v901
        %903 = vst [vmem:[%s882 + $0x20] sm:$0x1] %v902
        %v904 = vld [vmem:[%s882 + $0x24] sm:$0xf]
        %v905 = vsel %vm714, %v779, %v904
        %906 = vst [vmem:[%s882 + $0x24] sm:$0xf] %v905
        %907 = vst [vmem:[%s882 + $0x28] sm:$0xf] %v788
        %v908 = vld [vmem:[%s882 + $0x2c] sm:$0x1]
        %v909 = vsel %vm628, %v789, %v908
        %910 = vst [vmem:[%s882 + $0x2c] sm:$0x1] %v909
        %v911 = vld [vmem:[%s882 + $0x30] sm:$0xf]
        %v912 = vsel %vm714, %v796, %v911
        %913 = vst [vmem:[%s882 + $0x30] sm:$0xf] %v912
        %914 = vst [vmem:[%s882 + $0x34] sm:$0xf] %v805
        %v915 = vld [vmem:[%s882 + $0x38] sm:$0x1]
        %v916 = vsel %vm628, %v806, %v915
        %917 = vst [vmem:[%s882 + $0x38] sm:$0x1] %v916
        %v918 = vld [vmem:[%s882 + $0x3c] sm:$0xf]
        %v919 = vsel %vm714, %v813, %v918
        %920 = vst [vmem:[%s882 + $0x3c] sm:$0xf] %v919
        %921 = vst [vmem:[%s882 + $0x40] sm:$0xf] %v822
        %v922 = vld [vmem:[%s882 + $0x44] sm:$0x1]
        %v923 = vsel %vm628, %v823, %v922
        %924 = vst [vmem:[%s882 + $0x44] sm:$0x1] %v923
        %v925 = vld [vmem:[%s882 + $0x48] sm:$0xf]
        %v926 = vsel %vm714, %v830, %v925
        %927 = vst [vmem:[%s882 + $0x48] sm:$0xf] %v926
        %928 = vst [vmem:[%s882 + $0x4c] sm:$0xf] %v839
        %v929 = vld [vmem:[%s882 + $0x50] sm:$0x1]
        %v930 = vsel %vm628, %v840, %v929
        %931 = vst [vmem:[%s882 + $0x50] sm:$0x1] %v930
        %v932 = vld [vmem:[%s882 + $0x54] sm:$0xf]
        %v933 = vsel %vm714, %v847, %v932
        %934 = vst [vmem:[%s882 + $0x54] sm:$0xf] %v933
        %935 = vst [vmem:[%s882 + $0x58] sm:$0xf] %v856
        %v936 = vld [vmem:[%s882 + $0x5c] sm:$0x1]
        %v937 = vsel %vm628, %v857, %v936
        %938 = vst [vmem:[%s882 + $0x5c] sm:$0x1] %v937
        %v940 = vshrl.u32 %v528, 16
        %v942 = vrot.slane %v940, 7
        %v943 = vshll.u32 %v528, 16
        %v945 = vor.u32 %v942, %v943
        %v946 = vrot.slane %v942, 4
        %v948 = vshrl.u32 %v529, 16
        %v950 = vrot.slane %v948, 7
        %v951 = vshll.u32 %v529, 16
        %v953 = vor.u32 %v950, %v951
        %v954 = vsel %vm692, %v946, %v953
        %v955 = vrot.slane %v950, 4
        %s959 = scalar_lea.vmem [#allocation2], 108
        %v960 = vld [vmem:[%s959] sm:$0xf]
        %v961 = vsel %vm714, %v945, %v960
        %962 = vst [vmem:[%s959] sm:$0xf] %v961
        %963 = vst [vmem:[%s959 + $0x4] sm:$0xf] %v954
        %v964 = vld [vmem:[%s959 + $0x8] sm:$0x1]
        %v965 = vsel %vm628, %v955, %v964
        %966 = vst [vmem:[%s959 + $0x8] sm:$0x1] %v965
        %v967 = vld [vmem:[#allocation2] sm:$0xf]
        %v968 = vld [vmem:[#allocation2 + $0x4] sm:$0xf]
        %v969 = vld [vmem:[#allocation2 + $0x8] sm:$0x1]
        %v970 = vld [vmem:[#allocation2 + $0xc] sm:$0xf]
        %v971 = vld [vmem:[#allocation2 + $0x10] sm:$0xf]
        %v972 = vld [vmem:[#allocation2 + $0x14] sm:$0x1]
        %v973 = vld [vmem:[#allocation2 + $0x18] sm:$0xf]
        %v974 = vld [vmem:[#allocation2 + $0x1c] sm:$0xf]
        %v975 = vld [vmem:[#allocation2 + $0x20] sm:$0x1]
        %v976 = vld [vmem:[#allocation2 + $0x24] sm:$0xf]
        %v977 = vld [vmem:[#allocation2 + $0x28] sm:$0xf]
        %v978 = vld [vmem:[#allocation2 + $0x2c] sm:$0x1]
        %v979 = vld [vmem:[#allocation2 + $0x30] sm:$0xf]
        %v980 = vld [vmem:[#allocation2 + $0x34] sm:$0xf]
        %v981 = vld [vmem:[#allocation2 + $0x38] sm:$0x1]
        %v982 = vld [vmem:[#allocation2 + $0x3c] sm:$0xf]
        %v983 = vld [vmem:[#allocation2 + $0x40] sm:$0xf]
        %v984 = vld [vmem:[#allocation2 + $0x44] sm:$0x1]
        %v985 = vld [vmem:[#allocation2 + $0x48] sm:$0xf]
        %v986 = vld [vmem:[#allocation2 + $0x4c] sm:$0xf]
        %v987 = vld [vmem:[#allocation2 + $0x50] sm:$0x1]
        %v988 = vld [vmem:[#allocation2 + $0x54] sm:$0xf]
        %v989 = vld [vmem:[#allocation2 + $0x58] sm:$0xf]
        %v990 = vld [vmem:[#allocation2 + $0x5c] sm:$0x1]
        %v1007 = vunpack.c.l.b16 %v967
        %v1008 = vunpack.c.l.b16 %v968
        %v1009 = vunpack.c.l.b16 %v970
        %v1010 = vunpack.c.l.b16 %v971
        %v1011 = vunpack.c.l.b16 %v973
        %v1012 = vunpack.c.l.b16 %v974
        %v1013 = vunpack.c.l.b16 %v976
        %v1014 = vunpack.c.l.b16 %v977
        %v1015 = vunpack.c.l.b16 %v979
        %v1016 = vunpack.c.l.b16 %v980
        %v1017 = vunpack.c.l.b16 %v982
        %v1018 = vunpack.c.l.b16 %v983
        %v1019 = vunpack.c.l.b16 %v985
        %v1020 = vunpack.c.l.b16 %v986
        %v1021 = vunpack.c.l.b16 %v988
        %v1022 = vunpack.c.l.b16 %v989
        %v1023 = vpack.c.b16 %v1008, %v1007
        %v1024 = vpack.c.b16 %v1010, %v1009
        %v1025 = vpack.c.b16 %v1012, %v1011
        %v1026 = vpack.c.b16 %v1014, %v1013
        %v1027 = vpack.c.b16 %v1016, %v1015
        %v1028 = vpack.c.b16 %v1018, %v1017
        %v1029 = vpack.c.b16 %v1020, %v1019
        %v1030 = vpack.c.b16 %v1022, %v1021
        %v1047 = vunpack.c.l.b16 %v969
        %v1048 = vunpack.c.l.b16 %v972
        %v1049 = vunpack.c.l.b16 %v975
        %v1050 = vunpack.c.l.b16 %v978
        %v1051 = vunpack.c.l.b16 %v981
        %v1052 = vunpack.c.l.b16 %v984
        %v1053 = vunpack.c.l.b16 %v987
        %v1054 = vunpack.c.l.b16 %v990
        %v1055 = vpack.c.b16 %v1047, %v1047
        %v1056 = vpack.c.b16 %v1048, %v1048
        %v1057 = vpack.c.b16 %v1049, %v1049
        %v1058 = vpack.c.b16 %v1050, %v1050
        %v1059 = vpack.c.b16 %v1051, %v1051
        %v1060 = vpack.c.b16 %v1052, %v1052
        %v1061 = vpack.c.b16 %v1053, %v1053
        %v1062 = vpack.c.b16 %v1054, %v1054
        %vm1063 = vsmask.f32 7424
        %v1065 = vshrl.u32 %v1023, 16
        %v1067 = vshll.u32 %v1023, 16
        %v1069 = vrot.slane %v1067, 1
        %v1070 = vor.u32 %v1065, %v1069
        %v1072 = vshll.u32 %v1055, 16
        %v1074 = vrot.slane %v1072, 1
        %v1075 = vsel %vm1063, %v1070, %v1074
        %v1077 = vshrl.u32 %v1024, 16
        %v1079 = vshll.u32 %v1024, 16
        %v1081 = vrot.slane %v1079, 1
        %v1082 = vor.u32 %v1077, %v1081
        %v1084 = vshll.u32 %v1056, 16
        %v1086 = vrot.slane %v1084, 1
        %v1087 = vsel %vm1063, %v1082, %v1086
        %v1089 = vshrl.u32 %v1025, 16
        %v1091 = vshll.u32 %v1025, 16
        %v1093 = vrot.slane %v1091, 1
        %v1094 = vor.u32 %v1089, %v1093
        %v1096 = vshll.u32 %v1057, 16
        %v1098 = vrot.slane %v1096, 1
        %v1099 = vsel %vm1063, %v1094, %v1098
        %v1101 = vshrl.u32 %v1026, 16
        %v1103 = vshll.u32 %v1026, 16
        %v1105 = vrot.slane %v1103, 1
        %v1106 = vor.u32 %v1101, %v1105
        %v1108 = vshll.u32 %v1058, 16
        %v1110 = vrot.slane %v1108, 1
        %v1111 = vsel %vm1063, %v1106, %v1110
        %v1113 = vshrl.u32 %v1027, 16
        %v1115 = vshll.u32 %v1027, 16
        %v1117 = vrot.slane %v1115, 1
        %v1118 = vor.u32 %v1113, %v1117
        %v1120 = vshll.u32 %v1059, 16
        %v1122 = vrot.slane %v1120, 1
        %v1123 = vsel %vm1063, %v1118, %v1122
        %v1125 = vshrl.u32 %v1028, 16
        %v1127 = vshll.u32 %v1028, 16
        %v1129 = vrot.slane %v1127, 1
        %v1130 = vor.u32 %v1125, %v1129
        %v1132 = vshll.u32 %v1060, 16
        %v1134 = vrot.slane %v1132, 1
        %v1135 = vsel %vm1063, %v1130, %v1134
        %v1137 = vshrl.u32 %v1029, 16
        %v1139 = vshll.u32 %v1029, 16
        %v1141 = vrot.slane %v1139, 1
        %v1142 = vor.u32 %v1137, %v1141
        %v1144 = vshll.u32 %v1061, 16
        %v1146 = vrot.slane %v1144, 1
        %v1147 = vsel %vm1063, %v1142, %v1146
        %v1149 = vshrl.u32 %v1030, 16
        %v1151 = vshll.u32 %v1030, 16
        %v1153 = vrot.slane %v1151, 1
        %v1154 = vor.u32 %v1149, %v1153
        %v1156 = vshll.u32 %v1062, 16
        %v1158 = vrot.slane %v1156, 1
        %v1159 = vsel %vm1063, %v1154, %v1158
        %vm1168 = vcmask 1046528
        %v1169 = vrot.slane %v1023, 1
        %v1170 = vrot.slane %v1055, 1
        %v1171 = vsel %vm1168, %v1169, %v1170
        %v1172 = vrot.slane %v1024, 1
        %v1173 = vrot.slane %v1056, 1
        %v1174 = vsel %vm1168, %v1172, %v1173
        %v1175 = vrot.slane %v1025, 1
        %v1176 = vrot.slane %v1057, 1
        %v1177 = vsel %vm1168, %v1175, %v1176
        %v1178 = vrot.slane %v1026, 1
        %v1179 = vrot.slane %v1058, 1
        %v1180 = vsel %vm1168, %v1178, %v1179
        %v1181 = vrot.slane %v1027, 1
        %v1182 = vrot.slane %v1059, 1
        %v1183 = vsel %vm1168, %v1181, %v1182
        %v1184 = vrot.slane %v1028, 1
        %v1185 = vrot.slane %v1060, 1
        %v1186 = vsel %vm1168, %v1184, %v1185
        %v1187 = vrot.slane %v1029, 1
        %v1188 = vrot.slane %v1061, 1
        %v1189 = vsel %vm1168, %v1187, %v1188
        %v1190 = vrot.slane %v1030, 1
        %v1191 = vrot.slane %v1062, 1
        %v1192 = vsel %vm1168, %v1190, %v1191
        %v1201 = vld [vmem:[#allocation3] sm:$0xf]
        %v1202 = vld [vmem:[#allocation3 + $0x4] sm:$0xf]
        %v1203 = vld [vmem:[#allocation3 + $0x8] sm:$0xf]
        %v1204 = vld [vmem:[#allocation3 + $0xc] sm:$0xf]
        %v1205 = vld [vmem:[#allocation3 + $0x10] sm:$0xf]
        %v1206 = vld [vmem:[#allocation3 + $0x14] sm:$0xf]
        %v1207 = vld [vmem:[#allocation3 + $0x18] sm:$0xf]
        %v1208 = vld [vmem:[#allocation3 + $0x1c] sm:$0xf]
        %v1209 = vld [vmem:[#allocation3 + $0x20] sm:$0xf]
        %v1210 = vld [vmem:[#allocation3 + $0x24] sm:$0xf]
        %v1211 = vld [vmem:[#allocation3 + $0x28] sm:$0xf]
        %v1212 = vld [vmem:[#allocation3 + $0x2c] sm:$0xf]
        %v1213 = vld [vmem:[#allocation3 + $0x30] sm:$0xf]
        %v1214 = vld [vmem:[#allocation3 + $0x34] sm:$0xf]
        %v1215 = vld [vmem:[#allocation3 + $0x38] sm:$0xf]
        %v1216 = vld [vmem:[#allocation3 + $0x3c] sm:$0xf]
        %v1217 = vld [vmem:[#allocation3 + $0x40] sm:$0xf]
        %v1218 = vld [vmem:[#allocation3 + $0x44] sm:$0xf]
        %v1219 = vld [vmem:[#allocation3 + $0x48] sm:$0xf]
        %v1220 = vld [vmem:[#allocation3 + $0x4c] sm:$0xf]
        %v1221 = vld [vmem:[#allocation3 + $0x50] sm:$0xf]
        %v1222 = vld [vmem:[#allocation3 + $0x54] sm:$0xf]
        %v1223 = vld [vmem:[#allocation3 + $0x58] sm:$0xf]
        %v1224 = vld [vmem:[#allocation3 + $0x5c] sm:$0xf]
        %v1225 = vld [vmem:[#allocation3 + $0x60] sm:$0xf]
        %v1226 = vld [vmem:[#allocation3 + $0x64] sm:$0xf]
        %v1227 = vld [vmem:[#allocation3 + $0x68] sm:$0xf]
        %v1228 = vld [vmem:[#allocation3 + $0x6c] sm:$0xf]
        %v1229 = vld [vmem:[#allocation3 + $0x70] sm:$0xf]
        %v1230 = vld [vmem:[#allocation3 + $0x74] sm:$0xf]
        %v1231 = vld [vmem:[#allocation3 + $0x78] sm:$0xf]
        %v1232 = vld [vmem:[#allocation3 + $0x7c] sm:$0xf]
        %v1233 = vld [vmem:[#allocation3 + $0x80] sm:$0xf]
        %v1234 = vld [vmem:[#allocation3 + $0x84] sm:$0xf]
        %v1235 = vld [vmem:[#allocation3 + $0x88] sm:$0xf]
        %v1236 = vld [vmem:[#allocation3 + $0x8c] sm:$0xf]
        %v1237 = vld [vmem:[#allocation3 + $0x90] sm:$0xf]
        %v1238 = vld [vmem:[#allocation3 + $0x94] sm:$0xf]
        %v1239 = vld [vmem:[#allocation3 + $0x98] sm:$0xf]
        %v1240 = vld [vmem:[#allocation3 + $0x9c] sm:$0xf]
        %v1241 = vld [vmem:[#allocation3 + $0xa0] sm:$0xf]
        %v1242 = vld [vmem:[#allocation3 + $0xa4] sm:$0xf]
        %v1243 = vld [vmem:[#allocation3 + $0xa8] sm:$0xf]
        %v1244 = vld [vmem:[#allocation3 + $0xac] sm:$0xf]
        %v1245 = vld [vmem:[#allocation3 + $0xb0] sm:$0xf]
        %v1246 = vld [vmem:[#allocation3 + $0xb4] sm:$0xf]
        %v1247 = vld [vmem:[#allocation3 + $0xb8] sm:$0xf]
        %v1248 = vld [vmem:[#allocation3 + $0xbc] sm:$0xf]
        %v1249 = vld [vmem:[%s882] sm:$0xf]
        %v1250 = vld [vmem:[%s882 + $0x4] sm:$0xf]
        %v1251 = vld [vmem:[%s882 + $0x8] sm:$0x1]
        %v1252 = vld [vmem:[%s882 + $0xc] sm:$0xf]
        %v1253 = vld [vmem:[%s882 + $0x10] sm:$0xf]
        %v1254 = vld [vmem:[%s882 + $0x14] sm:$0x1]
        %v1255 = vld [vmem:[%s882 + $0x18] sm:$0xf]
        %v1256 = vld [vmem:[%s882 + $0x1c] sm:$0xf]
        %v1257 = vld [vmem:[%s882 + $0x20] sm:$0x1]
        %v1258 = vld [vmem:[%s882 + $0x24] sm:$0xf]
        %v1259 = vld [vmem:[%s882 + $0x28] sm:$0xf]
        %v1260 = vld [vmem:[%s882 + $0x2c] sm:$0x1]
        %v1261 = vld [vmem:[%s882 + $0x30] sm:$0xf]
        %v1262 = vld [vmem:[%s882 + $0x34] sm:$0xf]
        %v1263 = vld [vmem:[%s882 + $0x38] sm:$0x1]
        %v1264 = vld [vmem:[%s882 + $0x3c] sm:$0xf]
        %v1265 = vld [vmem:[%s882 + $0x40] sm:$0xf]
        %v1266 = vld [vmem:[%s882 + $0x44] sm:$0x1]
        %v1267 = vld [vmem:[%s882 + $0x48] sm:$0xf]
        %v1268 = vld [vmem:[%s882 + $0x4c] sm:$0xf]
        %v1269 = vld [vmem:[%s882 + $0x50] sm:$0x1]
        %v1270 = vld [vmem:[%s882 + $0x54] sm:$0xf]
        %v1271 = vld [vmem:[%s882 + $0x58] sm:$0xf]
        %v1272 = vld [vmem:[%s882 + $0x5c] sm:$0x1]
        %v1289 = vunpack.c.l.b16 %v1249
        %v1290 = vunpack.c.l.b16 %v1250
        %v1291 = vunpack.c.l.b16 %v1252
        %v1292 = vunpack.c.l.b16 %v1253
        %v1293 = vunpack.c.l.b16 %v1255
        %v1294 = vunpack.c.l.b16 %v1256
        %v1295 = vunpack.c.l.b16 %v1258
        %v1296 = vunpack.c.l.b16 %v1259
        %v1297 = vunpack.c.l.b16 %v1261
        %v1298 = vunpack.c.l.b16 %v1262
        %v1299 = vunpack.c.l.b16 %v1264
        %v1300 = vunpack.c.l.b16 %v1265
        %v1301 = vunpack.c.l.b16 %v1267
        %v1302 = vunpack.c.l.b16 %v1268
        %v1303 = vunpack.c.l.b16 %v1270
        %v1304 = vunpack.c.l.b16 %v1271
        %v1305 = vpack.c.b16 %v1290, %v1289
        %v1306 = vpack.c.b16 %v1292, %v1291
        %v1307 = vpack.c.b16 %v1294, %v1293
        %v1308 = vpack.c.b16 %v1296, %v1295
        %v1309 = vpack.c.b16 %v1298, %v1297
        %v1310 = vpack.c.b16 %v1300, %v1299
        %v1311 = vpack.c.b16 %v1302, %v1301
        %v1312 = vpack.c.b16 %v1304, %v1303
        %v1329 = vunpack.c.l.b16 %v1251
        %v1330 = vunpack.c.l.b16 %v1254
        %v1331 = vunpack.c.l.b16 %v1257
        %v1332 = vunpack.c.l.b16 %v1260
        %v1333 = vunpack.c.l.b16 %v1263
        %v1334 = vunpack.c.l.b16 %v1266
        %v1335 = vunpack.c.l.b16 %v1269
        %v1336 = vunpack.c.l.b16 %v1272
        %v1337 = vpack.c.b16 %v1329, %v1329
        %v1338 = vpack.c.b16 %v1330, %v1330
        %v1339 = vpack.c.b16 %v1331, %v1331
        %v1340 = vpack.c.b16 %v1332, %v1332
        %v1341 = vpack.c.b16 %v1333, %v1333
        %v1342 = vpack.c.b16 %v1334, %v1334
        %v1343 = vpack.c.b16 %v1335, %v1335
        %v1344 = vpack.c.b16 %v1336, %v1336
        %v1346 = vshrl.u32 %v1305, 16
        %v1348 = vshll.u32 %v1305, 16
        %v1350 = vrot.slane %v1348, 1
        %v1351 = vor.u32 %v1346, %v1350
        %v1353 = vshll.u32 %v1337, 16
        %v1355 = vrot.slane %v1353, 1
        %v1356 = vsel %vm1063, %v1351, %v1355
        %v1358 = vshrl.u32 %v1306, 16
        %v1360 = vshll.u32 %v1306, 16
        %v1362 = vrot.slane %v1360, 1
        %v1363 = vor.u32 %v1358, %v1362
        %v1365 = vshll.u32 %v1338, 16
        %v1367 = vrot.slane %v1365, 1
        %v1368 = vsel %vm1063, %v1363, %v1367
        %v1370 = vshrl.u32 %v1307, 16
        %v1372 = vshll.u32 %v1307, 16
        %v1374 = vrot.slane %v1372, 1
        %v1375 = vor.u32 %v1370, %v1374
        %v1377 = vshll.u32 %v1339, 16
        %v1379 = vrot.slane %v1377, 1
        %v1380 = vsel %vm1063, %v1375, %v1379
        %v1382 = vshrl.u32 %v1308, 16
        %v1384 = vshll.u32 %v1308, 16
        %v1386 = vrot.slane %v1384, 1
        %v1387 = vor.u32 %v1382, %v1386
        %v1389 = vshll.u32 %v1340, 16
        %v1391 = vrot.slane %v1389, 1
        %v1392 = vsel %vm1063, %v1387, %v1391
        %v1394 = vshrl.u32 %v1309, 16
        %v1396 = vshll.u32 %v1309, 16
        %v1398 = vrot.slane %v1396, 1
        %v1399 = vor.u32 %v1394, %v1398
        %v1401 = vshll.u32 %v1341, 16
        %v1403 = vrot.slane %v1401, 1
        %v1404 = vsel %vm1063, %v1399, %v1403
        %v1406 = vshrl.u32 %v1310, 16
        %v1408 = vshll.u32 %v1310, 16
        %v1410 = vrot.slane %v1408, 1
        %v1411 = vor.u32 %v1406, %v1410
        %v1413 = vshll.u32 %v1342, 16
        %v1415 = vrot.slane %v1413, 1
        %v1416 = vsel %vm1063, %v1411, %v1415
        %v1418 = vshrl.u32 %v1311, 16
        %v1420 = vshll.u32 %v1311, 16
        %v1422 = vrot.slane %v1420, 1
        %v1423 = vor.u32 %v1418, %v1422
        %v1425 = vshll.u32 %v1343, 16
        %v1427 = vrot.slane %v1425, 1
        %v1428 = vsel %vm1063, %v1423, %v1427
        %v1430 = vshrl.u32 %v1312, 16
        %v1432 = vshll.u32 %v1312, 16
        %v1434 = vrot.slane %v1432, 1
        %v1435 = vor.u32 %v1430, %v1434
        %v1437 = vshll.u32 %v1344, 16
        %v1439 = vrot.slane %v1437, 1
        %v1440 = vsel %vm1063, %v1435, %v1439
        %v1449 = vrot.slane %v1305, 1
        %v1450 = vrot.slane %v1337, 1
        %v1451 = vsel %vm1168, %v1449, %v1450
        %v1452 = vrot.slane %v1306, 1
        %v1453 = vrot.slane %v1338, 1
        %v1454 = vsel %vm1168, %v1452, %v1453
        %v1455 = vrot.slane %v1307, 1
        %v1456 = vrot.slane %v1339, 1
        %v1457 = vsel %vm1168, %v1455, %v1456
        %v1458 = vrot.slane %v1308, 1
        %v1459 = vrot.slane %v1340, 1
        %v1460 = vsel %vm1168, %v1458, %v1459
        %v1461 = vrot.slane %v1309, 1
        %v1462 = vrot.slane %v1341, 1
        %v1463 = vsel %vm1168, %v1461, %v1462
        %v1464 = vrot.slane %v1310, 1
        %v1465 = vrot.slane %v1342, 1
        %v1466 = vsel %vm1168, %v1464, %v1465
        %v1467 = vrot.slane %v1311, 1
        %v1468 = vrot.slane %v1343, 1
        %v1469 = vsel %vm1168, %v1467, %v1468
        %v1470 = vrot.slane %v1312, 1
        %v1471 = vrot.slane %v1344, 1
        %v1472 = vsel %vm1168, %v1470, %v1471
        %s1481 = scalar_lea.vmem [#allocation3], 192
        %v1482 = vld [vmem:[%s1481] sm:$0xf]
        %v1483 = vld [vmem:[%s1481 + $0x4] sm:$0xf]
        %v1484 = vld [vmem:[%s1481 + $0x8] sm:$0xf]
        %v1485 = vld [vmem:[%s1481 + $0xc] sm:$0xf]
        %v1486 = vld [vmem:[%s1481 + $0x10] sm:$0xf]
        %v1487 = vld [vmem:[%s1481 + $0x14] sm:$0xf]
        %v1488 = vld [vmem:[%s1481 + $0x18] sm:$0xf]
        %v1489 = vld [vmem:[%s1481 + $0x1c] sm:$0xf]
        %v1490 = vld [vmem:[%s1481 + $0x20] sm:$0xf]
        %v1491 = vld [vmem:[%s1481 + $0x24] sm:$0xf]
        %v1492 = vld [vmem:[%s1481 + $0x28] sm:$0xf]
        %v1493 = vld [vmem:[%s1481 + $0x2c] sm:$0xf]
        %v1494 = vld [vmem:[%s1481 + $0x30] sm:$0xf]
        %v1495 = vld [vmem:[%s1481 + $0x34] sm:$0xf]
        %v1496 = vld [vmem:[%s1481 + $0x38] sm:$0xf]
        %v1497 = vld [vmem:[%s1481 + $0x3c] sm:$0xf]
        %v1498 = vld [vmem:[%s1481 + $0x40] sm:$0xf]
        %v1499 = vld [vmem:[%s1481 + $0x44] sm:$0xf]
        %v1500 = vld [vmem:[%s1481 + $0x48] sm:$0xf]
        %v1501 = vld [vmem:[%s1481 + $0x4c] sm:$0xf]
        %v1502 = vld [vmem:[%s1481 + $0x50] sm:$0xf]
        %v1503 = vld [vmem:[%s1481 + $0x54] sm:$0xf]
        %v1504 = vld [vmem:[%s1481 + $0x58] sm:$0xf]
        %v1505 = vld [vmem:[%s1481 + $0x5c] sm:$0xf]
        %v1506 = vld [vmem:[%s1481 + $0x60] sm:$0xf]
        %v1507 = vld [vmem:[%s1481 + $0x64] sm:$0xf]
        %v1508 = vld [vmem:[%s1481 + $0x68] sm:$0xf]
        %v1509 = vld [vmem:[%s1481 + $0x6c] sm:$0xf]
        %v1510 = vld [vmem:[%s1481 + $0x70] sm:$0xf]
        %v1511 = vld [vmem:[%s1481 + $0x74] sm:$0xf]
        %v1512 = vld [vmem:[%s1481 + $0x78] sm:$0xf]
        %v1513 = vld [vmem:[%s1481 + $0x7c] sm:$0xf]
        %v1514 = vld [vmem:[%s1481 + $0x80] sm:$0xf]
        %v1515 = vld [vmem:[%s1481 + $0x84] sm:$0xf]
        %v1516 = vld [vmem:[%s1481 + $0x88] sm:$0xf]
        %v1517 = vld [vmem:[%s1481 + $0x8c] sm:$0xf]
        %v1518 = vld [vmem:[%s1481 + $0x90] sm:$0xf]
        %v1519 = vld [vmem:[%s1481 + $0x94] sm:$0xf]
        %v1520 = vld [vmem:[%s1481 + $0x98] sm:$0xf]
        %v1521 = vld [vmem:[%s1481 + $0x9c] sm:$0xf]
        %v1522 = vld [vmem:[%s1481 + $0xa0] sm:$0xf]
        %v1523 = vld [vmem:[%s1481 + $0xa4] sm:$0xf]
        %v1524 = vld [vmem:[%s1481 + $0xa8] sm:$0xf]
        %v1525 = vld [vmem:[%s1481 + $0xac] sm:$0xf]
        %v1526 = vld [vmem:[%s1481 + $0xb0] sm:$0xf]
        %v1527 = vld [vmem:[%s1481 + $0xb4] sm:$0xf]
        %v1528 = vld [vmem:[%s1481 + $0xb8] sm:$0xf]
        %v1529 = vld [vmem:[%s1481 + $0xbc] sm:$0xf]
        %v1578 = vunpack.c.l.b16 %v1482
        %v1579 = vunpack.c.l.b16 %v1483
        %v1580 = vunpack.c.l.b16 %v1484
        %v1581 = vunpack.c.l.b16 %v1485
        %v1582 = vunpack.c.l.b16 %v1486
        %v1583 = vunpack.c.l.b16 %v1487
        %v1584 = vunpack.c.l.b16 %v1488
        %v1585 = vunpack.c.l.b16 %v1489
        %v1586 = vunpack.c.l.b16 %v1490
        %v1587 = vunpack.c.l.b16 %v1491
        %v1588 = vunpack.c.l.b16 %v1492
        %v1589 = vunpack.c.l.b16 %v1493
        %v1590 = vunpack.c.l.b16 %v1494
        %v1591 = vunpack.c.l.b16 %v1495
        %v1592 = vunpack.c.l.b16 %v1496
        %v1593 = vunpack.c.l.b16 %v1497
        %v1594 = vunpack.c.l.b16 %v1498
        %v1595 = vunpack.c.l.b16 %v1499
        %v1596 = vunpack.c.l.b16 %v1500
        %v1597 = vunpack.c.l.b16 %v1501
        %v1598 = vunpack.c.l.b16 %v1502
        %v1599 = vunpack.c.l.b16 %v1503
        %v1600 = vunpack.c.l.b16 %v1504
        %v1601 = vunpack.c.l.b16 %v1505
        %v1602 = vunpack.c.l.b16 %v1506
        %v1603 = vunpack.c.l.b16 %v1507
        %v1604 = vunpack.c.l.b16 %v1508
        %v1605 = vunpack.c.l.b16 %v1509
        %v1606 = vunpack.c.l.b16 %v1510
        %v1607 = vunpack.c.l.b16 %v1511
        %v1608 = vunpack.c.l.b16 %v1512
        %v1609 = vunpack.c.l.b16 %v1513
        %v1610 = vunpack.c.l.b16 %v1514
        %v1611 = vunpack.c.l.b16 %v1515
        %v1612 = vunpack.c.l.b16 %v1516
        %v1613 = vunpack.c.l.b16 %v1517
        %v1614 = vunpack.c.l.b16 %v1518
        %v1615 = vunpack.c.l.b16 %v1519
        %v1616 = vunpack.c.l.b16 %v1520
        %v1617 = vunpack.c.l.b16 %v1521
        %v1618 = vunpack.c.l.b16 %v1522
        %v1619 = vunpack.c.l.b16 %v1523
        %v1620 = vunpack.c.l.b16 %v1524
        %v1621 = vunpack.c.l.b16 %v1525
        %v1622 = vunpack.c.l.b16 %v1526
        %v1623 = vunpack.c.l.b16 %v1527
        %v1624 = vunpack.c.l.b16 %v1528
        %v1625 = vunpack.c.l.b16 %v1529
        %v1626 = vpack.c.b16 %v1579, %v1578
        %v1627 = vpack.c.b16 %v1581, %v1580
        %v1628 = vpack.c.b16 %v1583, %v1582
        %v1629 = vpack.c.b16 %v1585, %v1584
        %v1630 = vpack.c.b16 %v1587, %v1586
        %v1631 = vpack.c.b16 %v1589, %v1588
        %v1632 = vpack.c.b16 %v1591, %v1590
        %v1633 = vpack.c.b16 %v1593, %v1592
        %v1634 = vpack.c.b16 %v1595, %v1594
        %v1635 = vpack.c.b16 %v1597, %v1596
        %v1636 = vpack.c.b16 %v1599, %v1598
        %v1637 = vpack.c.b16 %v1601, %v1600
        %v1638 = vpack.c.b16 %v1603, %v1602
        %v1639 = vpack.c.b16 %v1605, %v1604
        %v1640 = vpack.c.b16 %v1607, %v1606
        %v1641 = vpack.c.b16 %v1609, %v1608
        %v1642 = vpack.c.b16 %v1611, %v1610
        %v1643 = vpack.c.b16 %v1613, %v1612
        %v1644 = vpack.c.b16 %v1615, %v1614
        %v1645 = vpack.c.b16 %v1617, %v1616
        %v1646 = vpack.c.b16 %v1619, %v1618
        %v1647 = vpack.c.b16 %v1621, %v1620
        %v1648 = vpack.c.b16 %v1623, %v1622
        %v1649 = vpack.c.b16 %v1625, %v1624
        %1674 = vmatpush.bf16.msra.mxu0 %v1633
        %1675 = vmatpush.bf16.msra.mxu0 %v1632
        %1676 = vmatpush.bf16.msra.mxu0 %v1631
        %1677 = vmatpush.bf16.msra.mxu0 %v1630
        %1678 = vmatpush.bf16.msra.mxu0 %v1629
        %1679 = vmatpush.bf16.msra.mxu0 %v1628
        %1680 = vmatpush.bf16.msra.mxu0 %v1627
        %1681 = vmatpush.bf16.msra.mxu0 %v1626
        %1682 = vmatmul.bf16.gmra.mxu0 %v1305
        %v1683 = vpop.f32.mrf.mxu0
        %v1684 = vadd.f32 0.0, %v1683
        %v1685 = vpop.f32.mrf.mxu0
        %v1686 = vadd.f32 0.0, %v1685
        %1687 = vmatmul.bf16.gmra.mxu0 %v1306
        %v1688 = vpop.f32.mrf.mxu0
        %v1689 = vadd.f32 0.0, %v1688
        %v1690 = vpop.f32.mrf.mxu0
        %v1691 = vadd.f32 0.0, %v1690
        %1692 = vmatmul.bf16.gmra.mxu0 %v1307
        %v1693 = vpop.f32.mrf.mxu0
        %v1694 = vadd.f32 0.0, %v1693
        %v1695 = vpop.f32.mrf.mxu0
        %v1696 = vadd.f32 0.0, %v1695
        %1697 = vmatmul.bf16.gmra.mxu0 %v1308
        %v1698 = vpop.f32.mrf.mxu0
        %v1699 = vadd.f32 0.0, %v1698
        %v1700 = vpop.f32.mrf.mxu0
        %v1701 = vadd.f32 0.0, %v1700
        %1702 = vmatmul.bf16.gmra.mxu0 %v1309
        %v1703 = vpop.f32.mrf.mxu0
        %v1704 = vadd.f32 0.0, %v1703
        %v1705 = vpop.f32.mrf.mxu0
        %v1706 = vadd.f32 0.0, %v1705
        %1707 = vmatmul.bf16.gmra.mxu0 %v1310
        %v1708 = vpop.f32.mrf.mxu0
        %v1709 = vadd.f32 0.0, %v1708
        %v1710 = vpop.f32.mrf.mxu0
        %v1711 = vadd.f32 0.0, %v1710
        %1712 = vmatmul.bf16.gmra.mxu0 %v1311
        %v1713 = vpop.f32.mrf.mxu0
        %v1714 = vadd.f32 0.0, %v1713
        %v1715 = vpop.f32.mrf.mxu0
        %v1716 = vadd.f32 0.0, %v1715
        %1717 = vmatmul.bf16.gmra.mxu0 %v1312
        %v1718 = vpop.f32.mrf.mxu0
        %v1719 = vadd.f32 0.0, %v1718
        %v1720 = vpop.f32.mrf.mxu0
        %v1721 = vadd.f32 0.0, %v1720
        %1722 = vdwg.mxu0
        %1723 = vmatpush.bf16.msra.mxu0 %v1641
        %1724 = vmatpush.bf16.msra.mxu0 %v1640
        %1725 = vmatpush.bf16.msra.mxu0 %v1639
        %1726 = vmatpush.bf16.msra.mxu0 %v1638
        %1727 = vmatpush.bf16.msra.mxu0 %v1637
        %1728 = vmatpush.bf16.msra.mxu0 %v1636
        %1729 = vmatpush.bf16.msra.mxu0 %v1635
        %1730 = vmatpush.bf16.msra.mxu0 %v1634
        %1731 = vmatmul.bf16.gmra.mxu0 %v1356
        %v1732 = vpop.f32.mrf.mxu0
        %v1733 = vadd.f32 %v1684, %v1732
        %v1734 = vpop.f32.mrf.mxu0
        %v1735 = vadd.f32 %v1686, %v1734
        %1736 = vmatmul.bf16.gmra.mxu0 %v1368
        %v1737 = vpop.f32.mrf.mxu0
        %v1738 = vadd.f32 %v1689, %v1737
        %v1739 = vpop.f32.mrf.mxu0
        %v1740 = vadd.f32 %v1691, %v1739
        %1741 = vmatmul.bf16.gmra.mxu0 %v1380
        %v1742 = vpop.f32.mrf.mxu0
        %v1743 = vadd.f32 %v1694, %v1742
        %v1744 = vpop.f32.mrf.mxu0
        %v1745 = vadd.f32 %v1696, %v1744
        %1746 = vmatmul.bf16.gmra.mxu0 %v1392
        %v1747 = vpop.f32.mrf.mxu0
        %v1748 = vadd.f32 %v1699, %v1747
        %v1749 = vpop.f32.mrf.mxu0
        %v1750 = vadd.f32 %v1701, %v1749
        %1751 = vmatmul.bf16.gmra.mxu0 %v1404
        %v1752 = vpop.f32.mrf.mxu0
        %v1753 = vadd.f32 %v1704, %v1752
        %v1754 = vpop.f32.mrf.mxu0
        %v1755 = vadd.f32 %v1706, %v1754
        %1756 = vmatmul.bf16.gmra.mxu0 %v1416
        %v1757 = vpop.f32.mrf.mxu0
        %v1758 = vadd.f32 %v1709, %v1757
        %v1759 = vpop.f32.mrf.mxu0
        %v1760 = vadd.f32 %v1711, %v1759
        %1761 = vmatmul.bf16.gmra.mxu0 %v1428
        %v1762 = vpop.f32.mrf.mxu0
        %v1763 = vadd.f32 %v1714, %v1762
        %v1764 = vpop.f32.mrf.mxu0
        %v1765 = vadd.f32 %v1716, %v1764
        %1766 = vmatmul.bf16.gmra.mxu0 %v1440
        %v1767 = vpop.f32.mrf.mxu0
        %v1768 = vadd.f32 %v1719, %v1767
        %v1769 = vpop.f32.mrf.mxu0
        %v1770 = vadd.f32 %v1721, %v1769
        %1771 = vdwg.mxu0
        %1772 = vmatpush.bf16.msra.mxu0 %v1649
        %1773 = vmatpush.bf16.msra.mxu0 %v1648
        %1774 = vmatpush.bf16.msra.mxu0 %v1647
        %1775 = vmatpush.bf16.msra.mxu0 %v1646
        %1776 = vmatpush.bf16.msra.mxu0 %v1645
        %1777 = vmatpush.bf16.msra.mxu0 %v1644
        %1778 = vmatpush.bf16.msra.mxu0 %v1643
        %1779 = vmatpush.bf16.msra.mxu0 %v1642
        %1780 = vmatmul.bf16.gmra.mxu0 %v1451
        %v1781 = vpop.f32.mrf.mxu0
        %v1782 = vadd.f32 %v1733, %v1781
        %v1783 = vpop.f32.mrf.mxu0
        %v1784 = vadd.f32 %v1735, %v1783
        %1785 = vmatmul.bf16.gmra.mxu0 %v1454
        %v1786 = vpop.f32.mrf.mxu0
        %v1787 = vadd.f32 %v1738, %v1786
        %v1788 = vpop.f32.mrf.mxu0
        %v1789 = vadd.f32 %v1740, %v1788
        %1790 = vmatmul.bf16.gmra.mxu0 %v1457
        %v1791 = vpop.f32.mrf.mxu0
        %v1792 = vadd.f32 %v1743, %v1791
        %v1793 = vpop.f32.mrf.mxu0
        %v1794 = vadd.f32 %v1745, %v1793
        %1795 = vmatmul.bf16.gmra.mxu0 %v1460
        %v1796 = vpop.f32.mrf.mxu0
        %v1797 = vadd.f32 %v1748, %v1796
        %v1798 = vpop.f32.mrf.mxu0
        %v1799 = vadd.f32 %v1750, %v1798
        %1800 = vmatmul.bf16.gmra.mxu0 %v1463
        %v1801 = vpop.f32.mrf.mxu0
        %v1802 = vadd.f32 %v1753, %v1801
        %v1803 = vpop.f32.mrf.mxu0
        %v1804 = vadd.f32 %v1755, %v1803
        %1805 = vmatmul.bf16.gmra.mxu0 %v1466
        %v1806 = vpop.f32.mrf.mxu0
        %v1807 = vadd.f32 %v1758, %v1806
        %v1808 = vpop.f32.mrf.mxu0
        %v1809 = vadd.f32 %v1760, %v1808
        %1810 = vmatmul.bf16.gmra.mxu0 %v1469
        %v1811 = vpop.f32.mrf.mxu0
        %v1812 = vadd.f32 %v1763, %v1811
        %v1813 = vpop.f32.mrf.mxu0
        %v1814 = vadd.f32 %v1765, %v1813
        %1815 = vmatmul.bf16.gmra.mxu0 %v1472
        %v1816 = vpop.f32.mrf.mxu0
        %v1817 = vadd.f32 %v1768, %v1816
        %v1818 = vpop.f32.mrf.mxu0
        %v1819 = vadd.f32 %v1770, %v1818
        %1820 = vdwg.mxu0
        %v1869 = vunpack.c.l.b16 %v1201
        %v1870 = vunpack.c.l.b16 %v1202
        %v1871 = vunpack.c.l.b16 %v1203
        %v1872 = vunpack.c.l.b16 %v1204
        %v1873 = vunpack.c.l.b16 %v1205
        %v1874 = vunpack.c.l.b16 %v1206
        %v1875 = vunpack.c.l.b16 %v1207
        %v1876 = vunpack.c.l.b16 %v1208
        %v1877 = vunpack.c.l.b16 %v1209
        %v1878 = vunpack.c.l.b16 %v1210
        %v1879 = vunpack.c.l.b16 %v1211
        %v1880 = vunpack.c.l.b16 %v1212
        %v1881 = vunpack.c.l.b16 %v1213
        %v1882 = vunpack.c.l.b16 %v1214
        %v1883 = vunpack.c.l.b16 %v1215
        %v1884 = vunpack.c.l.b16 %v1216
        %v1885 = vunpack.c.l.b16 %v1217
        %v1886 = vunpack.c.l.b16 %v1218
        %v1887 = vunpack.c.l.b16 %v1219
        %v1888 = vunpack.c.l.b16 %v1220
        %v1889 = vunpack.c.l.b16 %v1221
        %v1890 = vunpack.c.l.b16 %v1222
        %v1891 = vunpack.c.l.b16 %v1223
        %v1892 = vunpack.c.l.b16 %v1224
        %v1893 = vunpack.c.l.b16 %v1225
        %v1894 = vunpack.c.l.b16 %v1226
        %v1895 = vunpack.c.l.b16 %v1227
        %v1896 = vunpack.c.l.b16 %v1228
        %v1897 = vunpack.c.l.b16 %v1229
        %v1898 = vunpack.c.l.b16 %v1230
        %v1899 = vunpack.c.l.b16 %v1231
        %v1900 = vunpack.c.l.b16 %v1232
        %v1901 = vunpack.c.l.b16 %v1233
        %v1902 = vunpack.c.l.b16 %v1234
        %v1903 = vunpack.c.l.b16 %v1235
        %v1904 = vunpack.c.l.b16 %v1236
        %v1905 = vunpack.c.l.b16 %v1237
        %v1906 = vunpack.c.l.b16 %v1238
        %v1907 = vunpack.c.l.b16 %v1239
        %v1908 = vunpack.c.l.b16 %v1240
        %v1909 = vunpack.c.l.b16 %v1241
        %v1910 = vunpack.c.l.b16 %v1242
        %v1911 = vunpack.c.l.b16 %v1243
        %v1912 = vunpack.c.l.b16 %v1244
        %v1913 = vunpack.c.l.b16 %v1245
        %v1914 = vunpack.c.l.b16 %v1246
        %v1915 = vunpack.c.l.b16 %v1247
        %v1916 = vunpack.c.l.b16 %v1248
        %v1917 = vpack.c.b16 %v1870, %v1869
        %v1918 = vpack.c.b16 %v1872, %v1871
        %v1919 = vpack.c.b16 %v1874, %v1873
        %v1920 = vpack.c.b16 %v1876, %v1875
        %v1921 = vpack.c.b16 %v1878, %v1877
        %v1922 = vpack.c.b16 %v1880, %v1879
        %v1923 = vpack.c.b16 %v1882, %v1881
        %v1924 = vpack.c.b16 %v1884, %v1883
        %v1925 = vpack.c.b16 %v1886, %v1885
        %v1926 = vpack.c.b16 %v1888, %v1887
        %v1927 = vpack.c.b16 %v1890, %v1889
        %v1928 = vpack.c.b16 %v1892, %v1891
        %v1929 = vpack.c.b16 %v1894, %v1893
        %v1930 = vpack.c.b16 %v1896, %v1895
        %v1931 = vpack.c.b16 %v1898, %v1897
        %v1932 = vpack.c.b16 %v1900, %v1899
        %v1933 = vpack.c.b16 %v1902, %v1901
        %v1934 = vpack.c.b16 %v1904, %v1903
        %v1935 = vpack.c.b16 %v1906, %v1905
        %v1936 = vpack.c.b16 %v1908, %v1907
        %v1937 = vpack.c.b16 %v1910, %v1909
        %v1938 = vpack.c.b16 %v1912, %v1911
        %v1939 = vpack.c.b16 %v1914, %v1913
        %v1940 = vpack.c.b16 %v1916, %v1915
        %1965 = vmatpush.bf16.msra.mxu0 %v1924
        %1966 = vmatpush.bf16.msra.mxu0 %v1923
        %1967 = vmatpush.bf16.msra.mxu0 %v1922
        %1968 = vmatpush.bf16.msra.mxu0 %v1921
        %1969 = vmatpush.bf16.msra.mxu0 %v1920
        %1970 = vmatpush.bf16.msra.mxu0 %v1919
        %1971 = vmatpush.bf16.msra.mxu0 %v1918
        %1972 = vmatpush.bf16.msra.mxu0 %v1917
        %1973 = vmatmul.bf16.gmra.mxu0 %v1023
        %v1974 = vpop.f32.mrf.mxu0
        %v1975 = vadd.f32 %v1782, %v1974
        %v1976 = vpop.f32.mrf.mxu0
        %v1977 = vadd.f32 %v1784, %v1976
        %1978 = vmatmul.bf16.gmra.mxu0 %v1024
        %v1979 = vpop.f32.mrf.mxu0
        %v1980 = vadd.f32 %v1787, %v1979
        %v1981 = vpop.f32.mrf.mxu0
        %v1982 = vadd.f32 %v1789, %v1981
        %1983 = vmatmul.bf16.gmra.mxu0 %v1025
        %v1984 = vpop.f32.mrf.mxu0
        %v1985 = vadd.f32 %v1792, %v1984
        %v1986 = vpop.f32.mrf.mxu0
        %v1987 = vadd.f32 %v1794, %v1986
        %1988 = vmatmul.bf16.gmra.mxu0 %v1026
        %v1989 = vpop.f32.mrf.mxu0
        %v1990 = vadd.f32 %v1797, %v1989
        %v1991 = vpop.f32.mrf.mxu0
        %v1992 = vadd.f32 %v1799, %v1991
        %1993 = vmatmul.bf16.gmra.mxu0 %v1027
        %v1994 = vpop.f32.mrf.mxu0
        %v1995 = vadd.f32 %v1802, %v1994
        %v1996 = vpop.f32.mrf.mxu0
        %v1997 = vadd.f32 %v1804, %v1996
        %1998 = vmatmul.bf16.gmra.mxu0 %v1028
        %v1999 = vpop.f32.mrf.mxu0
        %v2000 = vadd.f32 %v1807, %v1999
        %v2001 = vpop.f32.mrf.mxu0
        %v2002 = vadd.f32 %v1809, %v2001
        %2003 = vmatmul.bf16.gmra.mxu0 %v1029
        %v2004 = vpop.f32.mrf.mxu0
        %v2005 = vadd.f32 %v1812, %v2004
        %v2006 = vpop.f32.mrf.mxu0
        %v2007 = vadd.f32 %v1814, %v2006
        %2008 = vmatmul.bf16.gmra.mxu0 %v1030
        %v2009 = vpop.f32.mrf.mxu0
        %v2010 = vadd.f32 %v1817, %v2009
        %v2011 = vpop.f32.mrf.mxu0
        %v2012 = vadd.f32 %v1819, %v2011
        %2013 = vdwg.mxu0
        %2014 = vmatpush.bf16.msra.mxu0 %v1932
        %2015 = vmatpush.bf16.msra.mxu0 %v1931
        %2016 = vmatpush.bf16.msra.mxu0 %v1930
        %2017 = vmatpush.bf16.msra.mxu0 %v1929
        %2018 = vmatpush.bf16.msra.mxu0 %v1928
        %2019 = vmatpush.bf16.msra.mxu0 %v1927
        %2020 = vmatpush.bf16.msra.mxu0 %v1926
        %2021 = vmatpush.bf16.msra.mxu0 %v1925
        %2022 = vmatmul.bf16.gmra.mxu0 %v1075
        %v2023 = vpop.f32.mrf.mxu0
        %v2024 = vadd.f32 %v1975, %v2023
        %v2025 = vpop.f32.mrf.mxu0
        %v2026 = vadd.f32 %v1977, %v2025
        %2027 = vmatmul.bf16.gmra.mxu0 %v1087
        %v2028 = vpop.f32.mrf.mxu0
        %v2029 = vadd.f32 %v1980, %v2028
        %v2030 = vpop.f32.mrf.mxu0
        %v2031 = vadd.f32 %v1982, %v2030
        %2032 = vmatmul.bf16.gmra.mxu0 %v1099
        %v2033 = vpop.f32.mrf.mxu0
        %v2034 = vadd.f32 %v1985, %v2033
        %v2035 = vpop.f32.mrf.mxu0
        %v2036 = vadd.f32 %v1987, %v2035
        %2037 = vmatmul.bf16.gmra.mxu0 %v1111
        %v2038 = vpop.f32.mrf.mxu0
        %v2039 = vadd.f32 %v1990, %v2038
        %v2040 = vpop.f32.mrf.mxu0
        %v2041 = vadd.f32 %v1992, %v2040
        %2042 = vmatmul.bf16.gmra.mxu0 %v1123
        %v2043 = vpop.f32.mrf.mxu0
        %v2044 = vadd.f32 %v1995, %v2043
        %v2045 = vpop.f32.mrf.mxu0
        %v2046 = vadd.f32 %v1997, %v2045
        %2047 = vmatmul.bf16.gmra.mxu0 %v1135
        %v2048 = vpop.f32.mrf.mxu0
        %v2049 = vadd.f32 %v2000, %v2048
        %v2050 = vpop.f32.mrf.mxu0
        %v2051 = vadd.f32 %v2002, %v2050
        %2052 = vmatmul.bf16.gmra.mxu0 %v1147
        %v2053 = vpop.f32.mrf.mxu0
        %v2054 = vadd.f32 %v2005, %v2053
        %v2055 = vpop.f32.mrf.mxu0
        %v2056 = vadd.f32 %v2007, %v2055
        %2057 = vmatmul.bf16.gmra.mxu0 %v1159
        %v2058 = vpop.f32.mrf.mxu0
        %v2059 = vadd.f32 %v2010, %v2058
        %v2060 = vpop.f32.mrf.mxu0
        %v2061 = vadd.f32 %v2012, %v2060
        %2062 = vdwg.mxu0
        %2063 = vmatpush.bf16.msra.mxu0 %v1940
        %2064 = vmatpush.bf16.msra.mxu0 %v1939
        %2065 = vmatpush.bf16.msra.mxu0 %v1938
        %2066 = vmatpush.bf16.msra.mxu0 %v1937
        %2067 = vmatpush.bf16.msra.mxu0 %v1936
        %2068 = vmatpush.bf16.msra.mxu0 %v1935
        %2069 = vmatpush.bf16.msra.mxu0 %v1934
        %2070 = vmatpush.bf16.msra.mxu0 %v1933
        %2071 = vmatmul.bf16.gmra.mxu0 %v1171
        %v2072 = vpop.f32.mrf.mxu0
        %v2073 = vadd.f32 %v2024, %v2072
        %v2074 = vpop.f32.mrf.mxu0
        %v2075 = vadd.f32 %v2026, %v2074
        %2076 = vmatmul.bf16.gmra.mxu0 %v1174
        %v2077 = vpop.f32.mrf.mxu0
        %v2078 = vadd.f32 %v2029, %v2077
        %v2079 = vpop.f32.mrf.mxu0
        %v2080 = vadd.f32 %v2031, %v2079
        %2081 = vmatmul.bf16.gmra.mxu0 %v1177
        %v2082 = vpop.f32.mrf.mxu0
        %v2083 = vadd.f32 %v2034, %v2082
        %v2084 = vpop.f32.mrf.mxu0
        %v2085 = vadd.f32 %v2036, %v2084
        %2086 = vmatmul.bf16.gmra.mxu0 %v1180
        %v2087 = vpop.f32.mrf.mxu0
        %v2088 = vadd.f32 %v2039, %v2087
        %v2089 = vpop.f32.mrf.mxu0
        %v2090 = vadd.f32 %v2041, %v2089
        %2091 = vmatmul.bf16.gmra.mxu0 %v1183
        %v2092 = vpop.f32.mrf.mxu0
        %v2093 = vadd.f32 %v2044, %v2092
        %v2094 = vpop.f32.mrf.mxu0
        %v2095 = vadd.f32 %v2046, %v2094
        %2096 = vmatmul.bf16.gmra.mxu0 %v1186
        %v2097 = vpop.f32.mrf.mxu0
        %v2098 = vadd.f32 %v2049, %v2097
        %v2099 = vpop.f32.mrf.mxu0
        %v2100 = vadd.f32 %v2051, %v2099
        %2101 = vmatmul.bf16.gmra.mxu0 %v1189
        %v2102 = vpop.f32.mrf.mxu0
        %v2103 = vadd.f32 %v2054, %v2102
        %v2104 = vpop.f32.mrf.mxu0
        %v2105 = vadd.f32 %v2056, %v2104
        %2106 = vmatmul.bf16.gmra.mxu0 %v1192
        %v2107 = vpop.f32.mrf.mxu0
        %v2108 = vadd.f32 %v2059, %v2107
        %v2109 = vpop.f32.mrf.mxu0
        %v2110 = vadd.f32 %v2061, %v2109
        %2111 = vdwg.mxu0
        %s2112 = scalar_lea.vmem [#allocation2], 24
        %v2113 = vld [vmem:[%s2112] sm:$0xf]
        %v2114 = vld [vmem:[%s2112 + $0x4] sm:$0xf]
        %v2115 = vld [vmem:[%s2112 + $0x8] sm:$0x1]
        %v2116 = vld [vmem:[%s2112 + $0xc] sm:$0xf]
        %v2117 = vld [vmem:[%s2112 + $0x10] sm:$0xf]
        %v2118 = vld [vmem:[%s2112 + $0x14] sm:$0x1]
        %v2119 = vld [vmem:[%s2112 + $0x18] sm:$0xf]
        %v2120 = vld [vmem:[%s2112 + $0x1c] sm:$0xf]
        %v2121 = vld [vmem:[%s2112 + $0x20] sm:$0x1]
        %v2122 = vld [vmem:[%s2112 + $0x24] sm:$0xf]
        %v2123 = vld [vmem:[%s2112 + $0x28] sm:$0xf]
        %v2124 = vld [vmem:[%s2112 + $0x2c] sm:$0x1]
        %v2125 = vld [vmem:[%s2112 + $0x30] sm:$0xf]
        %v2126 = vld [vmem:[%s2112 + $0x34] sm:$0xf]
        %v2127 = vld [vmem:[%s2112 + $0x38] sm:$0x1]
        %v2128 = vld [vmem:[%s2112 + $0x3c] sm:$0xf]
        %v2129 = vld [vmem:[%s2112 + $0x40] sm:$0xf]
        %v2130 = vld [vmem:[%s2112 + $0x44] sm:$0x1]
        %v2131 = vld [vmem:[%s2112 + $0x48] sm:$0xf]
        %v2132 = vld [vmem:[%s2112 + $0x4c] sm:$0xf]
        %v2133 = vld [vmem:[%s2112 + $0x50] sm:$0x1]
        %v2134 = vld [vmem:[%s2112 + $0x54] sm:$0xf]
        %v2135 = vld [vmem:[%s2112 + $0x58] sm:$0xf]
        %v2136 = vld [vmem:[%s2112 + $0x5c] sm:$0x1]
        %v2153 = vunpack.c.l.b16 %v2113
        %v2154 = vunpack.c.l.b16 %v2114
        %v2155 = vunpack.c.l.b16 %v2116
        %v2156 = vunpack.c.l.b16 %v2117
        %v2157 = vunpack.c.l.b16 %v2119
        %v2158 = vunpack.c.l.b16 %v2120
        %v2159 = vunpack.c.l.b16 %v2122
        %v2160 = vunpack.c.l.b16 %v2123
        %v2161 = vunpack.c.l.b16 %v2125
        %v2162 = vunpack.c.l.b16 %v2126
        %v2163 = vunpack.c.l.b16 %v2128
        %v2164 = vunpack.c.l.b16 %v2129
        %v2165 = vunpack.c.l.b16 %v2131
        %v2166 = vunpack.c.l.b16 %v2132
        %v2167 = vunpack.c.l.b16 %v2134
        %v2168 = vunpack.c.l.b16 %v2135
        %v2169 = vpack.c.b16 %v2154, %v2153
        %v2170 = vpack.c.b16 %v2156, %v2155
        %v2171 = vpack.c.b16 %v2158, %v2157
        %v2172 = vpack.c.b16 %v2160, %v2159
        %v2173 = vpack.c.b16 %v2162, %v2161
        %v2174 = vpack.c.b16 %v2164, %v2163
        %v2175 = vpack.c.b16 %v2166, %v2165
        %v2176 = vpack.c.b16 %v2168, %v2167
        %v2193 = vunpack.c.l.b16 %v2115
        %v2194 = vunpack.c.l.b16 %v2118
        %v2195 = vunpack.c.l.b16 %v2121
        %v2196 = vunpack.c.l.b16 %v2124
        %v2197 = vunpack.c.l.b16 %v2127
        %v2198 = vunpack.c.l.b16 %v2130
        %v2199 = vunpack.c.l.b16 %v2133
        %v2200 = vunpack.c.l.b16 %v2136
        %v2201 = vpack.c.b16 %v2193, %v2193
        %v2202 = vpack.c.b16 %v2194, %v2194
        %v2203 = vpack.c.b16 %v2195, %v2195
        %v2204 = vpack.c.b16 %v2196, %v2196
        %v2205 = vpack.c.b16 %v2197, %v2197
        %v2206 = vpack.c.b16 %v2198, %v2198
        %v2207 = vpack.c.b16 %v2199, %v2199
        %v2208 = vpack.c.b16 %v2200, %v2200
        %v2210 = vshrl.u32 %v2169, 16
        %v2212 = vshll.u32 %v2169, 16
        %v2214 = vrot.slane %v2212, 1
        %v2215 = vor.u32 %v2210, %v2214
        %v2217 = vshll.u32 %v2201, 16
        %v2219 = vrot.slane %v2217, 1
        %v2220 = vsel %vm1063, %v2215, %v2219
        %v2222 = vshrl.u32 %v2170, 16
        %v2224 = vshll.u32 %v2170, 16
        %v2226 = vrot.slane %v2224, 1
        %v2227 = vor.u32 %v2222, %v2226
        %v2229 = vshll.u32 %v2202, 16
        %v2231 = vrot.slane %v2229, 1
        %v2232 = vsel %vm1063, %v2227, %v2231
        %v2234 = vshrl.u32 %v2171, 16
        %v2236 = vshll.u32 %v2171, 16
        %v2238 = vrot.slane %v2236, 1
        %v2239 = vor.u32 %v2234, %v2238
        %v2241 = vshll.u32 %v2203, 16
        %v2243 = vrot.slane %v2241, 1
        %v2244 = vsel %vm1063, %v2239, %v2243
        %v2246 = vshrl.u32 %v2172, 16
        %v2248 = vshll.u32 %v2172, 16
        %v2250 = vrot.slane %v2248, 1
        %v2251 = vor.u32 %v2246, %v2250
        %v2253 = vshll.u32 %v2204, 16
        %v2255 = vrot.slane %v2253, 1
        %v2256 = vsel %vm1063, %v2251, %v2255
        %v2258 = vshrl.u32 %v2173, 16
        %v2260 = vshll.u32 %v2173, 16
        %v2262 = vrot.slane %v2260, 1
        %v2263 = vor.u32 %v2258, %v2262
        %v2265 = vshll.u32 %v2205, 16
        %v2267 = vrot.slane %v2265, 1
        %v2268 = vsel %vm1063, %v2263, %v2267
        %v2270 = vshrl.u32 %v2174, 16
        %v2272 = vshll.u32 %v2174, 16
        %v2274 = vrot.slane %v2272, 1
        %v2275 = vor.u32 %v2270, %v2274
        %v2277 = vshll.u32 %v2206, 16
        %v2279 = vrot.slane %v2277, 1
        %v2280 = vsel %vm1063, %v2275, %v2279
        %v2282 = vshrl.u32 %v2175, 16
        %v2284 = vshll.u32 %v2175, 16
        %v2286 = vrot.slane %v2284, 1
        %v2287 = vor.u32 %v2282, %v2286
        %v2289 = vshll.u32 %v2207, 16
        %v2291 = vrot.slane %v2289, 1
        %v2292 = vsel %vm1063, %v2287, %v2291
        %v2294 = vshrl.u32 %v2176, 16
        %v2296 = vshll.u32 %v2176, 16
        %v2298 = vrot.slane %v2296, 1
        %v2299 = vor.u32 %v2294, %v2298
        %v2301 = vshll.u32 %v2208, 16
        %v2303 = vrot.slane %v2301, 1
        %v2304 = vsel %vm1063, %v2299, %v2303
        %v2313 = vrot.slane %v2169, 1
        %v2314 = vrot.slane %v2201, 1
        %v2315 = vsel %vm1168, %v2313, %v2314
        %v2316 = vrot.slane %v2170, 1
        %v2317 = vrot.slane %v2202, 1
        %v2318 = vsel %vm1168, %v2316, %v2317
        %v2319 = vrot.slane %v2171, 1
        %v2320 = vrot.slane %v2203, 1
        %v2321 = vsel %vm1168, %v2319, %v2320
        %v2322 = vrot.slane %v2172, 1
        %v2323 = vrot.slane %v2204, 1
        %v2324 = vsel %vm1168, %v2322, %v2323
        %v2325 = vrot.slane %v2173, 1
        %v2326 = vrot.slane %v2205, 1
        %v2327 = vsel %vm1168, %v2325, %v2326
        %v2328 = vrot.slane %v2174, 1
        %v2329 = vrot.slane %v2206, 1
        %v2330 = vsel %vm1168, %v2328, %v2329
        %v2331 = vrot.slane %v2175, 1
        %v2332 = vrot.slane %v2207, 1
        %v2333 = vsel %vm1168, %v2331, %v2332
        %v2334 = vrot.slane %v2176, 1
        %v2335 = vrot.slane %v2208, 1
        %v2336 = vsel %vm1168, %v2334, %v2335
        %s2345 = scalar_lea.vmem [#allocation3], 384
        %v2346 = vld [vmem:[%s2345] sm:$0xf]
        %v2347 = vld [vmem:[%s2345 + $0x4] sm:$0xf]
        %v2348 = vld [vmem:[%s2345 + $0x8] sm:$0xf]
        %v2349 = vld [vmem:[%s2345 + $0xc] sm:$0xf]
        %v2350 = vld [vmem:[%s2345 + $0x10] sm:$0xf]
        %v2351 = vld [vmem:[%s2345 + $0x14] sm:$0xf]
        %v2352 = vld [vmem:[%s2345 + $0x18] sm:$0xf]
        %v2353 = vld [vmem:[%s2345 + $0x1c] sm:$0xf]
        %v2354 = vld [vmem:[%s2345 + $0x20] sm:$0xf]
        %v2355 = vld [vmem:[%s2345 + $0x24] sm:$0xf]
        %v2356 = vld [vmem:[%s2345 + $0x28] sm:$0xf]
        %v2357 = vld [vmem:[%s2345 + $0x2c] sm:$0xf]
        %v2358 = vld [vmem:[%s2345 + $0x30] sm:$0xf]
        %v2359 = vld [vmem:[%s2345 + $0x34] sm:$0xf]
        %v2360 = vld [vmem:[%s2345 + $0x38] sm:$0xf]
        %v2361 = vld [vmem:[%s2345 + $0x3c] sm:$0xf]
        %v2362 = vld [vmem:[%s2345 + $0x40] sm:$0xf]
        %v2363 = vld [vmem:[%s2345 + $0x44] sm:$0xf]
        %v2364 = vld [vmem:[%s2345 + $0x48] sm:$0xf]
        %v2365 = vld [vmem:[%s2345 + $0x4c] sm:$0xf]
        %v2366 = vld [vmem:[%s2345 + $0x50] sm:$0xf]
        %v2367 = vld [vmem:[%s2345 + $0x54] sm:$0xf]
        %v2368 = vld [vmem:[%s2345 + $0x58] sm:$0xf]
        %v2369 = vld [vmem:[%s2345 + $0x5c] sm:$0xf]
        %v2370 = vld [vmem:[%s2345 + $0x60] sm:$0xf]
        %v2371 = vld [vmem:[%s2345 + $0x64] sm:$0xf]
        %v2372 = vld [vmem:[%s2345 + $0x68] sm:$0xf]
        %v2373 = vld [vmem:[%s2345 + $0x6c] sm:$0xf]
        %v2374 = vld [vmem:[%s2345 + $0x70] sm:$0xf]
        %v2375 = vld [vmem:[%s2345 + $0x74] sm:$0xf]
        %v2376 = vld [vmem:[%s2345 + $0x78] sm:$0xf]
        %v2377 = vld [vmem:[%s2345 + $0x7c] sm:$0xf]
        %v2378 = vld [vmem:[%s2345 + $0x80] sm:$0xf]
        %v2379 = vld [vmem:[%s2345 + $0x84] sm:$0xf]
        %v2380 = vld [vmem:[%s2345 + $0x88] sm:$0xf]
        %v2381 = vld [vmem:[%s2345 + $0x8c] sm:$0xf]
        %v2382 = vld [vmem:[%s2345 + $0x90] sm:$0xf]
        %v2383 = vld [vmem:[%s2345 + $0x94] sm:$0xf]
        %v2384 = vld [vmem:[%s2345 + $0x98] sm:$0xf]
        %v2385 = vld [vmem:[%s2345 + $0x9c] sm:$0xf]
        %v2386 = vld [vmem:[%s2345 + $0xa0] sm:$0xf]
        %v2387 = vld [vmem:[%s2345 + $0xa4] sm:$0xf]
        %v2388 = vld [vmem:[%s2345 + $0xa8] sm:$0xf]
        %v2389 = vld [vmem:[%s2345 + $0xac] sm:$0xf]
        %v2390 = vld [vmem:[%s2345 + $0xb0] sm:$0xf]
        %v2391 = vld [vmem:[%s2345 + $0xb4] sm:$0xf]
        %v2392 = vld [vmem:[%s2345 + $0xb8] sm:$0xf]
        %v2393 = vld [vmem:[%s2345 + $0xbc] sm:$0xf]
        %v2442 = vunpack.c.l.b16 %v2346
        %v2443 = vunpack.c.l.b16 %v2347
        %v2444 = vunpack.c.l.b16 %v2348
        %v2445 = vunpack.c.l.b16 %v2349
        %v2446 = vunpack.c.l.b16 %v2350
        %v2447 = vunpack.c.l.b16 %v2351
        %v2448 = vunpack.c.l.b16 %v2352
        %v2449 = vunpack.c.l.b16 %v2353
        %v2450 = vunpack.c.l.b16 %v2354
        %v2451 = vunpack.c.l.b16 %v2355
        %v2452 = vunpack.c.l.b16 %v2356
        %v2453 = vunpack.c.l.b16 %v2357
        %v2454 = vunpack.c.l.b16 %v2358
        %v2455 = vunpack.c.l.b16 %v2359
        %v2456 = vunpack.c.l.b16 %v2360
        %v2457 = vunpack.c.l.b16 %v2361
        %v2458 = vunpack.c.l.b16 %v2362
        %v2459 = vunpack.c.l.b16 %v2363
        %v2460 = vunpack.c.l.b16 %v2364
        %v2461 = vunpack.c.l.b16 %v2365
        %v2462 = vunpack.c.l.b16 %v2366
        %v2463 = vunpack.c.l.b16 %v2367
        %v2464 = vunpack.c.l.b16 %v2368
        %v2465 = vunpack.c.l.b16 %v2369
        %v2466 = vunpack.c.l.b16 %v2370
        %v2467 = vunpack.c.l.b16 %v2371
        %v2468 = vunpack.c.l.b16 %v2372
        %v2469 = vunpack.c.l.b16 %v2373
        %v2470 = vunpack.c.l.b16 %v2374
        %v2471 = vunpack.c.l.b16 %v2375
        %v2472 = vunpack.c.l.b16 %v2376
        %v2473 = vunpack.c.l.b16 %v2377
        %v2474 = vunpack.c.l.b16 %v2378
        %v2475 = vunpack.c.l.b16 %v2379
        %v2476 = vunpack.c.l.b16 %v2380
        %v2477 = vunpack.c.l.b16 %v2381
        %v2478 = vunpack.c.l.b16 %v2382
        %v2479 = vunpack.c.l.b16 %v2383
        %v2480 = vunpack.c.l.b16 %v2384
        %v2481 = vunpack.c.l.b16 %v2385
        %v2482 = vunpack.c.l.b16 %v2386
        %v2483 = vunpack.c.l.b16 %v2387
        %v2484 = vunpack.c.l.b16 %v2388
        %v2485 = vunpack.c.l.b16 %v2389
        %v2486 = vunpack.c.l.b16 %v2390
        %v2487 = vunpack.c.l.b16 %v2391
        %v2488 = vunpack.c.l.b16 %v2392
        %v2489 = vunpack.c.l.b16 %v2393
        %v2490 = vpack.c.b16 %v2443, %v2442
        %v2491 = vpack.c.b16 %v2445, %v2444
        %v2492 = vpack.c.b16 %v2447, %v2446
        %v2493 = vpack.c.b16 %v2449, %v2448
        %v2494 = vpack.c.b16 %v2451, %v2450
        %v2495 = vpack.c.b16 %v2453, %v2452
        %v2496 = vpack.c.b16 %v2455, %v2454
        %v2497 = vpack.c.b16 %v2457, %v2456
        %v2498 = vpack.c.b16 %v2459, %v2458
        %v2499 = vpack.c.b16 %v2461, %v2460
        %v2500 = vpack.c.b16 %v2463, %v2462
        %v2501 = vpack.c.b16 %v2465, %v2464
        %v2502 = vpack.c.b16 %v2467, %v2466
        %v2503 = vpack.c.b16 %v2469, %v2468
        %v2504 = vpack.c.b16 %v2471, %v2470
        %v2505 = vpack.c.b16 %v2473, %v2472
        %v2506 = vpack.c.b16 %v2475, %v2474
        %v2507 = vpack.c.b16 %v2477, %v2476
        %v2508 = vpack.c.b16 %v2479, %v2478
        %v2509 = vpack.c.b16 %v2481, %v2480
        %v2510 = vpack.c.b16 %v2483, %v2482
        %v2511 = vpack.c.b16 %v2485, %v2484
        %v2512 = vpack.c.b16 %v2487, %v2486
        %v2513 = vpack.c.b16 %v2489, %v2488
        %2538 = vmatpush.bf16.msra.mxu0 %v2497
        %2539 = vmatpush.bf16.msra.mxu0 %v2496
        %2540 = vmatpush.bf16.msra.mxu0 %v2495
        %2541 = vmatpush.bf16.msra.mxu0 %v2494
        %2542 = vmatpush.bf16.msra.mxu0 %v2493
        %2543 = vmatpush.bf16.msra.mxu0 %v2492
        %2544 = vmatpush.bf16.msra.mxu0 %v2491
        %2545 = vmatpush.bf16.msra.mxu0 %v2490
        %2546 = vmatmul.bf16.gmra.mxu0 %v2169
        %v2547 = vpop.f32.mrf.mxu0
        %v2548 = vadd.f32 0.0, %v2547
        %v2549 = vpop.f32.mrf.mxu0
        %v2550 = vadd.f32 0.0, %v2549
        %2551 = vmatmul.bf16.gmra.mxu0 %v2170
        %v2552 = vpop.f32.mrf.mxu0
        %v2553 = vadd.f32 0.0, %v2552
        %v2554 = vpop.f32.mrf.mxu0
        %v2555 = vadd.f32 0.0, %v2554
        %2556 = vmatmul.bf16.gmra.mxu0 %v2171
        %v2557 = vpop.f32.mrf.mxu0
        %v2558 = vadd.f32 0.0, %v2557
        %v2559 = vpop.f32.mrf.mxu0
        %v2560 = vadd.f32 0.0, %v2559
        %2561 = vmatmul.bf16.gmra.mxu0 %v2172
        %v2562 = vpop.f32.mrf.mxu0
        %v2563 = vadd.f32 0.0, %v2562
        %v2564 = vpop.f32.mrf.mxu0
        %v2565 = vadd.f32 0.0, %v2564
        %2566 = vmatmul.bf16.gmra.mxu0 %v2173
        %v2567 = vpop.f32.mrf.mxu0
        %v2568 = vadd.f32 0.0, %v2567
        %v2569 = vpop.f32.mrf.mxu0
        %v2570 = vadd.f32 0.0, %v2569
        %2571 = vmatmul.bf16.gmra.mxu0 %v2174
        %v2572 = vpop.f32.mrf.mxu0
        %v2573 = vadd.f32 0.0, %v2572
        %v2574 = vpop.f32.mrf.mxu0
        %v2575 = vadd.f32 0.0, %v2574
        %2576 = vmatmul.bf16.gmra.mxu0 %v2175
        %v2577 = vpop.f32.mrf.mxu0
        %v2578 = vadd.f32 0.0, %v2577
        %v2579 = vpop.f32.mrf.mxu0
        %v2580 = vadd.f32 0.0, %v2579
        %2581 = vmatmul.bf16.gmra.mxu0 %v2176
        %v2582 = vpop.f32.mrf.mxu0
        %v2583 = vadd.f32 0.0, %v2582
        %v2584 = vpop.f32.mrf.mxu0
        %v2585 = vadd.f32 0.0, %v2584
        %2586 = vdwg.mxu0
        %2587 = vmatpush.bf16.msra.mxu0 %v2505
        %2588 = vmatpush.bf16.msra.mxu0 %v2504
        %2589 = vmatpush.bf16.msra.mxu0 %v2503
        %2590 = vmatpush.bf16.msra.mxu0 %v2502
        %2591 = vmatpush.bf16.msra.mxu0 %v2501
        %2592 = vmatpush.bf16.msra.mxu0 %v2500
        %2593 = vmatpush.bf16.msra.mxu0 %v2499
        %2594 = vmatpush.bf16.msra.mxu0 %v2498
        %2595 = vmatmul.bf16.gmra.mxu0 %v2220
        %v2596 = vpop.f32.mrf.mxu0
        %v2597 = vadd.f32 %v2548, %v2596
        %v2598 = vpop.f32.mrf.mxu0
        %v2599 = vadd.f32 %v2550, %v2598
        %2600 = vmatmul.bf16.gmra.mxu0 %v2232
        %v2601 = vpop.f32.mrf.mxu0
        %v2602 = vadd.f32 %v2553, %v2601
        %v2603 = vpop.f32.mrf.mxu0
        %v2604 = vadd.f32 %v2555, %v2603
        %2605 = vmatmul.bf16.gmra.mxu0 %v2244
        %v2606 = vpop.f32.mrf.mxu0
        %v2607 = vadd.f32 %v2558, %v2606
        %v2608 = vpop.f32.mrf.mxu0
        %v2609 = vadd.f32 %v2560, %v2608
        %2610 = vmatmul.bf16.gmra.mxu0 %v2256
        %v2611 = vpop.f32.mrf.mxu0
        %v2612 = vadd.f32 %v2563, %v2611
        %v2613 = vpop.f32.mrf.mxu0
        %v2614 = vadd.f32 %v2565, %v2613
        %2615 = vmatmul.bf16.gmra.mxu0 %v2268
        %v2616 = vpop.f32.mrf.mxu0
        %v2617 = vadd.f32 %v2568, %v2616
        %v2618 = vpop.f32.mrf.mxu0
        %v2619 = vadd.f32 %v2570, %v2618
        %2620 = vmatmul.bf16.gmra.mxu0 %v2280
        %v2621 = vpop.f32.mrf.mxu0
        %v2622 = vadd.f32 %v2573, %v2621
        %v2623 = vpop.f32.mrf.mxu0
        %v2624 = vadd.f32 %v2575, %v2623
        %2625 = vmatmul.bf16.gmra.mxu0 %v2292
        %v2626 = vpop.f32.mrf.mxu0
        %v2627 = vadd.f32 %v2578, %v2626
        %v2628 = vpop.f32.mrf.mxu0
        %v2629 = vadd.f32 %v2580, %v2628
        %2630 = vmatmul.bf16.gmra.mxu0 %v2304
        %v2631 = vpop.f32.mrf.mxu0
        %v2632 = vadd.f32 %v2583, %v2631
        %v2633 = vpop.f32.mrf.mxu0
        %v2634 = vadd.f32 %v2585, %v2633
        %2635 = vdwg.mxu0
        %2636 = vmatpush.bf16.msra.mxu0 %v2513
        %2637 = vmatpush.bf16.msra.mxu0 %v2512
        %2638 = vmatpush.bf16.msra.mxu0 %v2511
        %2639 = vmatpush.bf16.msra.mxu0 %v2510
        %2640 = vmatpush.bf16.msra.mxu0 %v2509
        %2641 = vmatpush.bf16.msra.mxu0 %v2508
        %2642 = vmatpush.bf16.msra.mxu0 %v2507
        %2643 = vmatpush.bf16.msra.mxu0 %v2506
        %2644 = vmatmul.bf16.gmra.mxu0 %v2315
        %v2645 = vpop.f32.mrf.mxu0
        %v2646 = vadd.f32 %v2597, %v2645
        %v2647 = vpop.f32.mrf.mxu0
        %v2648 = vadd.f32 %v2599, %v2647
        %2649 = vmatmul.bf16.gmra.mxu0 %v2318
        %v2650 = vpop.f32.mrf.mxu0
        %v2651 = vadd.f32 %v2602, %v2650
        %v2652 = vpop.f32.mrf.mxu0
        %v2653 = vadd.f32 %v2604, %v2652
        %2654 = vmatmul.bf16.gmra.mxu0 %v2321
        %v2655 = vpop.f32.mrf.mxu0
        %v2656 = vadd.f32 %v2607, %v2655
        %v2657 = vpop.f32.mrf.mxu0
        %v2658 = vadd.f32 %v2609, %v2657
        %2659 = vmatmul.bf16.gmra.mxu0 %v2324
        %v2660 = vpop.f32.mrf.mxu0
        %v2661 = vadd.f32 %v2612, %v2660
        %v2662 = vpop.f32.mrf.mxu0
        %v2663 = vadd.f32 %v2614, %v2662
        %2664 = vmatmul.bf16.gmra.mxu0 %v2327
        %v2665 = vpop.f32.mrf.mxu0
        %v2666 = vadd.f32 %v2617, %v2665
        %v2667 = vpop.f32.mrf.mxu0
        %v2668 = vadd.f32 %v2619, %v2667
        %2669 = vmatmul.bf16.gmra.mxu0 %v2330
        %v2670 = vpop.f32.mrf.mxu0
        %v2671 = vadd.f32 %v2622, %v2670
        %v2672 = vpop.f32.mrf.mxu0
        %v2673 = vadd.f32 %v2624, %v2672
        %2674 = vmatmul.bf16.gmra.mxu0 %v2333
        %v2675 = vpop.f32.mrf.mxu0
        %v2676 = vadd.f32 %v2627, %v2675
        %v2677 = vpop.f32.mrf.mxu0
        %v2678 = vadd.f32 %v2629, %v2677
        %2679 = vmatmul.bf16.gmra.mxu0 %v2336
        %v2680 = vpop.f32.mrf.mxu0
        %v2681 = vadd.f32 %v2632, %v2680
        %v2682 = vpop.f32.mrf.mxu0
        %v2683 = vadd.f32 %v2634, %v2682
        %2684 = vdwg.mxu0
        %v2685 = vadd.f32 %v2073, %v2646
        %v2686 = vadd.f32 %v2075, %v2648
        %v2687 = vadd.f32 %v2078, %v2651
        %v2688 = vadd.f32 %v2080, %v2653
        %v2689 = vadd.f32 %v2083, %v2656
        %v2690 = vadd.f32 %v2085, %v2658
        %v2691 = vadd.f32 %v2088, %v2661
        %v2692 = vadd.f32 %v2090, %v2663
        %v2693 = vadd.f32 %v2093, %v2666
        %v2694 = vadd.f32 %v2095, %v2668
        %v2695 = vadd.f32 %v2098, %v2671
        %v2696 = vadd.f32 %v2100, %v2673
        %v2697 = vadd.f32 %v2103, %v2676
        %v2698 = vadd.f32 %v2105, %v2678
        %v2699 = vadd.f32 %v2108, %v2681
        %v2700 = vadd.f32 %v2110, %v2683
        %v2701 = vadd.f32 %v2685, %v2686
        %v2702 = vadd.f32 %v2701, %v2687
        %v2703 = vadd.f32 %v2702, %v2688
        %v2704 = vadd.f32 %v2703, %v2689
        %v2705 = vadd.f32 %v2704, %v2690
        %v2706 = vadd.f32 %v2705, %v2691
        %v2707 = vadd.f32 %v2706, %v2692
        %v2708 = vadd.f32 %v2707, %v2693
        %v2709 = vadd.f32 %v2708, %v2694
        %v2710 = vadd.f32 %v2709, %v2695
        %v2711 = vadd.f32 %v2710, %v2696
        %v2712 = vadd.f32 %v2711, %v2697
        %v2713 = vadd.f32 %v2712, %v2698
        %v2714 = vadd.f32 %v2713, %v2699
        %v2715 = vadd.f32 %v2714, %v2700
        %v2716 = vrot.slane %v2715, 4
        %v2717 = vadd.f32 %v2715, %v2716
        %v2718 = vrot.slane %v2717, 2
        %v2719 = vadd.f32 %v2717, %v2718
        %v2720 = vrot.slane %v2719, 1
        %v2721 = vadd.f32 %v2719, %v2720
        %v2722 = vmul.f32 %v2685, %v2685
        %v2723 = vmul.f32 %v2686, %v2686
        %v2724 = vmul.f32 %v2687, %v2687
        %v2725 = vmul.f32 %v2688, %v2688
        %v2726 = vmul.f32 %v2689, %v2689
        %v2727 = vmul.f32 %v2690, %v2690
        %v2728 = vmul.f32 %v2691, %v2691
        %v2729 = vmul.f32 %v2692, %v2692
        %v2730 = vmul.f32 %v2693, %v2693
        %v2731 = vmul.f32 %v2694, %v2694
        %v2732 = vmul.f32 %v2695, %v2695
        %v2733 = vmul.f32 %v2696, %v2696
        %v2734 = vmul.f32 %v2697, %v2697
        %v2735 = vmul.f32 %v2698, %v2698
        %v2736 = vmul.f32 %v2699, %v2699
        %v2737 = vmul.f32 %v2700, %v2700
        %v2738 = vadd.f32 %v2722, %v2723
        %v2739 = vadd.f32 %v2738, %v2724
        %v2740 = vadd.f32 %v2739, %v2725
        %v2741 = vadd.f32 %v2740, %v2726
        %v2742 = vadd.f32 %v2741, %v2727
        %v2743 = vadd.f32 %v2742, %v2728
        %v2744 = vadd.f32 %v2743, %v2729
        %v2745 = vadd.f32 %v2744, %v2730
        %v2746 = vadd.f32 %v2745, %v2731
        %v2747 = vadd.f32 %v2746, %v2732
        %v2748 = vadd.f32 %v2747, %v2733
        %v2749 = vadd.f32 %v2748, %v2734
        %v2750 = vadd.f32 %v2749, %v2735
        %v2751 = vadd.f32 %v2750, %v2736
        %v2752 = vadd.f32 %v2751, %v2737
        %v2753 = vrot.slane %v2752, 4
        %v2754 = vadd.f32 %v2752, %v2753
        %v2755 = vrot.slane %v2754, 2
        %v2756 = vadd.f32 %v2754, %v2755
        %v2757 = vrot.slane %v2756, 1
        %v2758 = vadd.f32 %v2756, %v2757
        %vm2759 = vcmask 1040384
        %v2760 = vsel %vm2759, %v2721, %v2758
        %vm2761 = vcmask 1041408
        %v2762 = vsel %vm2761, %v2760, 0.0
        %2763 = vst [vmem:[%s484] sm:$0xff] %v2762
        %v2764 = vpack.c.bf16 %v2685, %v2685
        %v2765 = vpack.c.bf16 %v2686, %v2686
        %v2766 = vpack.c.bf16 %v2687, %v2687
        %v2767 = vpack.c.bf16 %v2688, %v2688
        %v2768 = vpack.c.bf16 %v2689, %v2689
        %v2769 = vpack.c.bf16 %v2690, %v2690
        %v2770 = vpack.c.bf16 %v2691, %v2691
        %v2771 = vpack.c.bf16 %v2692, %v2692
        %v2772 = vpack.c.bf16 %v2693, %v2693
        %v2773 = vpack.c.bf16 %v2694, %v2694
        %v2774 = vpack.c.bf16 %v2695, %v2695
        %v2775 = vpack.c.bf16 %v2696, %v2696
        %v2776 = vpack.c.bf16 %v2697, %v2697
        %v2777 = vpack.c.bf16 %v2698, %v2698
        %v2778 = vpack.c.bf16 %v2699, %v2699
        %v2779 = vpack.c.bf16 %v2700, %v2700
        %2780 = vst [vmem:[%s475] sm:$0xf] %v2764
        %2781 = vst [vmem:[%s475 + $0x4] sm:$0xf] %v2765
        %2782 = vst [vmem:[%s475 + $0x8] sm:$0xf] %v2766
        %2783 = vst [vmem:[%s475 + $0xc] sm:$0xf] %v2767
        %2784 = vst [vmem:[%s475 + $0x10] sm:$0xf] %v2768
        %2785 = vst [vmem:[%s475 + $0x14] sm:$0xf] %v2769
        %2786 = vst [vmem:[%s475 + $0x18] sm:$0xf] %v2770
        %2787 = vst [vmem:[%s475 + $0x1c] sm:$0xf] %v2771
        %2788 = vst [vmem:[%s475 + $0x20] sm:$0xf] %v2772
        %2789 = vst [vmem:[%s475 + $0x24] sm:$0xf] %v2773
        %2790 = vst [vmem:[%s475 + $0x28] sm:$0xf] %v2774
        %2791 = vst [vmem:[%s475 + $0x2c] sm:$0xf] %v2775
        %2792 = vst [vmem:[%s475 + $0x30] sm:$0xf] %v2776
        %2793 = vst [vmem:[%s475 + $0x34] sm:$0xf] %v2777
        %2794 = vst [vmem:[%s475 + $0x38] sm:$0xf] %v2778
        %2795 = vst [vmem:[%s475 + $0x3c] sm:$0xf] %v2779
        %s2796 = smul.u32 8, %s25
        %p2797 = scmp.lt.s32.totalorder %s24, 1
        %s2798 = scalar_select %p2797, %s24, 1
        %p2799 = scmp.lt.s32.totalorder %s2796, 15
        %s2800 = scalar_select %p2799, %s2796, 15
        %s2801 = smul.addr %s2800, 2
        %s2802 = smul.addr %s2798, 32
        %s2803 = sadd.s32 %s2801, %s2802
        %s2804 = smul.addr %s2803, 4
        %s2805 = scalar_lea.vmem %s6, %s2804
        %p2806 = scmp.lt.s32.totalorder %s24, 1
        %s2807 = scalar_select %p2806, %s24, 1
        %p2808 = scmp.lt.s32.totalorder %s25, 1
        %s2809 = scalar_select %p2808, %s25, 1
        %s2810 = smul.addr %s2807, 2
        %s2811 = sadd.s32 %s2809, %s2810
        %s2812 = smul.addr %s2811, 8
        %s2813 = scalar_lea.vmem %s7, %s2812
        // Predicated region
        $region49: #{inconv_forward.4} parent=43 // pred_check
          %p2814 = pneg %p215
        $region50: #{inconv_forward.4} parent=43 // pred_check_branch
          %2816 = sbr.rel (%p2814) target = $region52
        $region51: #{inconv_forward.4} parent=43 // pred_region
          %s2817 = smul.u32 8, %s25
        $region52: #{inconv_forward.4} parent=43 // pred_fallthru
          _
        // Predicated region
        $region53: #{inconv_forward.4} parent=43 // pred_check
          %p2818 = pneg %p243
        $region54: #{inconv_forward.4} parent=43 // pred_check_branch
          %2820 = sbr.rel (%p2818) target = $region56
        $region55: #{inconv_forward.4} parent=43 // pred_region
          _
        $region56: #{inconv_forward.4} parent=43 // pred_fallthru
          _
      $region44: #{inconv_forward.4} parent=5 // pred_fallthru
        _
      %p2821 = scmp.le.s32.totalorder 2, %s15
      // Predicated region
      $region57: #{inconv_forward.4} parent=5 // pred_check
        %p2822 = pneg %p2821
      $region58: #{inconv_forward.4} parent=5 // pred_check_branch
        %2824 = sbr.rel (%p2822) target = $region60
      $region59: #{inconv_forward.4} parent=5 // pred_region
        %s2825 = ssub.s32 %s15, 2
        // Predicated region
        $region61: #{inconv_forward.4} parent=59 // pred_check
          %p2826 = pneg %p221
        $region62: #{inconv_forward.4} parent=59 // pred_check_branch
          %2828 = sbr.rel (%p2826) target = $region64
        $region63: #{inconv_forward.4} parent=59 // pred_region
          %s2829 = smul.u32 8, %s27
          %p2830 = scmp.lt.s32.totalorder %s26, 1
          %s2831 = scalar_select %p2830, %s26, 1
          %p2832 = scmp.lt.s32.totalorder %s2829, 15
          %s2833 = scalar_select %p2832, %s2829, 15
          %s2834 = smul.addr %s2833, 2
          %s2835 = smul.addr %s2831, 32
          %s2836 = sadd.s32 %s2834, %s2835
          %s2837 = smul.addr %s2836, 4
          %s2838 = scalar_lea.vmem %s6, %s2837
        $region64: #{inconv_forward.4} parent=59 // pred_fallthru
          _
        // Predicated region
        $region65: #{inconv_forward.4} parent=59 // pred_check
          %p2839 = pneg %p249
        $region66: #{inconv_forward.4} parent=59 // pred_check_branch
          %2841 = sbr.rel (%p2839) target = $region68
        $region67: #{inconv_forward.4} parent=59 // pred_region
          %p2842 = scmp.lt.s32.totalorder %s26, 1
          %s2843 = scalar_select %p2842, %s26, 1
          %p2844 = scmp.lt.s32.totalorder %s27, 1
          %s2845 = scalar_select %p2844, %s27, 1
          %s2846 = smul.addr %s2843, 2
          %s2847 = sadd.s32 %s2845, %s2846
          %s2848 = smul.addr %s2847, 8
          %s2849 = scalar_lea.vmem %s7, %s2848
        $region68: #{inconv_forward.4} parent=59 // pred_fallthru
          _
      $region60: #{inconv_forward.4} parent=5 // pred_fallthru
        _
    $region6: #{inconv_forward.4} parent=1 // loop_footer
      %s19 = sadd.s32 1, %s15
    $region7: #{inconv_forward.4} parent=1 // loop_footer_branch
      %14 = sbr.rel target = $region3
    $region8: #{inconv_forward.4} parent=1 // loop_exit
      _
    %2850 = vsyncpa [#allocation4], 1
    %s2851 = scalar_lea.sflag [#allocation4], 1
    %2852 = vsyncpa %s2851, 1

</llo_original>
